<compile_context>
chip_gen: v5e
topology: v5e:2x2
jax: 0.10.0
libtpu: 0.0.40
codegen_flags: <defaults>
</compile_context>

<pallas_src>
import functools
import math

import jax
import jax.numpy as jnp
from jax import lax
from jax.experimental import pallas as pl
from jax.experimental.pallas import tpu as pltpu


# ----------------------------- fused Pallas kernel ---------------------------

def _fused_rnn_kernel(x_ref, wih0_ref, wih_ref, whh_ref, b_ref, ow_ref, ob_ref,
                      out_ref, act_ref, *, num_layers):
    """Whole model in one kernel.

    x_ref:    (B, T, E)        embedding, batch-first (like the PyTorch module)
    wih0_ref: (E, H)           W_ih of module-1/layer-0 (transposed vs. PyTorch)
    wih_ref:  (L-1, H, H)      W_ih of every other layer (L = 5 * num_layers)
    whh_ref:  (L, H, H)        W_hh of every layer
    b_ref:    (L, 1, H)        combined bias (b_ih + b_hh) per layer
    ow_ref:   (H, O), ob_ref: (1, O)   final Linear
    out_ref:  (B, T, O)        logits, batch-first
    act_ref:  (B, T, H)        VMEM scratch holding the current layer's output sequence
    """
    B, T, E = x_ref.shape
    L, H, _ = whh_ref.shape
    O = ow_ref.shape[1]

    # h_n of layer l (within a module) becomes h_0 of layer l of the next module.
    h_chain = [jnp.zeros((B, H), jnp.float32) for _ in range(num_layers)]

    li = 0
    for _module in range(5):
        new_chain = []
        for l in range(num_layers):
            # -- hoisted, time-invariant input projection (one matmul per layer) --
            if li == 0:
                w_ih = wih0_ref[...]                               # (E, H)
                cur = x_ref[...].reshape(B * T, E)
            else:
                w_ih = wih_ref[li - 1]                             # (H, H)
                cur = act_ref[...].reshape(B * T, H)               # prev layer output
            xw = (jnp.dot(cur, w_ih, preferred_element_type=jnp.float32)
                  + b_ref[li]).reshape(B, T, H)                    # (B, T, H)

            # -- recurrence: W_hh held in registers, T statically unrolled --
            w_hh = whh_ref[li]                                     # (H, H)
            h = h_chain[l]
            for t in range(T):
                h = jnp.tanh(xw[:, t, :]
                             + jnp.dot(h, w_hh, preferred_element_type=jnp.float32))
                act_ref[:, t:t + 1, :] = h[:, None, :]             # static slice store
            new_chain.append(h)
            li += 1
        h_chain = new_chain

    # -- final Linear on the VMEM-resident last-layer output --
    logits = (jnp.dot(act_ref[...].reshape(B * T, H), ow_ref[...],
                      preferred_element_type=jnp.float32) + ob_ref[...])
    out_ref[...] = logits.reshape(B, T, O)


def model_forward(params, embedding):
    """embedding: (B, T, E) batch-first. Returns (B, T, O) float32 logits."""
    B, T, E = embedding.shape
    L, H, _ = params["w_hh"].shape
    num_layers = L // 5
    O = params["o_w"].shape[1]

    kernel = functools.partial(_fused_rnn_kernel, num_layers=num_layers)
    return pl.pallas_call(
        kernel,
        out_shape=jax.ShapeDtypeStruct((B, T, O), jnp.float32),
        in_specs=[pl.BlockSpec(memory_space=pltpu.MemorySpace.VMEM)] * 7,
        out_specs=pl.BlockSpec(memory_space=pltpu.MemorySpace.VMEM),
        scratch_shapes=[pltpu.VMEM((B, T, H), jnp.float32)],
        compiler_params=pltpu.CompilerParams(vmem_limit_bytes=32 * 1024 * 1024),
    )(embedding, params["w_ih0"], params["w_ih"], params["w_hh"],
      params["bias"], params["o_w"], params["o_b"])


# ----------------------------- params / reference ----------------------------

def init_params(key, embedding_dim, hidden_dim, num_layers, output_dim):
    """Deterministic init matching nn.RNN / nn.Linear shapes (uniform +-1/sqrt(H)).

    Weights are stored transposed vs. PyTorch ((in, out)) and stacked per layer so the
    fused kernel can index them with a static layer id.
    """
    bound = 1.0 / math.sqrt(hidden_dim)
    wih0, wih_rest, whh, bias = None, [], [], []
    li = 0
    for _m in range(5):
        for _l in range(num_layers):
            in_dim = embedding_dim if li == 0 else hidden_dim
            key, k1, k2, k3, k4 = jax.random.split(key, 5)
            w_ih = jax.random.uniform(k1, (in_dim, hidden_dim), jnp.float32, -bound, bound)
            w_hh = jax.random.uniform(k2, (hidden_dim, hidden_dim), jnp.float32, -bound, bound)
            b_ih = jax.random.uniform(k3, (hidden_dim,), jnp.float32, -bound, bound)
            b_hh = jax.random.uniform(k4, (hidden_dim,), jnp.float32, -bound, bound)
            if li == 0:
                wih0 = w_ih
            else:
                wih_rest.append(w_ih)
            whh.append(w_hh)
            bias.append((b_ih + b_hh).reshape(1, hidden_dim))
            li += 1
    key, kw, kb = jax.random.split(key, 3)
    o_w = jax.random.uniform(kw, (hidden_dim, output_dim), jnp.float32, -bound, bound)
    o_b = jax.random.uniform(kb, (1, output_dim), jnp.float32, -bound, bound)
    return {
        "w_ih0": wih0,
        "w_ih": jnp.stack(wih_rest, axis=0),
        "w_hh": jnp.stack(whh, axis=0),
        "bias": jnp.stack(bias, axis=0),
        "o_w": o_w,
        "o_b": o_b,
    }


def reference_forward(params, embedding):
    """Pure-JAX reference with identical semantics (for numerical validation)."""
    hp = lax.Precision.HIGHEST
    B, T, _ = embedding.shape
    L, H, _ = params["w_hh"].shape
    num_layers = L // 5
    x = embedding
    h_chain = [jnp.zeros((B, H), jnp.float32) for _ in range(num_layers)]
    li = 0
    for _m in range(5):
        new_chain = []
        for l in range(num_layers):
            w_ih = params["w_ih0"] if li == 0 else params["w_ih"][li - 1]
            w_hh = params["w_hh"][li]
            b = params["bias"][li]
            h = h_chain[l]
            outs = []
            for t in range(T):
                h = jnp.tanh(jnp.dot(x[:, t, :], w_ih, precision=hp)
                             + jnp.dot(h, w_hh, precision=hp) + b)
                outs.append(h)
            x = jnp.stack(outs, axis=1)
            new_chain.append(h)
            li += 1
        h_chain = new_chain
    out = jnp.dot(x.reshape(B * T, H), params["o_w"], precision=hp) + params["o_b"]
    return out.reshape(B, T, -1)


# --------------------------------- main ---------------------------------------

if __name__ == "__main__":
    B, T = 4, 8
    embedding_dim, hidden_dim, num_layers, output_dim = 16, 32, 2, 8

    key = jax.random.PRNGKey(0)
    kp, kx = jax.random.split(key)
    params = init_params(kp, embedding_dim, hidden_dim, num_layers, output_dim)
    x = jax.random.normal(kx, (B, T, embedding_dim), jnp.float32)

    out = jax.jit(model_forward)(params, x)
    jax.block_until_ready(out)
    assert out.shape == (B, T, output_dim)
    assert out.dtype == jnp.float32

    ref = reference_forward(params, x)
    assert jnp.allclose(out, ref, rtol=1e-3, atol=1e-4), "kernel != reference"

    print("KERNEL_OK")
</pallas_src>

<mosaic_0001>
module attributes {stable_mosaic.version = 11 : i64} {
  func.func @_fused_rnn_kernel(%arg0: memref<4x8x16xf32, #tpu.memory_space<vmem>>, %arg1: memref<16x32xf32, #tpu.memory_space<vmem>>, %arg2: memref<9x32x32xf32, #tpu.memory_space<vmem>>, %arg3: memref<10x32x32xf32, #tpu.memory_space<vmem>>, %arg4: memref<10x1x32xf32, #tpu.memory_space<vmem>>, %arg5: memref<32x8xf32, #tpu.memory_space<vmem>>, %arg6: memref<1x8xf32, #tpu.memory_space<vmem>>, %arg7: memref<4x8x8xf32, #tpu.memory_space<vmem>>, %arg8: memref<4x8x32xf32, #tpu.memory_space<vmem>>) attributes {dimension_semantics = [], scalar_prefetch = 0 : i64, scratch_operands = 1 : i64, tpu.core_type = #tpu.core_type<tc>} {
    %cst = arith.constant 0.000000e+00 : f32
    %0 = vector.broadcast %cst : f32 to vector<4x32xf32>
    %cst_0 = arith.constant 0.000000e+00 : f32
    %1 = vector.broadcast %cst_0 : f32 to vector<4x32xf32>
    %c0 = arith.constant 0 : index
    %c0_1 = arith.constant 0 : index
    %2 = vector.load %arg1[%c0, %c0_1] : memref<16x32xf32, #tpu.memory_space<vmem>>, vector<16x32xf32>
    %c0_2 = arith.constant 0 : index
    %c0_3 = arith.constant 0 : index
    %c0_4 = arith.constant 0 : index
    %3 = vector.load %arg0[%c0_2, %c0_3, %c0_4] : memref<4x8x16xf32, #tpu.memory_space<vmem>>, vector<4x8x16xf32>
    %4 = vector.shape_cast %3 : vector<4x8x16xf32> to vector<32x16xf32>
    %cst_5 = arith.constant dense<0.000000e+00> : vector<32x32xf32>
    %5 = tpu.matmul %4, %2, %cst_5 {dimension_numbers = #tpu.dot_dimension_numbers<[1], [0], [0], [1], [0, 0, 1, 1], [], []>} : vector<32x16xf32>, vector<16x32xf32>, vector<32x32xf32> -> vector<32x32xf32>
    %c0_6 = arith.constant 0 : index
    %c0_7 = arith.constant 0 : index
    %c0_8 = arith.constant 0 : index
    %6 = vector.load %arg4[%c0_6, %c0_7, %c0_8] : memref<10x1x32xf32, #tpu.memory_space<vmem>>, vector<1x1x32xf32>
    %7 = vector.shape_cast %6 : vector<1x1x32xf32> to vector<1x32xf32>
    %8 = vector.broadcast %7 : vector<1x32xf32> to vector<32x32xf32>
    %9 = arith.addf %5, %8 : vector<32x32xf32>
    %10 = vector.shape_cast %9 : vector<32x32xf32> to vector<4x8x32xf32>
    %c0_9 = arith.constant 0 : index
    %c0_10 = arith.constant 0 : index
    %c0_11 = arith.constant 0 : index
    %11 = vector.load %arg3[%c0_9, %c0_10, %c0_11] : memref<10x32x32xf32, #tpu.memory_space<vmem>>, vector<1x32x32xf32>
    %12 = vector.shape_cast %11 : vector<1x32x32xf32> to vector<32x32xf32>
    %13 = vector.extract_strided_slice %10 {offsets = [0, 0, 0], sizes = [4, 1, 32], strides = [1, 1, 1]} : vector<4x8x32xf32> to vector<4x1x32xf32>
    %14 = vector.shape_cast %13 : vector<4x1x32xf32> to vector<4x32xf32>
    %cst_12 = arith.constant dense<0.000000e+00> : vector<4x32xf32>
    %15 = tpu.matmul %0, %12, %cst_12 {dimension_numbers = #tpu.dot_dimension_numbers<[1], [0], [0], [1], [0, 0, 1, 1], [], []>} : vector<4x32xf32>, vector<32x32xf32>, vector<4x32xf32> -> vector<4x32xf32>
    %16 = arith.addf %14, %15 : vector<4x32xf32>
    %17 = math.tanh %16 : vector<4x32xf32>
    %18 = vector.shape_cast %17 : vector<4x32xf32> to vector<4x1x32xf32>
    %c0_13 = arith.constant 0 : index
    %c0_14 = arith.constant 0 : index
    %c0_15 = arith.constant 0 : index
    %19 = vector.load %arg8[%c0_13, %c0_14, %c0_15] : memref<4x8x32xf32, #tpu.memory_space<vmem>>, vector<4x1x32xf32>
    tpu.vector_store %arg8[%c0_13, %c0_14, %c0_15], %18 {strides = array<i32>} : memref<4x8x32xf32, #tpu.memory_space<vmem>>, vector<4x1x32xf32>,
    %20 = vector.extract_strided_slice %10 {offsets = [0, 1, 0], sizes = [4, 1, 32], strides = [1, 1, 1]} : vector<4x8x32xf32> to vector<4x1x32xf32>
    %21 = vector.shape_cast %20 : vector<4x1x32xf32> to vector<4x32xf32>
    %cst_16 = arith.constant dense<0.000000e+00> : vector<4x32xf32>
    %22 = tpu.matmul %17, %12, %cst_16 {dimension_numbers = #tpu.dot_dimension_numbers<[1], [0], [0], [1], [0, 0, 1, 1], [], []>} : vector<4x32xf32>, vector<32x32xf32>, vector<4x32xf32> -> vector<4x32xf32>
    %23 = arith.addf %21, %22 : vector<4x32xf32>
    %24 = math.tanh %23 : vector<4x32xf32>
    %25 = vector.shape_cast %24 : vector<4x32xf32> to vector<4x1x32xf32>
    %c0_17 = arith.constant 0 : index
    %c1 = arith.constant 1 : index
    %c0_18 = arith.constant 0 : index
    %26 = vector.load %arg8[%c0_17, %c1, %c0_18] : memref<4x8x32xf32, #tpu.memory_space<vmem>>, vector<4x1x32xf32>
    tpu.vector_store %arg8[%c0_17, %c1, %c0_18], %25 {strides = array<i32>} : memref<4x8x32xf32, #tpu.memory_space<vmem>>, vector<4x1x32xf32>,
    %27 = vector.extract_strided_slice %10 {offsets = [0, 2, 0], sizes = [4, 1, 32], strides = [1, 1, 1]} : vector<4x8x32xf32> to vector<4x1x32xf32>
    %28 = vector.shape_cast %27 : vector<4x1x32xf32> to vector<4x32xf32>
    %cst_19 = arith.constant dense<0.000000e+00> : vector<4x32xf32>
    %29 = tpu.matmul %24, %12, %cst_19 {dimension_numbers = #tpu.dot_dimension_numbers<[1], [0], [0], [1], [0, 0, 1, 1], [], []>} : vector<4x32xf32>, vector<32x32xf32>, vector<4x32xf32> -> vector<4x32xf32>
    %30 = arith.addf %28, %29 : vector<4x32xf32>
    %31 = math.tanh %30 : vector<4x32xf32>
    %32 = vector.shape_cast %31 : vector<4x32xf32> to vector<4x1x32xf32>
    %c0_20 = arith.constant 0 : index
    %c2 = arith.constant 2 : index
    %c0_21 = arith.constant 0 : index
    %33 = vector.load %arg8[%c0_20, %c2, %c0_21] : memref<4x8x32xf32, #tpu.memory_space<vmem>>, vector<4x1x32xf32>
    tpu.vector_store %arg8[%c0_20, %c2, %c0_21], %32 {strides = array<i32>} : memref<4x8x32xf32, #tpu.memory_space<vmem>>, vector<4x1x32xf32>,
    %34 = vector.extract_strided_slice %10 {offsets = [0, 3, 0], sizes = [4, 1, 32], strides = [1, 1, 1]} : vector<4x8x32xf32> to vector<4x1x32xf32>
    %35 = vector.shape_cast %34 : vector<4x1x32xf32> to vector<4x32xf32>
    %cst_22 = arith.constant dense<0.000000e+00> : vector<4x32xf32>
    %36 = tpu.matmul %31, %12, %cst_22 {dimension_numbers = #tpu.dot_dimension_numbers<[1], [0], [0], [1], [0, 0, 1, 1], [], []>} : vector<4x32xf32>, vector<32x32xf32>, vector<4x32xf32> -> vector<4x32xf32>
    %37 = arith.addf %35, %36 : vector<4x32xf32>
    %38 = math.tanh %37 : vector<4x32xf32>
    %39 = vector.shape_cast %38 : vector<4x32xf32> to vector<4x1x32xf32>
    %c0_23 = arith.constant 0 : index
    %c3 = arith.constant 3 : index
    %c0_24 = arith.constant 0 : index
    %40 = vector.load %arg8[%c0_23, %c3, %c0_24] : memref<4x8x32xf32, #tpu.memory_space<vmem>>, vector<4x1x32xf32>
    tpu.vector_store %arg8[%c0_23, %c3, %c0_24], %39 {strides = array<i32>} : memref<4x8x32xf32, #tpu.memory_space<vmem>>, vector<4x1x32xf32>,
    %41 = vector.extract_strided_slice %10 {offsets = [0, 4, 0], sizes = [4, 1, 32], strides = [1, 1, 1]} : vector<4x8x32xf32> to vector<4x1x32xf32>
    %42 = vector.shape_cast %41 : vector<4x1x32xf32> to vector<4x32xf32>
    %cst_25 = arith.constant dense<0.000000e+00> : vector<4x32xf32>
    %43 = tpu.matmul %38, %12, %cst_25 {dimension_numbers = #tpu.dot_dimension_numbers<[1], [0], [0], [1], [0, 0, 1, 1], [], []>} : vector<4x32xf32>, vector<32x32xf32>, vector<4x32xf32> -> vector<4x32xf32>
    %44 = arith.addf %42, %43 : vector<4x32xf32>
    %45 = math.tanh %44 : vector<4x32xf32>
    %46 = vector.shape_cast %45 : vector<4x32xf32> to vector<4x1x32xf32>
    %c0_26 = arith.constant 0 : index
    %c4 = arith.constant 4 : index
    %c0_27 = arith.constant 0 : index
    %47 = vector.load %arg8[%c0_26, %c4, %c0_27] : memref<4x8x32xf32, #tpu.memory_space<vmem>>, vector<4x1x32xf32>
    tpu.vector_store %arg8[%c0_26, %c4, %c0_27], %46 {strides = array<i32>} : memref<4x8x32xf32, #tpu.memory_space<vmem>>, vector<4x1x32xf32>,
    %48 = vector.extract_strided_slice %10 {offsets = [0, 5, 0], sizes = [4, 1, 32], strides = [1, 1, 1]} : vector<4x8x32xf32> to vector<4x1x32xf32>
    %49 = vector.shape_cast %48 : vector<4x1x32xf32> to vector<4x32xf32>
    %cst_28 = arith.constant dense<0.000000e+00> : vector<4x32xf32>
    %50 = tpu.matmul %45, %12, %cst_28 {dimension_numbers = #tpu.dot_dimension_numbers<[1], [0], [0], [1], [0, 0, 1, 1], [], []>} : vector<4x32xf32>, vector<32x32xf32>, vector<4x32xf32> -> vector<4x32xf32>
    %51 = arith.addf %49, %50 : vector<4x32xf32>
    %52 = math.tanh %51 : vector<4x32xf32>
    %53 = vector.shape_cast %52 : vector<4x32xf32> to vector<4x1x32xf32>
    %c0_29 = arith.constant 0 : index
    %c5 = arith.constant 5 : index
    %c0_30 = arith.constant 0 : index
    %54 = vector.load %arg8[%c0_29, %c5, %c0_30] : memref<4x8x32xf32, #tpu.memory_space<vmem>>, vector<4x1x32xf32>
    tpu.vector_store %arg8[%c0_29, %c5, %c0_30], %53 {strides = array<i32>} : memref<4x8x32xf32, #tpu.memory_space<vmem>>, vector<4x1x32xf32>,
    %55 = vector.extract_strided_slice %10 {offsets = [0, 6, 0], sizes = [4, 1, 32], strides = [1, 1, 1]} : vector<4x8x32xf32> to vector<4x1x32xf32>
    %56 = vector.shape_cast %55 : vector<4x1x32xf32> to vector<4x32xf32>
    %cst_31 = arith.constant dense<0.000000e+00> : vector<4x32xf32>
    %57 = tpu.matmul %52, %12, %cst_31 {dimension_numbers = #tpu.dot_dimension_numbers<[1], [0], [0], [1], [0, 0, 1, 1], [], []>} : vector<4x32xf32>, vector<32x32xf32>, vector<4x32xf32> -> vector<4x32xf32>
    %58 = arith.addf %56, %57 : vector<4x32xf32>
    %59 = math.tanh %58 : vector<4x32xf32>
    %60 = vector.shape_cast %59 : vector<4x32xf32> to vector<4x1x32xf32>
    %c0_32 = arith.constant 0 : index
    %c6 = arith.constant 6 : index
    %c0_33 = arith.constant 0 : index
    %61 = vector.load %arg8[%c0_32, %c6, %c0_33] : memref<4x8x32xf32, #tpu.memory_space<vmem>>, vector<4x1x32xf32>
    tpu.vector_store %arg8[%c0_32, %c6, %c0_33], %60 {strides = array<i32>} : memref<4x8x32xf32, #tpu.memory_space<vmem>>, vector<4x1x32xf32>,
    %62 = vector.extract_strided_slice %10 {offsets = [0, 7, 0], sizes = [4, 1, 32], strides = [1, 1, 1]} : vector<4x8x32xf32> to vector<4x1x32xf32>
    %63 = vector.shape_cast %62 : vector<4x1x32xf32> to vector<4x32xf32>
    %cst_34 = arith.constant dense<0.000000e+00> : vector<4x32xf32>
    %64 = tpu.matmul %59, %12, %cst_34 {dimension_numbers = #tpu.dot_dimension_numbers<[1], [0], [0], [1], [0, 0, 1, 1], [], []>} : vector<4x32xf32>, vector<32x32xf32>, vector<4x32xf32> -> vector<4x32xf32>
    %65 = arith.addf %63, %64 : vector<4x32xf32>
    %66 = math.tanh %65 : vector<4x32xf32>
    %67 = vector.shape_cast %66 : vector<4x32xf32> to vector<4x1x32xf32>
    %c0_35 = arith.constant 0 : index
    %c7 = arith.constant 7 : index
    %c0_36 = arith.constant 0 : index
    %68 = vector.load %arg8[%c0_35, %c7, %c0_36] : memref<4x8x32xf32, #tpu.memory_space<vmem>>, vector<4x1x32xf32>
    tpu.vector_store %arg8[%c0_35, %c7, %c0_36], %67 {strides = array<i32>} : memref<4x8x32xf32, #tpu.memory_space<vmem>>, vector<4x1x32xf32>,
    %c0_37 = arith.constant 0 : index
    %c0_38 = arith.constant 0 : index
    %c0_39 = arith.constant 0 : index
    %69 = vector.load %arg2[%c0_37, %c0_38, %c0_39] : memref<9x32x32xf32, #tpu.memory_space<vmem>>, vector<1x32x32xf32>
    %70 = vector.shape_cast %69 : vector<1x32x32xf32> to vector<32x32xf32>
    %c0_40 = arith.constant 0 : index
    %c0_41 = arith.constant 0 : index
    %c0_42 = arith.constant 0 : index
    %71 = vector.load %arg8[%c0_40, %c0_41, %c0_42] : memref<4x8x32xf32, #tpu.memory_space<vmem>>, vector<4x8x32xf32>
    %72 = vector.shape_cast %71 : vector<4x8x32xf32> to vector<32x32xf32>
    %cst_43 = arith.constant dense<0.000000e+00> : vector<32x32xf32>
    %73 = tpu.matmul %72, %70, %cst_43 {dimension_numbers = #tpu.dot_dimension_numbers<[1], [0], [0], [1], [0, 0, 1, 1], [], []>} : vector<32x32xf32>, vector<32x32xf32>, vector<32x32xf32> -> vector<32x32xf32>
    %c1_44 = arith.constant 1 : index
    %c0_45 = arith.constant 0 : index
    %c0_46 = arith.constant 0 : index
    %74 = vector.load %arg4[%c1_44, %c0_45, %c0_46] : memref<10x1x32xf32, #tpu.memory_space<vmem>>, vector<1x1x32xf32>
    %75 = vector.shape_cast %74 : vector<1x1x32xf32> to vector<1x32xf32>
    %76 = vector.broadcast %75 : vector<1x32xf32> to vector<32x32xf32>
    %77 = arith.addf %73, %76 : vector<32x32xf32>
    %78 = vector.shape_cast %77 : vector<32x32xf32> to vector<4x8x32xf32>
    %c1_47 = arith.constant 1 : index
    %c0_48 = arith.constant 0 : index
    %c0_49 = arith.constant 0 : index
    %79 = vector.load %arg3[%c1_47, %c0_48, %c0_49] : memref<10x32x32xf32, #tpu.memory_space<vmem>>, vector<1x32x32xf32>
    %80 = vector.shape_cast %79 : vector<1x32x32xf32> to vector<32x32xf32>
    %81 = vector.extract_strided_slice %78 {offsets = [0, 0, 0], sizes = [4, 1, 32], strides = [1, 1, 1]} : vector<4x8x32xf32> to vector<4x1x32xf32>
    %82 = vector.shape_cast %81 : vector<4x1x32xf32> to vector<4x32xf32>
    %cst_50 = arith.constant dense<0.000000e+00> : vector<4x32xf32>
    %83 = tpu.matmul %1, %80, %cst_50 {dimension_numbers = #tpu.dot_dimension_numbers<[1], [0], [0], [1], [0, 0, 1, 1], [], []>} : vector<4x32xf32>, vector<32x32xf32>, vector<4x32xf32> -> vector<4x32xf32>
    %84 = arith.addf %82, %83 : vector<4x32xf32>
    %85 = math.tanh %84 : vector<4x32xf32>
    %86 = vector.shape_cast %85 : vector<4x32xf32> to vector<4x1x32xf32>
    %c0_51 = arith.constant 0 : index
    %c0_52 = arith.constant 0 : index
    %c0_53 = arith.constant 0 : index
    %87 = vector.load %arg8[%c0_51, %c0_52, %c0_53] : memref<4x8x32xf32, #tpu.memory_space<vmem>>, vector<4x1x32xf32>
    tpu.vector_store %arg8[%c0_51, %c0_52, %c0_53], %86 {strides = array<i32>} : memref<4x8x32xf32, #tpu.memory_space<vmem>>, vector<4x1x32xf32>,
    %88 = vector.extract_strided_slice %78 {offsets = [0, 1, 0], sizes = [4, 1, 32], strides = [1, 1, 1]} : vector<4x8x32xf32> to vector<4x1x32xf32>
    %89 = vector.shape_cast %88 : vector<4x1x32xf32> to vector<4x32xf32>
    %cst_54 = arith.constant dense<0.000000e+00> : vector<4x32xf32>
    %90 = tpu.matmul %85, %80, %cst_54 {dimension_numbers = #tpu.dot_dimension_numbers<[1], [0], [0], [1], [0, 0, 1, 1], [], []>} : vector<4x32xf32>, vector<32x32xf32>, vector<4x32xf32> -> vector<4x32xf32>
    %91 = arith.addf %89, %90 : vector<4x32xf32>
    %92 = math.tanh %91 : vector<4x32xf32>
    %93 = vector.shape_cast %92 : vector<4x32xf32> to vector<4x1x32xf32>
    %c0_55 = arith.constant 0 : index
    %c1_56 = arith.constant 1 : index
    %c0_57 = arith.constant 0 : index
    %94 = vector.load %arg8[%c0_55, %c1_56, %c0_57] : memref<4x8x32xf32, #tpu.memory_space<vmem>>, vector<4x1x32xf32>
    tpu.vector_store %arg8[%c0_55, %c1_56, %c0_57], %93 {strides = array<i32>} : memref<4x8x32xf32, #tpu.memory_space<vmem>>, vector<4x1x32xf32>,
    %95 = vector.extract_strided_slice %78 {offsets = [0, 2, 0], sizes = [4, 1, 32], strides = [1, 1, 1]} : vector<4x8x32xf32> to vector<4x1x32xf32>
    %96 = vector.shape_cast %95 : vector<4x1x32xf32> to vector<4x32xf32>
    %cst_58 = arith.constant dense<0.000000e+00> : vector<4x32xf32>
    %97 = tpu.matmul %92, %80, %cst_58 {dimension_numbers = #tpu.dot_dimension_numbers<[1], [0], [0], [1], [0, 0, 1, 1], [], []>} : vector<4x32xf32>, vector<32x32xf32>, vector<4x32xf32> -> vector<4x32xf32>
    %98 = arith.addf %96, %97 : vector<4x32xf32>
    %99 = math.tanh %98 : vector<4x32xf32>
    %100 = vector.shape_cast %99 : vector<4x32xf32> to vector<4x1x32xf32>
    %c0_59 = arith.constant 0 : index
    %c2_60 = arith.constant 2 : index
    %c0_61 = arith.constant 0 : index
    %101 = vector.load %arg8[%c0_59, %c2_60, %c0_61] : memref<4x8x32xf32, #tpu.memory_space<vmem>>, vector<4x1x32xf32>
    tpu.vector_store %arg8[%c0_59, %c2_60, %c0_61], %100 {strides = array<i32>} : memref<4x8x32xf32, #tpu.memory_space<vmem>>, vector<4x1x32xf32>,
    %102 = vector.extract_strided_slice %78 {offsets = [0, 3, 0], sizes = [4, 1, 32], strides = [1, 1, 1]} : vector<4x8x32xf32> to vector<4x1x32xf32>
    %103 = vector.shape_cast %102 : vector<4x1x32xf32> to vector<4x32xf32>
    %cst_62 = arith.constant dense<0.000000e+00> : vector<4x32xf32>
    %104 = tpu.matmul %99, %80, %cst_62 {dimension_numbers = #tpu.dot_dimension_numbers<[1], [0], [0], [1], [0, 0, 1, 1], [], []>} : vector<4x32xf32>, vector<32x32xf32>, vector<4x32xf32> -> vector<4x32xf32>
    %105 = arith.addf %103, %104 : vector<4x32xf32>
    %106 = math.tanh %105 : vector<4x32xf32>
    %107 = vector.shape_cast %106 : vector<4x32xf32> to vector<4x1x32xf32>
    %c0_63 = arith.constant 0 : index
    %c3_64 = arith.constant 3 : index
    %c0_65 = arith.constant 0 : index
    %108 = vector.load %arg8[%c0_63, %c3_64, %c0_65] : memref<4x8x32xf32, #tpu.memory_space<vmem>>, vector<4x1x32xf32>
    tpu.vector_store %arg8[%c0_63, %c3_64, %c0_65], %107 {strides = array<i32>} : memref<4x8x32xf32, #tpu.memory_space<vmem>>, vector<4x1x32xf32>,
    %109 = vector.extract_strided_slice %78 {offsets = [0, 4, 0], sizes = [4, 1, 32], strides = [1, 1, 1]} : vector<4x8x32xf32> to vector<4x1x32xf32>
    %110 = vector.shape_cast %109 : vector<4x1x32xf32> to vector<4x32xf32>
    %cst_66 = arith.constant dense<0.000000e+00> : vector<4x32xf32>
    %111 = tpu.matmul %106, %80, %cst_66 {dimension_numbers = #tpu.dot_dimension_numbers<[1], [0], [0], [1], [0, 0, 1, 1], [], []>} : vector<4x32xf32>, vector<32x32xf32>, vector<4x32xf32> -> vector<4x32xf32>
    %112 = arith.addf %110, %111 : vector<4x32xf32>
    %113 = math.tanh %112 : vector<4x32xf32>
    %114 = vector.shape_cast %113 : vector<4x32xf32> to vector<4x1x32xf32>
    %c0_67 = arith.constant 0 : index
    %c4_68 = arith.constant 4 : index
    %c0_69 = arith.constant 0 : index
    %115 = vector.load %arg8[%c0_67, %c4_68, %c0_69] : memref<4x8x32xf32, #tpu.memory_space<vmem>>, vector<4x1x32xf32>
    tpu.vector_store %arg8[%c0_67, %c4_68, %c0_69], %114 {strides = array<i32>} : memref<4x8x32xf32, #tpu.memory_space<vmem>>, vector<4x1x32xf32>,
    %116 = vector.extract_strided_slice %78 {offsets = [0, 5, 0], sizes = [4, 1, 32], strides = [1, 1, 1]} : vector<4x8x32xf32> to vector<4x1x32xf32>
    %117 = vector.shape_cast %116 : vector<4x1x32xf32> to vector<4x32xf32>
    %cst_70 = arith.constant dense<0.000000e+00> : vector<4x32xf32>
    %118 = tpu.matmul %113, %80, %cst_70 {dimension_numbers = #tpu.dot_dimension_numbers<[1], [0], [0], [1], [0, 0, 1, 1], [], []>} : vector<4x32xf32>, vector<32x32xf32>, vector<4x32xf32> -> vector<4x32xf32>
    %119 = arith.addf %117, %118 : vector<4x32xf32>
    %120 = math.tanh %119 : vector<4x32xf32>
    %121 = vector.shape_cast %120 : vector<4x32xf32> to vector<4x1x32xf32>
    %c0_71 = arith.constant 0 : index
    %c5_72 = arith.constant 5 : index
    %c0_73 = arith.constant 0 : index
    %122 = vector.load %arg8[%c0_71, %c5_72, %c0_73] : memref<4x8x32xf32, #tpu.memory_space<vmem>>, vector<4x1x32xf32>
    tpu.vector_store %arg8[%c0_71, %c5_72, %c0_73], %121 {strides = array<i32>} : memref<4x8x32xf32, #tpu.memory_space<vmem>>, vector<4x1x32xf32>,
    %123 = vector.extract_strided_slice %78 {offsets = [0, 6, 0], sizes = [4, 1, 32], strides = [1, 1, 1]} : vector<4x8x32xf32> to vector<4x1x32xf32>
    %124 = vector.shape_cast %123 : vector<4x1x32xf32> to vector<4x32xf32>
    %cst_74 = arith.constant dense<0.000000e+00> : vector<4x32xf32>
    %125 = tpu.matmul %120, %80, %cst_74 {dimension_numbers = #tpu.dot_dimension_numbers<[1], [0], [0], [1], [0, 0, 1, 1], [], []>} : vector<4x32xf32>, vector<32x32xf32>, vector<4x32xf32> -> vector<4x32xf32>
    %126 = arith.addf %124, %125 : vector<4x32xf32>
    %127 = math.tanh %126 : vector<4x32xf32>
    %128 = vector.shape_cast %127 : vector<4x32xf32> to vector<4x1x32xf32>
    %c0_75 = arith.constant 0 : index
    %c6_76 = arith.constant 6 : index
    %c0_77 = arith.constant 0 : index
    %129 = vector.load %arg8[%c0_75, %c6_76, %c0_77] : memref<4x8x32xf32, #tpu.memory_space<vmem>>, vector<4x1x32xf32>
    tpu.vector_store %arg8[%c0_75, %c6_76, %c0_77], %128 {strides = array<i32>} : memref<4x8x32xf32, #tpu.memory_space<vmem>>, vector<4x1x32xf32>,
    %130 = vector.extract_strided_slice %78 {offsets = [0, 7, 0], sizes = [4, 1, 32], strides = [1, 1, 1]} : vector<4x8x32xf32> to vector<4x1x32xf32>
    %131 = vector.shape_cast %130 : vector<4x1x32xf32> to vector<4x32xf32>
    %cst_78 = arith.constant dense<0.000000e+00> : vector<4x32xf32>
    %132 = tpu.matmul %127, %80, %cst_78 {dimension_numbers = #tpu.dot_dimension_numbers<[1], [0], [0], [1], [0, 0, 1, 1], [], []>} : vector<4x32xf32>, vector<32x32xf32>, vector<4x32xf32> -> vector<4x32xf32>
    %133 = arith.addf %131, %132 : vector<4x32xf32>
    %134 = math.tanh %133 : vector<4x32xf32>
    %135 = vector.shape_cast %134 : vector<4x32xf32> to vector<4x1x32xf32>
    %c0_79 = arith.constant 0 : index
    %c7_80 = arith.constant 7 : index
    %c0_81 = arith.constant 0 : index
    %136 = vector.load %arg8[%c0_79, %c7_80, %c0_81] : memref<4x8x32xf32, #tpu.memory_space<vmem>>, vector<4x1x32xf32>
    tpu.vector_store %arg8[%c0_79, %c7_80, %c0_81], %135 {strides = array<i32>} : memref<4x8x32xf32, #tpu.memory_space<vmem>>, vector<4x1x32xf32>,
    %c1_82 = arith.constant 1 : index
    %c0_83 = arith.constant 0 : index
    %c0_84 = arith.constant 0 : index
    %137 = vector.load %arg2[%c1_82, %c0_83, %c0_84] : memref<9x32x32xf32, #tpu.memory_space<vmem>>, vector<1x32x32xf32>
    %138 = vector.shape_cast %137 : vector<1x32x32xf32> to vector<32x32xf32>
    %c0_85 = arith.constant 0 : index
    %c0_86 = arith.constant 0 : index
    %c0_87 = arith.constant 0 : index
    %139 = vector.load %arg8[%c0_85, %c0_86, %c0_87] : memref<4x8x32xf32, #tpu.memory_space<vmem>>, vector<4x8x32xf32>
    %140 = vector.shape_cast %139 : vector<4x8x32xf32> to vector<32x32xf32>
    %cst_88 = arith.constant dense<0.000000e+00> : vector<32x32xf32>
    %141 = tpu.matmul %140, %138, %cst_88 {dimension_numbers = #tpu.dot_dimension_numbers<[1], [0], [0], [1], [0, 0, 1, 1], [], []>} : vector<32x32xf32>, vector<32x32xf32>, vector<32x32xf32> -> vector<32x32xf32>
    %c2_89 = arith.constant 2 : index
    %c0_90 = arith.constant 0 : index
    %c0_91 = arith.constant 0 : index
    %142 = vector.load %arg4[%c2_89, %c0_90, %c0_91] : memref<10x1x32xf32, #tpu.memory_space<vmem>>, vector<1x1x32xf32>
    %143 = vector.shape_cast %142 : vector<1x1x32xf32> to vector<1x32xf32>
    %144 = vector.broadcast %143 : vector<1x32xf32> to vector<32x32xf32>
    %145 = arith.addf %141, %144 : vector<32x32xf32>
    %146 = vector.shape_cast %145 : vector<32x32xf32> to vector<4x8x32xf32>
    %c2_92 = arith.constant 2 : index
    %c0_93 = arith.constant 0 : index
    %c0_94 = arith.constant 0 : index
    %147 = vector.load %arg3[%c2_92, %c0_93, %c0_94] : memref<10x32x32xf32, #tpu.memory_space<vmem>>, vector<1x32x32xf32>
    %148 = vector.shape_cast %147 : vector<1x32x32xf32> to vector<32x32xf32>
    %149 = vector.extract_strided_slice %146 {offsets = [0, 0, 0], sizes = [4, 1, 32], strides = [1, 1, 1]} : vector<4x8x32xf32> to vector<4x1x32xf32>
    %150 = vector.shape_cast %149 : vector<4x1x32xf32> to vector<4x32xf32>
    %cst_95 = arith.constant dense<0.000000e+00> : vector<4x32xf32>
    %151 = tpu.matmul %66, %148, %cst_95 {dimension_numbers = #tpu.dot_dimension_numbers<[1], [0], [0], [1], [0, 0, 1, 1], [], []>} : vector<4x32xf32>, vector<32x32xf32>, vector<4x32xf32> -> vector<4x32xf32>
    %152 = arith.addf %150, %151 : vector<4x32xf32>
    %153 = math.tanh %152 : vector<4x32xf32>
    %154 = vector.shape_cast %153 : vector<4x32xf32> to vector<4x1x32xf32>
    %c0_96 = arith.constant 0 : index
    %c0_97 = arith.constant 0 : index
    %c0_98 = arith.constant 0 : index
    %155 = vector.load %arg8[%c0_96, %c0_97, %c0_98] : memref<4x8x32xf32, #tpu.memory_space<vmem>>, vector<4x1x32xf32>
    tpu.vector_store %arg8[%c0_96, %c0_97, %c0_98], %154 {strides = array<i32>} : memref<4x8x32xf32, #tpu.memory_space<vmem>>, vector<4x1x32xf32>,
    %156 = vector.extract_strided_slice %146 {offsets = [0, 1, 0], sizes = [4, 1, 32], strides = [1, 1, 1]} : vector<4x8x32xf32> to vector<4x1x32xf32>
    %157 = vector.shape_cast %156 : vector<4x1x32xf32> to vector<4x32xf32>
    %cst_99 = arith.constant dense<0.000000e+00> : vector<4x32xf32>
    %158 = tpu.matmul %153, %148, %cst_99 {dimension_numbers = #tpu.dot_dimension_numbers<[1], [0], [0], [1], [0, 0, 1, 1], [], []>} : vector<4x32xf32>, vector<32x32xf32>, vector<4x32xf32> -> vector<4x32xf32>
    %159 = arith.addf %157, %158 : vector<4x32xf32>
    %160 = math.tanh %159 : vector<4x32xf32>
    %161 = vector.shape_cast %160 : vector<4x32xf32> to vector<4x1x32xf32>
    %c0_100 = arith.constant 0 : index
    %c1_101 = arith.constant 1 : index
    %c0_102 = arith.constant 0 : index
    %162 = vector.load %arg8[%c0_100, %c1_101, %c0_102] : memref<4x8x32xf32, #tpu.memory_space<vmem>>, vector<4x1x32xf32>
    tpu.vector_store %arg8[%c0_100, %c1_101, %c0_102], %161 {strides = array<i32>} : memref<4x8x32xf32, #tpu.memory_space<vmem>>, vector<4x1x32xf32>,
    %163 = vector.extract_strided_slice %146 {offsets = [0, 2, 0], sizes = [4, 1, 32], strides = [1, 1, 1]} : vector<4x8x32xf32> to vector<4x1x32xf32>
    %164 = vector.shape_cast %163 : vector<4x1x32xf32> to vector<4x32xf32>
    %cst_103 = arith.constant dense<0.000000e+00> : vector<4x32xf32>
    %165 = tpu.matmul %160, %148, %cst_103 {dimension_numbers = #tpu.dot_dimension_numbers<[1], [0], [0], [1], [0, 0, 1, 1], [], []>} : vector<4x32xf32>, vector<32x32xf32>, vector<4x32xf32> -> vector<4x32xf32>
    %166 = arith.addf %164, %165 : vector<4x32xf32>
    %167 = math.tanh %166 : vector<4x32xf32>
    %168 = vector.shape_cast %167 : vector<4x32xf32> to vector<4x1x32xf32>
    %c0_104 = arith.constant 0 : index
    %c2_105 = arith.constant 2 : index
    %c0_106 = arith.constant 0 : index
    %169 = vector.load %arg8[%c0_104, %c2_105, %c0_106] : memref<4x8x32xf32, #tpu.memory_space<vmem>>, vector<4x1x32xf32>
    tpu.vector_store %arg8[%c0_104, %c2_105, %c0_106], %168 {strides = array<i32>} : memref<4x8x32xf32, #tpu.memory_space<vmem>>, vector<4x1x32xf32>,
    %170 = vector.extract_strided_slice %146 {offsets = [0, 3, 0], sizes = [4, 1, 32], strides = [1, 1, 1]} : vector<4x8x32xf32> to vector<4x1x32xf32>
    %171 = vector.shape_cast %170 : vector<4x1x32xf32> to vector<4x32xf32>
    %cst_107 = arith.constant dense<0.000000e+00> : vector<4x32xf32>
    %172 = tpu.matmul %167, %148, %cst_107 {dimension_numbers = #tpu.dot_dimension_numbers<[1], [0], [0], [1], [0, 0, 1, 1], [], []>} : vector<4x32xf32>, vector<32x32xf32>, vector<4x32xf32> -> vector<4x32xf32>
    %173 = arith.addf %171, %172 : vector<4x32xf32>
    %174 = math.tanh %173 : vector<4x32xf32>
    %175 = vector.shape_cast %174 : vector<4x32xf32> to vector<4x1x32xf32>
    %c0_108 = arith.constant 0 : index
    %c3_109 = arith.constant 3 : index
    %c0_110 = arith.constant 0 : index
    %176 = vector.load %arg8[%c0_108, %c3_109, %c0_110] : memref<4x8x32xf32, #tpu.memory_space<vmem>>, vector<4x1x32xf32>
    tpu.vector_store %arg8[%c0_108, %c3_109, %c0_110], %175 {strides = array<i32>} : memref<4x8x32xf32, #tpu.memory_space<vmem>>, vector<4x1x32xf32>,
    %177 = vector.extract_strided_slice %146 {offsets = [0, 4, 0], sizes = [4, 1, 32], strides = [1, 1, 1]} : vector<4x8x32xf32> to vector<4x1x32xf32>
    %178 = vector.shape_cast %177 : vector<4x1x32xf32> to vector<4x32xf32>
    %cst_111 = arith.constant dense<0.000000e+00> : vector<4x32xf32>
    %179 = tpu.matmul %174, %148, %cst_111 {dimension_numbers = #tpu.dot_dimension_numbers<[1], [0], [0], [1], [0, 0, 1, 1], [], []>} : vector<4x32xf32>, vector<32x32xf32>, vector<4x32xf32> -> vector<4x32xf32>
    %180 = arith.addf %178, %179 : vector<4x32xf32>
    %181 = math.tanh %180 : vector<4x32xf32>
    %182 = vector.shape_cast %181 : vector<4x32xf32> to vector<4x1x32xf32>
    %c0_112 = arith.constant 0 : index
    %c4_113 = arith.constant 4 : index
    %c0_114 = arith.constant 0 : index
    %183 = vector.load %arg8[%c0_112, %c4_113, %c0_114] : memref<4x8x32xf32, #tpu.memory_space<vmem>>, vector<4x1x32xf32>
    tpu.vector_store %arg8[%c0_112, %c4_113, %c0_114], %182 {strides = array<i32>} : memref<4x8x32xf32, #tpu.memory_space<vmem>>, vector<4x1x32xf32>,
    %184 = vector.extract_strided_slice %146 {offsets = [0, 5, 0], sizes = [4, 1, 32], strides = [1, 1, 1]} : vector<4x8x32xf32> to vector<4x1x32xf32>
    %185 = vector.shape_cast %184 : vector<4x1x32xf32> to vector<4x32xf32>
    %cst_115 = arith.constant dense<0.000000e+00> : vector<4x32xf32>
    %186 = tpu.matmul %181, %148, %cst_115 {dimension_numbers = #tpu.dot_dimension_numbers<[1], [0], [0], [1], [0, 0, 1, 1], [], []>} : vector<4x32xf32>, vector<32x32xf32>, vector<4x32xf32> -> vector<4x32xf32>
    %187 = arith.addf %185, %186 : vector<4x32xf32>
    %188 = math.tanh %187 : vector<4x32xf32>
    %189 = vector.shape_cast %188 : vector<4x32xf32> to vector<4x1x32xf32>
    %c0_116 = arith.constant 0 : index
    %c5_117 = arith.constant 5 : index
    %c0_118 = arith.constant 0 : index
    %190 = vector.load %arg8[%c0_116, %c5_117, %c0_118] : memref<4x8x32xf32, #tpu.memory_space<vmem>>, vector<4x1x32xf32>
    tpu.vector_store %arg8[%c0_116, %c5_117, %c0_118], %189 {strides = array<i32>} : memref<4x8x32xf32, #tpu.memory_space<vmem>>, vector<4x1x32xf32>,
    %191 = vector.extract_strided_slice %146 {offsets = [0, 6, 0], sizes = [4, 1, 32], strides = [1, 1, 1]} : vector<4x8x32xf32> to vector<4x1x32xf32>
    %192 = vector.shape_cast %191 : vector<4x1x32xf32> to vector<4x32xf32>
    %cst_119 = arith.constant dense<0.000000e+00> : vector<4x32xf32>
    %193 = tpu.matmul %188, %148, %cst_119 {dimension_numbers = #tpu.dot_dimension_numbers<[1], [0], [0], [1], [0, 0, 1, 1], [], []>} : vector<4x32xf32>, vector<32x32xf32>, vector<4x32xf32> -> vector<4x32xf32>
    %194 = arith.addf %192, %193 : vector<4x32xf32>
    %195 = math.tanh %194 : vector<4x32xf32>
    %196 = vector.shape_cast %195 : vector<4x32xf32> to vector<4x1x32xf32>
    %c0_120 = arith.constant 0 : index
    %c6_121 = arith.constant 6 : index
    %c0_122 = arith.constant 0 : index
    %197 = vector.load %arg8[%c0_120, %c6_121, %c0_122] : memref<4x8x32xf32, #tpu.memory_space<vmem>>, vector<4x1x32xf32>
    tpu.vector_store %arg8[%c0_120, %c6_121, %c0_122], %196 {strides = array<i32>} : memref<4x8x32xf32, #tpu.memory_space<vmem>>, vector<4x1x32xf32>,
    %198 = vector.extract_strided_slice %146 {offsets = [0, 7, 0], sizes = [4, 1, 32], strides = [1, 1, 1]} : vector<4x8x32xf32> to vector<4x1x32xf32>
    %199 = vector.shape_cast %198 : vector<4x1x32xf32> to vector<4x32xf32>
    %cst_123 = arith.constant dense<0.000000e+00> : vector<4x32xf32>
    %200 = tpu.matmul %195, %148, %cst_123 {dimension_numbers = #tpu.dot_dimension_numbers<[1], [0], [0], [1], [0, 0, 1, 1], [], []>} : vector<4x32xf32>, vector<32x32xf32>, vector<4x32xf32> -> vector<4x32xf32>
    %201 = arith.addf %199, %200 : vector<4x32xf32>
    %202 = math.tanh %201 : vector<4x32xf32>
    %203 = vector.shape_cast %202 : vector<4x32xf32> to vector<4x1x32xf32>
    %c0_124 = arith.constant 0 : index
    %c7_125 = arith.constant 7 : index
    %c0_126 = arith.constant 0 : index
    %204 = vector.load %arg8[%c0_124, %c7_125, %c0_126] : memref<4x8x32xf32, #tpu.memory_space<vmem>>, vector<4x1x32xf32>
    tpu.vector_store %arg8[%c0_124, %c7_125, %c0_126], %203 {strides = array<i32>} : memref<4x8x32xf32, #tpu.memory_space<vmem>>, vector<4x1x32xf32>,
    %c2_127 = arith.constant 2 : index
    %c0_128 = arith.constant 0 : index
    %c0_129 = arith.constant 0 : index
    %205 = vector.load %arg2[%c2_127, %c0_128, %c0_129] : memref<9x32x32xf32, #tpu.memory_space<vmem>>, vector<1x32x32xf32>
    %206 = vector.shape_cast %205 : vector<1x32x32xf32> to vector<32x32xf32>
    %c0_130 = arith.constant 0 : index
    %c0_131 = arith.constant 0 : index
    %c0_132 = arith.constant 0 : index
    %207 = vector.load %arg8[%c0_130, %c0_131, %c0_132] : memref<4x8x32xf32, #tpu.memory_space<vmem>>, vector<4x8x32xf32>
    %208 = vector.shape_cast %207 : vector<4x8x32xf32> to vector<32x32xf32>
    %cst_133 = arith.constant dense<0.000000e+00> : vector<32x32xf32>
    %209 = tpu.matmul %208, %206, %cst_133 {dimension_numbers = #tpu.dot_dimension_numbers<[1], [0], [0], [1], [0, 0, 1, 1], [], []>} : vector<32x32xf32>, vector<32x32xf32>, vector<32x32xf32> -> vector<32x32xf32>
    %c3_134 = arith.constant 3 : index
    %c0_135 = arith.constant 0 : index
    %c0_136 = arith.constant 0 : index
    %210 = vector.load %arg4[%c3_134, %c0_135, %c0_136] : memref<10x1x32xf32, #tpu.memory_space<vmem>>, vector<1x1x32xf32>
    %211 = vector.shape_cast %210 : vector<1x1x32xf32> to vector<1x32xf32>
    %212 = vector.broadcast %211 : vector<1x32xf32> to vector<32x32xf32>
    %213 = arith.addf %209, %212 : vector<32x32xf32>
    %214 = vector.shape_cast %213 : vector<32x32xf32> to vector<4x8x32xf32>
    %c3_137 = arith.constant 3 : index
    %c0_138 = arith.constant 0 : index
    %c0_139 = arith.constant 0 : index
    %215 = vector.load %arg3[%c3_137, %c0_138, %c0_139] : memref<10x32x32xf32, #tpu.memory_space<vmem>>, vector<1x32x32xf32>
    %216 = vector.shape_cast %215 : vector<1x32x32xf32> to vector<32x32xf32>
    %217 = vector.extract_strided_slice %214 {offsets = [0, 0, 0], sizes = [4, 1, 32], strides = [1, 1, 1]} : vector<4x8x32xf32> to vector<4x1x32xf32>
    %218 = vector.shape_cast %217 : vector<4x1x32xf32> to vector<4x32xf32>
    %cst_140 = arith.constant dense<0.000000e+00> : vector<4x32xf32>
    %219 = tpu.matmul %134, %216, %cst_140 {dimension_numbers = #tpu.dot_dimension_numbers<[1], [0], [0], [1], [0, 0, 1, 1], [], []>} : vector<4x32xf32>, vector<32x32xf32>, vector<4x32xf32> -> vector<4x32xf32>
    %220 = arith.addf %218, %219 : vector<4x32xf32>
    %221 = math.tanh %220 : vector<4x32xf32>
    %222 = vector.shape_cast %221 : vector<4x32xf32> to vector<4x1x32xf32>
    %c0_141 = arith.constant 0 : index
    %c0_142 = arith.constant 0 : index
    %c0_143 = arith.constant 0 : index
    %223 = vector.load %arg8[%c0_141, %c0_142, %c0_143] : memref<4x8x32xf32, #tpu.memory_space<vmem>>, vector<4x1x32xf32>
    tpu.vector_store %arg8[%c0_141, %c0_142, %c0_143], %222 {strides = array<i32>} : memref<4x8x32xf32, #tpu.memory_space<vmem>>, vector<4x1x32xf32>,
    %224 = vector.extract_strided_slice %214 {offsets = [0, 1, 0], sizes = [4, 1, 32], strides = [1, 1, 1]} : vector<4x8x32xf32> to vector<4x1x32xf32>
    %225 = vector.shape_cast %224 : vector<4x1x32xf32> to vector<4x32xf32>
    %cst_144 = arith.constant dense<0.000000e+00> : vector<4x32xf32>
    %226 = tpu.matmul %221, %216, %cst_144 {dimension_numbers = #tpu.dot_dimension_numbers<[1], [0], [0], [1], [0, 0, 1, 1], [], []>} : vector<4x32xf32>, vector<32x32xf32>, vector<4x32xf32> -> vector<4x32xf32>
    %227 = arith.addf %225, %226 : vector<4x32xf32>
    %228 = math.tanh %227 : vector<4x32xf32>
    %229 = vector.shape_cast %228 : vector<4x32xf32> to vector<4x1x32xf32>
    %c0_145 = arith.constant 0 : index
    %c1_146 = arith.constant 1 : index
    %c0_147 = arith.constant 0 : index
    %230 = vector.load %arg8[%c0_145, %c1_146, %c0_147] : memref<4x8x32xf32, #tpu.memory_space<vmem>>, vector<4x1x32xf32>
    tpu.vector_store %arg8[%c0_145, %c1_146, %c0_147], %229 {strides = array<i32>} : memref<4x8x32xf32, #tpu.memory_space<vmem>>, vector<4x1x32xf32>,
    %231 = vector.extract_strided_slice %214 {offsets = [0, 2, 0], sizes = [4, 1, 32], strides = [1, 1, 1]} : vector<4x8x32xf32> to vector<4x1x32xf32>
    %232 = vector.shape_cast %231 : vector<4x1x32xf32> to vector<4x32xf32>
    %cst_148 = arith.constant dense<0.000000e+00> : vector<4x32xf32>
    %233 = tpu.matmul %228, %216, %cst_148 {dimension_numbers = #tpu.dot_dimension_numbers<[1], [0], [0], [1], [0, 0, 1, 1], [], []>} : vector<4x32xf32>, vector<32x32xf32>, vector<4x32xf32> -> vector<4x32xf32>
    %234 = arith.addf %232, %233 : vector<4x32xf32>
    %235 = math.tanh %234 : vector<4x32xf32>
    %236 = vector.shape_cast %235 : vector<4x32xf32> to vector<4x1x32xf32>
    %c0_149 = arith.constant 0 : index
    %c2_150 = arith.constant 2 : index
    %c0_151 = arith.constant 0 : index
    %237 = vector.load %arg8[%c0_149, %c2_150, %c0_151] : memref<4x8x32xf32, #tpu.memory_space<vmem>>, vector<4x1x32xf32>
    tpu.vector_store %arg8[%c0_149, %c2_150, %c0_151], %236 {strides = array<i32>} : memref<4x8x32xf32, #tpu.memory_space<vmem>>, vector<4x1x32xf32>,
    %238 = vector.extract_strided_slice %214 {offsets = [0, 3, 0], sizes = [4, 1, 32], strides = [1, 1, 1]} : vector<4x8x32xf32> to vector<4x1x32xf32>
    %239 = vector.shape_cast %238 : vector<4x1x32xf32> to vector<4x32xf32>
    %cst_152 = arith.constant dense<0.000000e+00> : vector<4x32xf32>
    %240 = tpu.matmul %235, %216, %cst_152 {dimension_numbers = #tpu.dot_dimension_numbers<[1], [0], [0], [1], [0, 0, 1, 1], [], []>} : vector<4x32xf32>, vector<32x32xf32>, vector<4x32xf32> -> vector<4x32xf32>
    %241 = arith.addf %239, %240 : vector<4x32xf32>
    %242 = math.tanh %241 : vector<4x32xf32>
    %243 = vector.shape_cast %242 : vector<4x32xf32> to vector<4x1x32xf32>
    %c0_153 = arith.constant 0 : index
    %c3_154 = arith.constant 3 : index
    %c0_155 = arith.constant 0 : index
    %244 = vector.load %arg8[%c0_153, %c3_154, %c0_155] : memref<4x8x32xf32, #tpu.memory_space<vmem>>, vector<4x1x32xf32>
    tpu.vector_store %arg8[%c0_153, %c3_154, %c0_155], %243 {strides = array<i32>} : memref<4x8x32xf32, #tpu.memory_space<vmem>>, vector<4x1x32xf32>,
    %245 = vector.extract_strided_slice %214 {offsets = [0, 4, 0], sizes = [4, 1, 32], strides = [1, 1, 1]} : vector<4x8x32xf32> to vector<4x1x32xf32>
    %246 = vector.shape_cast %245 : vector<4x1x32xf32> to vector<4x32xf32>
    %cst_156 = arith.constant dense<0.000000e+00> : vector<4x32xf32>
    %247 = tpu.matmul %242, %216, %cst_156 {dimension_numbers = #tpu.dot_dimension_numbers<[1], [0], [0], [1], [0, 0, 1, 1], [], []>} : vector<4x32xf32>, vector<32x32xf32>, vector<4x32xf32> -> vector<4x32xf32>
    %248 = arith.addf %246, %247 : vector<4x32xf32>
    %249 = math.tanh %248 : vector<4x32xf32>
    %250 = vector.shape_cast %249 : vector<4x32xf32> to vector<4x1x32xf32>
    %c0_157 = arith.constant 0 : index
    %c4_158 = arith.constant 4 : index
    %c0_159 = arith.constant 0 : index
    %251 = vector.load %arg8[%c0_157, %c4_158, %c0_159] : memref<4x8x32xf32, #tpu.memory_space<vmem>>, vector<4x1x32xf32>
    tpu.vector_store %arg8[%c0_157, %c4_158, %c0_159], %250 {strides = array<i32>} : memref<4x8x32xf32, #tpu.memory_space<vmem>>, vector<4x1x32xf32>,
    %252 = vector.extract_strided_slice %214 {offsets = [0, 5, 0], sizes = [4, 1, 32], strides = [1, 1, 1]} : vector<4x8x32xf32> to vector<4x1x32xf32>
    %253 = vector.shape_cast %252 : vector<4x1x32xf32> to vector<4x32xf32>
    %cst_160 = arith.constant dense<0.000000e+00> : vector<4x32xf32>
    %254 = tpu.matmul %249, %216, %cst_160 {dimension_numbers = #tpu.dot_dimension_numbers<[1], [0], [0], [1], [0, 0, 1, 1], [], []>} : vector<4x32xf32>, vector<32x32xf32>, vector<4x32xf32> -> vector<4x32xf32>
    %255 = arith.addf %253, %254 : vector<4x32xf32>
    %256 = math.tanh %255 : vector<4x32xf32>
    %257 = vector.shape_cast %256 : vector<4x32xf32> to vector<4x1x32xf32>
    %c0_161 = arith.constant 0 : index
    %c5_162 = arith.constant 5 : index
    %c0_163 = arith.constant 0 : index
    %258 = vector.load %arg8[%c0_161, %c5_162, %c0_163] : memref<4x8x32xf32, #tpu.memory_space<vmem>>, vector<4x1x32xf32>
    tpu.vector_store %arg8[%c0_161, %c5_162, %c0_163], %257 {strides = array<i32>} : memref<4x8x32xf32, #tpu.memory_space<vmem>>, vector<4x1x32xf32>,
    %259 = vector.extract_strided_slice %214 {offsets = [0, 6, 0], sizes = [4, 1, 32], strides = [1, 1, 1]} : vector<4x8x32xf32> to vector<4x1x32xf32>
    %260 = vector.shape_cast %259 : vector<4x1x32xf32> to vector<4x32xf32>
    %cst_164 = arith.constant dense<0.000000e+00> : vector<4x32xf32>
    %261 = tpu.matmul %256, %216, %cst_164 {dimension_numbers = #tpu.dot_dimension_numbers<[1], [0], [0], [1], [0, 0, 1, 1], [], []>} : vector<4x32xf32>, vector<32x32xf32>, vector<4x32xf32> -> vector<4x32xf32>
    %262 = arith.addf %260, %261 : vector<4x32xf32>
    %263 = math.tanh %262 : vector<4x32xf32>
    %264 = vector.shape_cast %263 : vector<4x32xf32> to vector<4x1x32xf32>
    %c0_165 = arith.constant 0 : index
    %c6_166 = arith.constant 6 : index
    %c0_167 = arith.constant 0 : index
    %265 = vector.load %arg8[%c0_165, %c6_166, %c0_167] : memref<4x8x32xf32, #tpu.memory_space<vmem>>, vector<4x1x32xf32>
    tpu.vector_store %arg8[%c0_165, %c6_166, %c0_167], %264 {strides = array<i32>} : memref<4x8x32xf32, #tpu.memory_space<vmem>>, vector<4x1x32xf32>,
    %266 = vector.extract_strided_slice %214 {offsets = [0, 7, 0], sizes = [4, 1, 32], strides = [1, 1, 1]} : vector<4x8x32xf32> to vector<4x1x32xf32>
    %267 = vector.shape_cast %266 : vector<4x1x32xf32> to vector<4x32xf32>
    %cst_168 = arith.constant dense<0.000000e+00> : vector<4x32xf32>
    %268 = tpu.matmul %263, %216, %cst_168 {dimension_numbers = #tpu.dot_dimension_numbers<[1], [0], [0], [1], [0, 0, 1, 1], [], []>} : vector<4x32xf32>, vector<32x32xf32>, vector<4x32xf32> -> vector<4x32xf32>
    %269 = arith.addf %267, %268 : vector<4x32xf32>
    %270 = math.tanh %269 : vector<4x32xf32>
    %271 = vector.shape_cast %270 : vector<4x32xf32> to vector<4x1x32xf32>
    %c0_169 = arith.constant 0 : index
    %c7_170 = arith.constant 7 : index
    %c0_171 = arith.constant 0 : index
    %272 = vector.load %arg8[%c0_169, %c7_170, %c0_171] : memref<4x8x32xf32, #tpu.memory_space<vmem>>, vector<4x1x32xf32>
    tpu.vector_store %arg8[%c0_169, %c7_170, %c0_171], %271 {strides = array<i32>} : memref<4x8x32xf32, #tpu.memory_space<vmem>>, vector<4x1x32xf32>,
    %c3_172 = arith.constant 3 : index
    %c0_173 = arith.constant 0 : index
    %c0_174 = arith.constant 0 : index
    %273 = vector.load %arg2[%c3_172, %c0_173, %c0_174] : memref<9x32x32xf32, #tpu.memory_space<vmem>>, vector<1x32x32xf32>
    %274 = vector.shape_cast %273 : vector<1x32x32xf32> to vector<32x32xf32>
    %c0_175 = arith.constant 0 : index
    %c0_176 = arith.constant 0 : index
    %c0_177 = arith.constant 0 : index
    %275 = vector.load %arg8[%c0_175, %c0_176, %c0_177] : memref<4x8x32xf32, #tpu.memory_space<vmem>>, vector<4x8x32xf32>
    %276 = vector.shape_cast %275 : vector<4x8x32xf32> to vector<32x32xf32>
    %cst_178 = arith.constant dense<0.000000e+00> : vector<32x32xf32>
    %277 = tpu.matmul %276, %274, %cst_178 {dimension_numbers = #tpu.dot_dimension_numbers<[1], [0], [0], [1], [0, 0, 1, 1], [], []>} : vector<32x32xf32>, vector<32x32xf32>, vector<32x32xf32> -> vector<32x32xf32>
    %c4_179 = arith.constant 4 : index
    %c0_180 = arith.constant 0 : index
    %c0_181 = arith.constant 0 : index
    %278 = vector.load %arg4[%c4_179, %c0_180, %c0_181] : memref<10x1x32xf32, #tpu.memory_space<vmem>>, vector<1x1x32xf32>
    %279 = vector.shape_cast %278 : vector<1x1x32xf32> to vector<1x32xf32>
    %280 = vector.broadcast %279 : vector<1x32xf32> to vector<32x32xf32>
    %281 = arith.addf %277, %280 : vector<32x32xf32>
    %282 = vector.shape_cast %281 : vector<32x32xf32> to vector<4x8x32xf32>
    %c4_182 = arith.constant 4 : index
    %c0_183 = arith.constant 0 : index
    %c0_184 = arith.constant 0 : index
    %283 = vector.load %arg3[%c4_182, %c0_183, %c0_184] : memref<10x32x32xf32, #tpu.memory_space<vmem>>, vector<1x32x32xf32>
    %284 = vector.shape_cast %283 : vector<1x32x32xf32> to vector<32x32xf32>
    %285 = vector.extract_strided_slice %282 {offsets = [0, 0, 0], sizes = [4, 1, 32], strides = [1, 1, 1]} : vector<4x8x32xf32> to vector<4x1x32xf32>
    %286 = vector.shape_cast %285 : vector<4x1x32xf32> to vector<4x32xf32>
    %cst_185 = arith.constant dense<0.000000e+00> : vector<4x32xf32>
    %287 = tpu.matmul %202, %284, %cst_185 {dimension_numbers = #tpu.dot_dimension_numbers<[1], [0], [0], [1], [0, 0, 1, 1], [], []>} : vector<4x32xf32>, vector<32x32xf32>, vector<4x32xf32> -> vector<4x32xf32>
    %288 = arith.addf %286, %287 : vector<4x32xf32>
    %289 = math.tanh %288 : vector<4x32xf32>
    %290 = vector.shape_cast %289 : vector<4x32xf32> to vector<4x1x32xf32>
    %c0_186 = arith.constant 0 : index
    %c0_187 = arith.constant 0 : index
    %c0_188 = arith.constant 0 : index
    %291 = vector.load %arg8[%c0_186, %c0_187, %c0_188] : memref<4x8x32xf32, #tpu.memory_space<vmem>>, vector<4x1x32xf32>
    tpu.vector_store %arg8[%c0_186, %c0_187, %c0_188], %290 {strides = array<i32>} : memref<4x8x32xf32, #tpu.memory_space<vmem>>, vector<4x1x32xf32>,
    %292 = vector.extract_strided_slice %282 {offsets = [0, 1, 0], sizes = [4, 1, 32], strides = [1, 1, 1]} : vector<4x8x32xf32> to vector<4x1x32xf32>
    %293 = vector.shape_cast %292 : vector<4x1x32xf32> to vector<4x32xf32>
    %cst_189 = arith.constant dense<0.000000e+00> : vector<4x32xf32>
    %294 = tpu.matmul %289, %284, %cst_189 {dimension_numbers = #tpu.dot_dimension_numbers<[1], [0], [0], [1], [0, 0, 1, 1], [], []>} : vector<4x32xf32>, vector<32x32xf32>, vector<4x32xf32> -> vector<4x32xf32>
    %295 = arith.addf %293, %294 : vector<4x32xf32>
    %296 = math.tanh %295 : vector<4x32xf32>
    %297 = vector.shape_cast %296 : vector<4x32xf32> to vector<4x1x32xf32>
    %c0_190 = arith.constant 0 : index
    %c1_191 = arith.constant 1 : index
    %c0_192 = arith.constant 0 : index
    %298 = vector.load %arg8[%c0_190, %c1_191, %c0_192] : memref<4x8x32xf32, #tpu.memory_space<vmem>>, vector<4x1x32xf32>
    tpu.vector_store %arg8[%c0_190, %c1_191, %c0_192], %297 {strides = array<i32>} : memref<4x8x32xf32, #tpu.memory_space<vmem>>, vector<4x1x32xf32>,
    %299 = vector.extract_strided_slice %282 {offsets = [0, 2, 0], sizes = [4, 1, 32], strides = [1, 1, 1]} : vector<4x8x32xf32> to vector<4x1x32xf32>
    %300 = vector.shape_cast %299 : vector<4x1x32xf32> to vector<4x32xf32>
    %cst_193 = arith.constant dense<0.000000e+00> : vector<4x32xf32>
    %301 = tpu.matmul %296, %284, %cst_193 {dimension_numbers = #tpu.dot_dimension_numbers<[1], [0], [0], [1], [0, 0, 1, 1], [], []>} : vector<4x32xf32>, vector<32x32xf32>, vector<4x32xf32> -> vector<4x32xf32>
    %302 = arith.addf %300, %301 : vector<4x32xf32>
    %303 = math.tanh %302 : vector<4x32xf32>
    %304 = vector.shape_cast %303 : vector<4x32xf32> to vector<4x1x32xf32>
    %c0_194 = arith.constant 0 : index
    %c2_195 = arith.constant 2 : index
    %c0_196 = arith.constant 0 : index
    %305 = vector.load %arg8[%c0_194, %c2_195, %c0_196] : memref<4x8x32xf32, #tpu.memory_space<vmem>>, vector<4x1x32xf32>
    tpu.vector_store %arg8[%c0_194, %c2_195, %c0_196], %304 {strides = array<i32>} : memref<4x8x32xf32, #tpu.memory_space<vmem>>, vector<4x1x32xf32>,
    %306 = vector.extract_strided_slice %282 {offsets = [0, 3, 0], sizes = [4, 1, 32], strides = [1, 1, 1]} : vector<4x8x32xf32> to vector<4x1x32xf32>
    %307 = vector.shape_cast %306 : vector<4x1x32xf32> to vector<4x32xf32>
    %cst_197 = arith.constant dense<0.000000e+00> : vector<4x32xf32>
    %308 = tpu.matmul %303, %284, %cst_197 {dimension_numbers = #tpu.dot_dimension_numbers<[1], [0], [0], [1], [0, 0, 1, 1], [], []>} : vector<4x32xf32>, vector<32x32xf32>, vector<4x32xf32> -> vector<4x32xf32>
    %309 = arith.addf %307, %308 : vector<4x32xf32>
    %310 = math.tanh %309 : vector<4x32xf32>
    %311 = vector.shape_cast %310 : vector<4x32xf32> to vector<4x1x32xf32>
    %c0_198 = arith.constant 0 : index
    %c3_199 = arith.constant 3 : index
    %c0_200 = arith.constant 0 : index
    %312 = vector.load %arg8[%c0_198, %c3_199, %c0_200] : memref<4x8x32xf32, #tpu.memory_space<vmem>>, vector<4x1x32xf32>
    tpu.vector_store %arg8[%c0_198, %c3_199, %c0_200], %311 {strides = array<i32>} : memref<4x8x32xf32, #tpu.memory_space<vmem>>, vector<4x1x32xf32>,
    %313 = vector.extract_strided_slice %282 {offsets = [0, 4, 0], sizes = [4, 1, 32], strides = [1, 1, 1]} : vector<4x8x32xf32> to vector<4x1x32xf32>
    %314 = vector.shape_cast %313 : vector<4x1x32xf32> to vector<4x32xf32>
    %cst_201 = arith.constant dense<0.000000e+00> : vector<4x32xf32>
    %315 = tpu.matmul %310, %284, %cst_201 {dimension_numbers = #tpu.dot_dimension_numbers<[1], [0], [0], [1], [0, 0, 1, 1], [], []>} : vector<4x32xf32>, vector<32x32xf32>, vector<4x32xf32> -> vector<4x32xf32>
    %316 = arith.addf %314, %315 : vector<4x32xf32>
    %317 = math.tanh %316 : vector<4x32xf32>
    %318 = vector.shape_cast %317 : vector<4x32xf32> to vector<4x1x32xf32>
    %c0_202 = arith.constant 0 : index
    %c4_203 = arith.constant 4 : index
    %c0_204 = arith.constant 0 : index
    %319 = vector.load %arg8[%c0_202, %c4_203, %c0_204] : memref<4x8x32xf32, #tpu.memory_space<vmem>>, vector<4x1x32xf32>
    tpu.vector_store %arg8[%c0_202, %c4_203, %c0_204], %318 {strides = array<i32>} : memref<4x8x32xf32, #tpu.memory_space<vmem>>, vector<4x1x32xf32>,
    %320 = vector.extract_strided_slice %282 {offsets = [0, 5, 0], sizes = [4, 1, 32], strides = [1, 1, 1]} : vector<4x8x32xf32> to vector<4x1x32xf32>
    %321 = vector.shape_cast %320 : vector<4x1x32xf32> to vector<4x32xf32>
    %cst_205 = arith.constant dense<0.000000e+00> : vector<4x32xf32>
    %322 = tpu.matmul %317, %284, %cst_205 {dimension_numbers = #tpu.dot_dimension_numbers<[1], [0], [0], [1], [0, 0, 1, 1], [], []>} : vector<4x32xf32>, vector<32x32xf32>, vector<4x32xf32> -> vector<4x32xf32>
    %323 = arith.addf %321, %322 : vector<4x32xf32>
    %324 = math.tanh %323 : vector<4x32xf32>
    %325 = vector.shape_cast %324 : vector<4x32xf32> to vector<4x1x32xf32>
    %c0_206 = arith.constant 0 : index
    %c5_207 = arith.constant 5 : index
    %c0_208 = arith.constant 0 : index
    %326 = vector.load %arg8[%c0_206, %c5_207, %c0_208] : memref<4x8x32xf32, #tpu.memory_space<vmem>>, vector<4x1x32xf32>
    tpu.vector_store %arg8[%c0_206, %c5_207, %c0_208], %325 {strides = array<i32>} : memref<4x8x32xf32, #tpu.memory_space<vmem>>, vector<4x1x32xf32>,
    %327 = vector.extract_strided_slice %282 {offsets = [0, 6, 0], sizes = [4, 1, 32], strides = [1, 1, 1]} : vector<4x8x32xf32> to vector<4x1x32xf32>
    %328 = vector.shape_cast %327 : vector<4x1x32xf32> to vector<4x32xf32>
    %cst_209 = arith.constant dense<0.000000e+00> : vector<4x32xf32>
    %329 = tpu.matmul %324, %284, %cst_209 {dimension_numbers = #tpu.dot_dimension_numbers<[1], [0], [0], [1], [0, 0, 1, 1], [], []>} : vector<4x32xf32>, vector<32x32xf32>, vector<4x32xf32> -> vector<4x32xf32>
    %330 = arith.addf %328, %329 : vector<4x32xf32>
    %331 = math.tanh %330 : vector<4x32xf32>
    %332 = vector.shape_cast %331 : vector<4x32xf32> to vector<4x1x32xf32>
    %c0_210 = arith.constant 0 : index
    %c6_211 = arith.constant 6 : index
    %c0_212 = arith.constant 0 : index
    %333 = vector.load %arg8[%c0_210, %c6_211, %c0_212] : memref<4x8x32xf32, #tpu.memory_space<vmem>>, vector<4x1x32xf32>
    tpu.vector_store %arg8[%c0_210, %c6_211, %c0_212], %332 {strides = array<i32>} : memref<4x8x32xf32, #tpu.memory_space<vmem>>, vector<4x1x32xf32>,
    %334 = vector.extract_strided_slice %282 {offsets = [0, 7, 0], sizes = [4, 1, 32], strides = [1, 1, 1]} : vector<4x8x32xf32> to vector<4x1x32xf32>
    %335 = vector.shape_cast %334 : vector<4x1x32xf32> to vector<4x32xf32>
    %cst_213 = arith.constant dense<0.000000e+00> : vector<4x32xf32>
    %336 = tpu.matmul %331, %284, %cst_213 {dimension_numbers = #tpu.dot_dimension_numbers<[1], [0], [0], [1], [0, 0, 1, 1], [], []>} : vector<4x32xf32>, vector<32x32xf32>, vector<4x32xf32> -> vector<4x32xf32>
    %337 = arith.addf %335, %336 : vector<4x32xf32>
    %338 = math.tanh %337 : vector<4x32xf32>
    %339 = vector.shape_cast %338 : vector<4x32xf32> to vector<4x1x32xf32>
    %c0_214 = arith.constant 0 : index
    %c7_215 = arith.constant 7 : index
    %c0_216 = arith.constant 0 : index
    %340 = vector.load %arg8[%c0_214, %c7_215, %c0_216] : memref<4x8x32xf32, #tpu.memory_space<vmem>>, vector<4x1x32xf32>
    tpu.vector_store %arg8[%c0_214, %c7_215, %c0_216], %339 {strides = array<i32>} : memref<4x8x32xf32, #tpu.memory_space<vmem>>, vector<4x1x32xf32>,
    %c4_217 = arith.constant 4 : index
    %c0_218 = arith.constant 0 : index
    %c0_219 = arith.constant 0 : index
    %341 = vector.load %arg2[%c4_217, %c0_218, %c0_219] : memref<9x32x32xf32, #tpu.memory_space<vmem>>, vector<1x32x32xf32>
    %342 = vector.shape_cast %341 : vector<1x32x32xf32> to vector<32x32xf32>
    %c0_220 = arith.constant 0 : index
    %c0_221 = arith.constant 0 : index
    %c0_222 = arith.constant 0 : index
    %343 = vector.load %arg8[%c0_220, %c0_221, %c0_222] : memref<4x8x32xf32, #tpu.memory_space<vmem>>, vector<4x8x32xf32>
    %344 = vector.shape_cast %343 : vector<4x8x32xf32> to vector<32x32xf32>
    %cst_223 = arith.constant dense<0.000000e+00> : vector<32x32xf32>
    %345 = tpu.matmul %344, %342, %cst_223 {dimension_numbers = #tpu.dot_dimension_numbers<[1], [0], [0], [1], [0, 0, 1, 1], [], []>} : vector<32x32xf32>, vector<32x32xf32>, vector<32x32xf32> -> vector<32x32xf32>
    %c5_224 = arith.constant 5 : index
    %c0_225 = arith.constant 0 : index
    %c0_226 = arith.constant 0 : index
    %346 = vector.load %arg4[%c5_224, %c0_225, %c0_226] : memref<10x1x32xf32, #tpu.memory_space<vmem>>, vector<1x1x32xf32>
    %347 = vector.shape_cast %346 : vector<1x1x32xf32> to vector<1x32xf32>
    %348 = vector.broadcast %347 : vector<1x32xf32> to vector<32x32xf32>
    %349 = arith.addf %345, %348 : vector<32x32xf32>
    %350 = vector.shape_cast %349 : vector<32x32xf32> to vector<4x8x32xf32>
    %c5_227 = arith.constant 5 : index
    %c0_228 = arith.constant 0 : index
    %c0_229 = arith.constant 0 : index
    %351 = vector.load %arg3[%c5_227, %c0_228, %c0_229] : memref<10x32x32xf32, #tpu.memory_space<vmem>>, vector<1x32x32xf32>
    %352 = vector.shape_cast %351 : vector<1x32x32xf32> to vector<32x32xf32>
    %353 = vector.extract_strided_slice %350 {offsets = [0, 0, 0], sizes = [4, 1, 32], strides = [1, 1, 1]} : vector<4x8x32xf32> to vector<4x1x32xf32>
    %354 = vector.shape_cast %353 : vector<4x1x32xf32> to vector<4x32xf32>
    %cst_230 = arith.constant dense<0.000000e+00> : vector<4x32xf32>
    %355 = tpu.matmul %270, %352, %cst_230 {dimension_numbers = #tpu.dot_dimension_numbers<[1], [0], [0], [1], [0, 0, 1, 1], [], []>} : vector<4x32xf32>, vector<32x32xf32>, vector<4x32xf32> -> vector<4x32xf32>
    %356 = arith.addf %354, %355 : vector<4x32xf32>
    %357 = math.tanh %356 : vector<4x32xf32>
    %358 = vector.shape_cast %357 : vector<4x32xf32> to vector<4x1x32xf32>
    %c0_231 = arith.constant 0 : index
    %c0_232 = arith.constant 0 : index
    %c0_233 = arith.constant 0 : index
    %359 = vector.load %arg8[%c0_231, %c0_232, %c0_233] : memref<4x8x32xf32, #tpu.memory_space<vmem>>, vector<4x1x32xf32>
    tpu.vector_store %arg8[%c0_231, %c0_232, %c0_233], %358 {strides = array<i32>} : memref<4x8x32xf32, #tpu.memory_space<vmem>>, vector<4x1x32xf32>,
    %360 = vector.extract_strided_slice %350 {offsets = [0, 1, 0], sizes = [4, 1, 32], strides = [1, 1, 1]} : vector<4x8x32xf32> to vector<4x1x32xf32>
    %361 = vector.shape_cast %360 : vector<4x1x32xf32> to vector<4x32xf32>
    %cst_234 = arith.constant dense<0.000000e+00> : vector<4x32xf32>
    %362 = tpu.matmul %357, %352, %cst_234 {dimension_numbers = #tpu.dot_dimension_numbers<[1], [0], [0], [1], [0, 0, 1, 1], [], []>} : vector<4x32xf32>, vector<32x32xf32>, vector<4x32xf32> -> vector<4x32xf32>
    %363 = arith.addf %361, %362 : vector<4x32xf32>
    %364 = math.tanh %363 : vector<4x32xf32>
    %365 = vector.shape_cast %364 : vector<4x32xf32> to vector<4x1x32xf32>
    %c0_235 = arith.constant 0 : index
    %c1_236 = arith.constant 1 : index
    %c0_237 = arith.constant 0 : index
    %366 = vector.load %arg8[%c0_235, %c1_236, %c0_237] : memref<4x8x32xf32, #tpu.memory_space<vmem>>, vector<4x1x32xf32>
    tpu.vector_store %arg8[%c0_235, %c1_236, %c0_237], %365 {strides = array<i32>} : memref<4x8x32xf32, #tpu.memory_space<vmem>>, vector<4x1x32xf32>,
    %367 = vector.extract_strided_slice %350 {offsets = [0, 2, 0], sizes = [4, 1, 32], strides = [1, 1, 1]} : vector<4x8x32xf32> to vector<4x1x32xf32>
    %368 = vector.shape_cast %367 : vector<4x1x32xf32> to vector<4x32xf32>
    %cst_238 = arith.constant dense<0.000000e+00> : vector<4x32xf32>
    %369 = tpu.matmul %364, %352, %cst_238 {dimension_numbers = #tpu.dot_dimension_numbers<[1], [0], [0], [1], [0, 0, 1, 1], [], []>} : vector<4x32xf32>, vector<32x32xf32>, vector<4x32xf32> -> vector<4x32xf32>
    %370 = arith.addf %368, %369 : vector<4x32xf32>
    %371 = math.tanh %370 : vector<4x32xf32>
    %372 = vector.shape_cast %371 : vector<4x32xf32> to vector<4x1x32xf32>
    %c0_239 = arith.constant 0 : index
    %c2_240 = arith.constant 2 : index
    %c0_241 = arith.constant 0 : index
    %373 = vector.load %arg8[%c0_239, %c2_240, %c0_241] : memref<4x8x32xf32, #tpu.memory_space<vmem>>, vector<4x1x32xf32>
    tpu.vector_store %arg8[%c0_239, %c2_240, %c0_241], %372 {strides = array<i32>} : memref<4x8x32xf32, #tpu.memory_space<vmem>>, vector<4x1x32xf32>,
    %374 = vector.extract_strided_slice %350 {offsets = [0, 3, 0], sizes = [4, 1, 32], strides = [1, 1, 1]} : vector<4x8x32xf32> to vector<4x1x32xf32>
    %375 = vector.shape_cast %374 : vector<4x1x32xf32> to vector<4x32xf32>
    %cst_242 = arith.constant dense<0.000000e+00> : vector<4x32xf32>
    %376 = tpu.matmul %371, %352, %cst_242 {dimension_numbers = #tpu.dot_dimension_numbers<[1], [0], [0], [1], [0, 0, 1, 1], [], []>} : vector<4x32xf32>, vector<32x32xf32>, vector<4x32xf32> -> vector<4x32xf32>
    %377 = arith.addf %375, %376 : vector<4x32xf32>
    %378 = math.tanh %377 : vector<4x32xf32>
    %379 = vector.shape_cast %378 : vector<4x32xf32> to vector<4x1x32xf32>
    %c0_243 = arith.constant 0 : index
    %c3_244 = arith.constant 3 : index
    %c0_245 = arith.constant 0 : index
    %380 = vector.load %arg8[%c0_243, %c3_244, %c0_245] : memref<4x8x32xf32, #tpu.memory_space<vmem>>, vector<4x1x32xf32>
    tpu.vector_store %arg8[%c0_243, %c3_244, %c0_245], %379 {strides = array<i32>} : memref<4x8x32xf32, #tpu.memory_space<vmem>>, vector<4x1x32xf32>,
    %381 = vector.extract_strided_slice %350 {offsets = [0, 4, 0], sizes = [4, 1, 32], strides = [1, 1, 1]} : vector<4x8x32xf32> to vector<4x1x32xf32>
    %382 = vector.shape_cast %381 : vector<4x1x32xf32> to vector<4x32xf32>
    %cst_246 = arith.constant dense<0.000000e+00> : vector<4x32xf32>
    %383 = tpu.matmul %378, %352, %cst_246 {dimension_numbers = #tpu.dot_dimension_numbers<[1], [0], [0], [1], [0, 0, 1, 1], [], []>} : vector<4x32xf32>, vector<32x32xf32>, vector<4x32xf32> -> vector<4x32xf32>
    %384 = arith.addf %382, %383 : vector<4x32xf32>
    %385 = math.tanh %384 : vector<4x32xf32>
    %386 = vector.shape_cast %385 : vector<4x32xf32> to vector<4x1x32xf32>
    %c0_247 = arith.constant 0 : index
    %c4_248 = arith.constant 4 : index
    %c0_249 = arith.constant 0 : index
    %387 = vector.load %arg8[%c0_247, %c4_248, %c0_249] : memref<4x8x32xf32, #tpu.memory_space<vmem>>, vector<4x1x32xf32>
    tpu.vector_store %arg8[%c0_247, %c4_248, %c0_249], %386 {strides = array<i32>} : memref<4x8x32xf32, #tpu.memory_space<vmem>>, vector<4x1x32xf32>,
    %388 = vector.extract_strided_slice %350 {offsets = [0, 5, 0], sizes = [4, 1, 32], strides = [1, 1, 1]} : vector<4x8x32xf32> to vector<4x1x32xf32>
    %389 = vector.shape_cast %388 : vector<4x1x32xf32> to vector<4x32xf32>
    %cst_250 = arith.constant dense<0.000000e+00> : vector<4x32xf32>
    %390 = tpu.matmul %385, %352, %cst_250 {dimension_numbers = #tpu.dot_dimension_numbers<[1], [0], [0], [1], [0, 0, 1, 1], [], []>} : vector<4x32xf32>, vector<32x32xf32>, vector<4x32xf32> -> vector<4x32xf32>
    %391 = arith.addf %389, %390 : vector<4x32xf32>
    %392 = math.tanh %391 : vector<4x32xf32>
    %393 = vector.shape_cast %392 : vector<4x32xf32> to vector<4x1x32xf32>
    %c0_251 = arith.constant 0 : index
    %c5_252 = arith.constant 5 : index
    %c0_253 = arith.constant 0 : index
    %394 = vector.load %arg8[%c0_251, %c5_252, %c0_253] : memref<4x8x32xf32, #tpu.memory_space<vmem>>, vector<4x1x32xf32>
    tpu.vector_store %arg8[%c0_251, %c5_252, %c0_253], %393 {strides = array<i32>} : memref<4x8x32xf32, #tpu.memory_space<vmem>>, vector<4x1x32xf32>,
    %395 = vector.extract_strided_slice %350 {offsets = [0, 6, 0], sizes = [4, 1, 32], strides = [1, 1, 1]} : vector<4x8x32xf32> to vector<4x1x32xf32>
    %396 = vector.shape_cast %395 : vector<4x1x32xf32> to vector<4x32xf32>
    %cst_254 = arith.constant dense<0.000000e+00> : vector<4x32xf32>
    %397 = tpu.matmul %392, %352, %cst_254 {dimension_numbers = #tpu.dot_dimension_numbers<[1], [0], [0], [1], [0, 0, 1, 1], [], []>} : vector<4x32xf32>, vector<32x32xf32>, vector<4x32xf32> -> vector<4x32xf32>
    %398 = arith.addf %396, %397 : vector<4x32xf32>
    %399 = math.tanh %398 : vector<4x32xf32>
    %400 = vector.shape_cast %399 : vector<4x32xf32> to vector<4x1x32xf32>
    %c0_255 = arith.constant 0 : index
    %c6_256 = arith.constant 6 : index
    %c0_257 = arith.constant 0 : index
    %401 = vector.load %arg8[%c0_255, %c6_256, %c0_257] : memref<4x8x32xf32, #tpu.memory_space<vmem>>, vector<4x1x32xf32>
    tpu.vector_store %arg8[%c0_255, %c6_256, %c0_257], %400 {strides = array<i32>} : memref<4x8x32xf32, #tpu.memory_space<vmem>>, vector<4x1x32xf32>,
    %402 = vector.extract_strided_slice %350 {offsets = [0, 7, 0], sizes = [4, 1, 32], strides = [1, 1, 1]} : vector<4x8x32xf32> to vector<4x1x32xf32>
    %403 = vector.shape_cast %402 : vector<4x1x32xf32> to vector<4x32xf32>
    %cst_258 = arith.constant dense<0.000000e+00> : vector<4x32xf32>
    %404 = tpu.matmul %399, %352, %cst_258 {dimension_numbers = #tpu.dot_dimension_numbers<[1], [0], [0], [1], [0, 0, 1, 1], [], []>} : vector<4x32xf32>, vector<32x32xf32>, vector<4x32xf32> -> vector<4x32xf32>
    %405 = arith.addf %403, %404 : vector<4x32xf32>
    %406 = math.tanh %405 : vector<4x32xf32>
    %407 = vector.shape_cast %406 : vector<4x32xf32> to vector<4x1x32xf32>
    %c0_259 = arith.constant 0 : index
    %c7_260 = arith.constant 7 : index
    %c0_261 = arith.constant 0 : index
    %408 = vector.load %arg8[%c0_259, %c7_260, %c0_261] : memref<4x8x32xf32, #tpu.memory_space<vmem>>, vector<4x1x32xf32>
    tpu.vector_store %arg8[%c0_259, %c7_260, %c0_261], %407 {strides = array<i32>} : memref<4x8x32xf32, #tpu.memory_space<vmem>>, vector<4x1x32xf32>,
    %c5_262 = arith.constant 5 : index
    %c0_263 = arith.constant 0 : index
    %c0_264 = arith.constant 0 : index
    %409 = vector.load %arg2[%c5_262, %c0_263, %c0_264] : memref<9x32x32xf32, #tpu.memory_space<vmem>>, vector<1x32x32xf32>
    %410 = vector.shape_cast %409 : vector<1x32x32xf32> to vector<32x32xf32>
    %c0_265 = arith.constant 0 : index
    %c0_266 = arith.constant 0 : index
    %c0_267 = arith.constant 0 : index
    %411 = vector.load %arg8[%c0_265, %c0_266, %c0_267] : memref<4x8x32xf32, #tpu.memory_space<vmem>>, vector<4x8x32xf32>
    %412 = vector.shape_cast %411 : vector<4x8x32xf32> to vector<32x32xf32>
    %cst_268 = arith.constant dense<0.000000e+00> : vector<32x32xf32>
    %413 = tpu.matmul %412, %410, %cst_268 {dimension_numbers = #tpu.dot_dimension_numbers<[1], [0], [0], [1], [0, 0, 1, 1], [], []>} : vector<32x32xf32>, vector<32x32xf32>, vector<32x32xf32> -> vector<32x32xf32>
    %c6_269 = arith.constant 6 : index
    %c0_270 = arith.constant 0 : index
    %c0_271 = arith.constant 0 : index
    %414 = vector.load %arg4[%c6_269, %c0_270, %c0_271] : memref<10x1x32xf32, #tpu.memory_space<vmem>>, vector<1x1x32xf32>
    %415 = vector.shape_cast %414 : vector<1x1x32xf32> to vector<1x32xf32>
    %416 = vector.broadcast %415 : vector<1x32xf32> to vector<32x32xf32>
    %417 = arith.addf %413, %416 : vector<32x32xf32>
    %418 = vector.shape_cast %417 : vector<32x32xf32> to vector<4x8x32xf32>
    %c6_272 = arith.constant 6 : index
    %c0_273 = arith.constant 0 : index
    %c0_274 = arith.constant 0 : index
    %419 = vector.load %arg3[%c6_272, %c0_273, %c0_274] : memref<10x32x32xf32, #tpu.memory_space<vmem>>, vector<1x32x32xf32>
    %420 = vector.shape_cast %419 : vector<1x32x32xf32> to vector<32x32xf32>
    %421 = vector.extract_strided_slice %418 {offsets = [0, 0, 0], sizes = [4, 1, 32], strides = [1, 1, 1]} : vector<4x8x32xf32> to vector<4x1x32xf32>
    %422 = vector.shape_cast %421 : vector<4x1x32xf32> to vector<4x32xf32>
    %cst_275 = arith.constant dense<0.000000e+00> : vector<4x32xf32>
    %423 = tpu.matmul %338, %420, %cst_275 {dimension_numbers = #tpu.dot_dimension_numbers<[1], [0], [0], [1], [0, 0, 1, 1], [], []>} : vector<4x32xf32>, vector<32x32xf32>, vector<4x32xf32> -> vector<4x32xf32>
    %424 = arith.addf %422, %423 : vector<4x32xf32>
    %425 = math.tanh %424 : vector<4x32xf32>
    %426 = vector.shape_cast %425 : vector<4x32xf32> to vector<4x1x32xf32>
    %c0_276 = arith.constant 0 : index
    %c0_277 = arith.constant 0 : index
    %c0_278 = arith.constant 0 : index
    %427 = vector.load %arg8[%c0_276, %c0_277, %c0_278] : memref<4x8x32xf32, #tpu.memory_space<vmem>>, vector<4x1x32xf32>
    tpu.vector_store %arg8[%c0_276, %c0_277, %c0_278], %426 {strides = array<i32>} : memref<4x8x32xf32, #tpu.memory_space<vmem>>, vector<4x1x32xf32>,
    %428 = vector.extract_strided_slice %418 {offsets = [0, 1, 0], sizes = [4, 1, 32], strides = [1, 1, 1]} : vector<4x8x32xf32> to vector<4x1x32xf32>
    %429 = vector.shape_cast %428 : vector<4x1x32xf32> to vector<4x32xf32>
    %cst_279 = arith.constant dense<0.000000e+00> : vector<4x32xf32>
    %430 = tpu.matmul %425, %420, %cst_279 {dimension_numbers = #tpu.dot_dimension_numbers<[1], [0], [0], [1], [0, 0, 1, 1], [], []>} : vector<4x32xf32>, vector<32x32xf32>, vector<4x32xf32> -> vector<4x32xf32>
    %431 = arith.addf %429, %430 : vector<4x32xf32>
    %432 = math.tanh %431 : vector<4x32xf32>
    %433 = vector.shape_cast %432 : vector<4x32xf32> to vector<4x1x32xf32>
    %c0_280 = arith.constant 0 : index
    %c1_281 = arith.constant 1 : index
    %c0_282 = arith.constant 0 : index
    %434 = vector.load %arg8[%c0_280, %c1_281, %c0_282] : memref<4x8x32xf32, #tpu.memory_space<vmem>>, vector<4x1x32xf32>
    tpu.vector_store %arg8[%c0_280, %c1_281, %c0_282], %433 {strides = array<i32>} : memref<4x8x32xf32, #tpu.memory_space<vmem>>, vector<4x1x32xf32>,
    %435 = vector.extract_strided_slice %418 {offsets = [0, 2, 0], sizes = [4, 1, 32], strides = [1, 1, 1]} : vector<4x8x32xf32> to vector<4x1x32xf32>
    %436 = vector.shape_cast %435 : vector<4x1x32xf32> to vector<4x32xf32>
    %cst_283 = arith.constant dense<0.000000e+00> : vector<4x32xf32>
    %437 = tpu.matmul %432, %420, %cst_283 {dimension_numbers = #tpu.dot_dimension_numbers<[1], [0], [0], [1], [0, 0, 1, 1], [], []>} : vector<4x32xf32>, vector<32x32xf32>, vector<4x32xf32> -> vector<4x32xf32>
    %438 = arith.addf %436, %437 : vector<4x32xf32>
    %439 = math.tanh %438 : vector<4x32xf32>
    %440 = vector.shape_cast %439 : vector<4x32xf32> to vector<4x1x32xf32>
    %c0_284 = arith.constant 0 : index
    %c2_285 = arith.constant 2 : index
    %c0_286 = arith.constant 0 : index
    %441 = vector.load %arg8[%c0_284, %c2_285, %c0_286] : memref<4x8x32xf32, #tpu.memory_space<vmem>>, vector<4x1x32xf32>
    tpu.vector_store %arg8[%c0_284, %c2_285, %c0_286], %440 {strides = array<i32>} : memref<4x8x32xf32, #tpu.memory_space<vmem>>, vector<4x1x32xf32>,
    %442 = vector.extract_strided_slice %418 {offsets = [0, 3, 0], sizes = [4, 1, 32], strides = [1, 1, 1]} : vector<4x8x32xf32> to vector<4x1x32xf32>
    %443 = vector.shape_cast %442 : vector<4x1x32xf32> to vector<4x32xf32>
    %cst_287 = arith.constant dense<0.000000e+00> : vector<4x32xf32>
    %444 = tpu.matmul %439, %420, %cst_287 {dimension_numbers = #tpu.dot_dimension_numbers<[1], [0], [0], [1], [0, 0, 1, 1], [], []>} : vector<4x32xf32>, vector<32x32xf32>, vector<4x32xf32> -> vector<4x32xf32>
    %445 = arith.addf %443, %444 : vector<4x32xf32>
    %446 = math.tanh %445 : vector<4x32xf32>
    %447 = vector.shape_cast %446 : vector<4x32xf32> to vector<4x1x32xf32>
    %c0_288 = arith.constant 0 : index
    %c3_289 = arith.constant 3 : index
    %c0_290 = arith.constant 0 : index
    %448 = vector.load %arg8[%c0_288, %c3_289, %c0_290] : memref<4x8x32xf32, #tpu.memory_space<vmem>>, vector<4x1x32xf32>
    tpu.vector_store %arg8[%c0_288, %c3_289, %c0_290], %447 {strides = array<i32>} : memref<4x8x32xf32, #tpu.memory_space<vmem>>, vector<4x1x32xf32>,
    %449 = vector.extract_strided_slice %418 {offsets = [0, 4, 0], sizes = [4, 1, 32], strides = [1, 1, 1]} : vector<4x8x32xf32> to vector<4x1x32xf32>
    %450 = vector.shape_cast %449 : vector<4x1x32xf32> to vector<4x32xf32>
    %cst_291 = arith.constant dense<0.000000e+00> : vector<4x32xf32>
    %451 = tpu.matmul %446, %420, %cst_291 {dimension_numbers = #tpu.dot_dimension_numbers<[1], [0], [0], [1], [0, 0, 1, 1], [], []>} : vector<4x32xf32>, vector<32x32xf32>, vector<4x32xf32> -> vector<4x32xf32>
    %452 = arith.addf %450, %451 : vector<4x32xf32>
    %453 = math.tanh %452 : vector<4x32xf32>
    %454 = vector.shape_cast %453 : vector<4x32xf32> to vector<4x1x32xf32>
    %c0_292 = arith.constant 0 : index
    %c4_293 = arith.constant 4 : index
    %c0_294 = arith.constant 0 : index
    %455 = vector.load %arg8[%c0_292, %c4_293, %c0_294] : memref<4x8x32xf32, #tpu.memory_space<vmem>>, vector<4x1x32xf32>
    tpu.vector_store %arg8[%c0_292, %c4_293, %c0_294], %454 {strides = array<i32>} : memref<4x8x32xf32, #tpu.memory_space<vmem>>, vector<4x1x32xf32>,
    %456 = vector.extract_strided_slice %418 {offsets = [0, 5, 0], sizes = [4, 1, 32], strides = [1, 1, 1]} : vector<4x8x32xf32> to vector<4x1x32xf32>
    %457 = vector.shape_cast %456 : vector<4x1x32xf32> to vector<4x32xf32>
    %cst_295 = arith.constant dense<0.000000e+00> : vector<4x32xf32>
    %458 = tpu.matmul %453, %420, %cst_295 {dimension_numbers = #tpu.dot_dimension_numbers<[1], [0], [0], [1], [0, 0, 1, 1], [], []>} : vector<4x32xf32>, vector<32x32xf32>, vector<4x32xf32> -> vector<4x32xf32>
    %459 = arith.addf %457, %458 : vector<4x32xf32>
    %460 = math.tanh %459 : vector<4x32xf32>
    %461 = vector.shape_cast %460 : vector<4x32xf32> to vector<4x1x32xf32>
    %c0_296 = arith.constant 0 : index
    %c5_297 = arith.constant 5 : index
    %c0_298 = arith.constant 0 : index
    %462 = vector.load %arg8[%c0_296, %c5_297, %c0_298] : memref<4x8x32xf32, #tpu.memory_space<vmem>>, vector<4x1x32xf32>
    tpu.vector_store %arg8[%c0_296, %c5_297, %c0_298], %461 {strides = array<i32>} : memref<4x8x32xf32, #tpu.memory_space<vmem>>, vector<4x1x32xf32>,
    %463 = vector.extract_strided_slice %418 {offsets = [0, 6, 0], sizes = [4, 1, 32], strides = [1, 1, 1]} : vector<4x8x32xf32> to vector<4x1x32xf32>
    %464 = vector.shape_cast %463 : vector<4x1x32xf32> to vector<4x32xf32>
    %cst_299 = arith.constant dense<0.000000e+00> : vector<4x32xf32>
    %465 = tpu.matmul %460, %420, %cst_299 {dimension_numbers = #tpu.dot_dimension_numbers<[1], [0], [0], [1], [0, 0, 1, 1], [], []>} : vector<4x32xf32>, vector<32x32xf32>, vector<4x32xf32> -> vector<4x32xf32>
    %466 = arith.addf %464, %465 : vector<4x32xf32>
    %467 = math.tanh %466 : vector<4x32xf32>
    %468 = vector.shape_cast %467 : vector<4x32xf32> to vector<4x1x32xf32>
    %c0_300 = arith.constant 0 : index
    %c6_301 = arith.constant 6 : index
    %c0_302 = arith.constant 0 : index
    %469 = vector.load %arg8[%c0_300, %c6_301, %c0_302] : memref<4x8x32xf32, #tpu.memory_space<vmem>>, vector<4x1x32xf32>
    tpu.vector_store %arg8[%c0_300, %c6_301, %c0_302], %468 {strides = array<i32>} : memref<4x8x32xf32, #tpu.memory_space<vmem>>, vector<4x1x32xf32>,
    %470 = vector.extract_strided_slice %418 {offsets = [0, 7, 0], sizes = [4, 1, 32], strides = [1, 1, 1]} : vector<4x8x32xf32> to vector<4x1x32xf32>
    %471 = vector.shape_cast %470 : vector<4x1x32xf32> to vector<4x32xf32>
    %cst_303 = arith.constant dense<0.000000e+00> : vector<4x32xf32>
    %472 = tpu.matmul %467, %420, %cst_303 {dimension_numbers = #tpu.dot_dimension_numbers<[1], [0], [0], [1], [0, 0, 1, 1], [], []>} : vector<4x32xf32>, vector<32x32xf32>, vector<4x32xf32> -> vector<4x32xf32>
    %473 = arith.addf %471, %472 : vector<4x32xf32>
    %474 = math.tanh %473 : vector<4x32xf32>
    %475 = vector.shape_cast %474 : vector<4x32xf32> to vector<4x1x32xf32>
    %c0_304 = arith.constant 0 : index
    %c7_305 = arith.constant 7 : index
    %c0_306 = arith.constant 0 : index
    %476 = vector.load %arg8[%c0_304, %c7_305, %c0_306] : memref<4x8x32xf32, #tpu.memory_space<vmem>>, vector<4x1x32xf32>
    tpu.vector_store %arg8[%c0_304, %c7_305, %c0_306], %475 {strides = array<i32>} : memref<4x8x32xf32, #tpu.memory_space<vmem>>, vector<4x1x32xf32>,
    %c6_307 = arith.constant 6 : index
    %c0_308 = arith.constant 0 : index
    %c0_309 = arith.constant 0 : index
    %477 = vector.load %arg2[%c6_307, %c0_308, %c0_309] : memref<9x32x32xf32, #tpu.memory_space<vmem>>, vector<1x32x32xf32>
    %478 = vector.shape_cast %477 : vector<1x32x32xf32> to vector<32x32xf32>
    %c0_310 = arith.constant 0 : index
    %c0_311 = arith.constant 0 : index
    %c0_312 = arith.constant 0 : index
    %479 = vector.load %arg8[%c0_310, %c0_311, %c0_312] : memref<4x8x32xf32, #tpu.memory_space<vmem>>, vector<4x8x32xf32>
    %480 = vector.shape_cast %479 : vector<4x8x32xf32> to vector<32x32xf32>
    %cst_313 = arith.constant dense<0.000000e+00> : vector<32x32xf32>
    %481 = tpu.matmul %480, %478, %cst_313 {dimension_numbers = #tpu.dot_dimension_numbers<[1], [0], [0], [1], [0, 0, 1, 1], [], []>} : vector<32x32xf32>, vector<32x32xf32>, vector<32x32xf32> -> vector<32x32xf32>
    %c7_314 = arith.constant 7 : index
    %c0_315 = arith.constant 0 : index
    %c0_316 = arith.constant 0 : index
    %482 = vector.load %arg4[%c7_314, %c0_315, %c0_316] : memref<10x1x32xf32, #tpu.memory_space<vmem>>, vector<1x1x32xf32>
    %483 = vector.shape_cast %482 : vector<1x1x32xf32> to vector<1x32xf32>
    %484 = vector.broadcast %483 : vector<1x32xf32> to vector<32x32xf32>
    %485 = arith.addf %481, %484 : vector<32x32xf32>
    %486 = vector.shape_cast %485 : vector<32x32xf32> to vector<4x8x32xf32>
    %c7_317 = arith.constant 7 : index
    %c0_318 = arith.constant 0 : index
    %c0_319 = arith.constant 0 : index
    %487 = vector.load %arg3[%c7_317, %c0_318, %c0_319] : memref<10x32x32xf32, #tpu.memory_space<vmem>>, vector<1x32x32xf32>
    %488 = vector.shape_cast %487 : vector<1x32x32xf32> to vector<32x32xf32>
    %489 = vector.extract_strided_slice %486 {offsets = [0, 0, 0], sizes = [4, 1, 32], strides = [1, 1, 1]} : vector<4x8x32xf32> to vector<4x1x32xf32>
    %490 = vector.shape_cast %489 : vector<4x1x32xf32> to vector<4x32xf32>
    %cst_320 = arith.constant dense<0.000000e+00> : vector<4x32xf32>
    %491 = tpu.matmul %406, %488, %cst_320 {dimension_numbers = #tpu.dot_dimension_numbers<[1], [0], [0], [1], [0, 0, 1, 1], [], []>} : vector<4x32xf32>, vector<32x32xf32>, vector<4x32xf32> -> vector<4x32xf32>
    %492 = arith.addf %490, %491 : vector<4x32xf32>
    %493 = math.tanh %492 : vector<4x32xf32>
    %494 = vector.shape_cast %493 : vector<4x32xf32> to vector<4x1x32xf32>
    %c0_321 = arith.constant 0 : index
    %c0_322 = arith.constant 0 : index
    %c0_323 = arith.constant 0 : index
    %495 = vector.load %arg8[%c0_321, %c0_322, %c0_323] : memref<4x8x32xf32, #tpu.memory_space<vmem>>, vector<4x1x32xf32>
    tpu.vector_store %arg8[%c0_321, %c0_322, %c0_323], %494 {strides = array<i32>} : memref<4x8x32xf32, #tpu.memory_space<vmem>>, vector<4x1x32xf32>,
    %496 = vector.extract_strided_slice %486 {offsets = [0, 1, 0], sizes = [4, 1, 32], strides = [1, 1, 1]} : vector<4x8x32xf32> to vector<4x1x32xf32>
    %497 = vector.shape_cast %496 : vector<4x1x32xf32> to vector<4x32xf32>
    %cst_324 = arith.constant dense<0.000000e+00> : vector<4x32xf32>
    %498 = tpu.matmul %493, %488, %cst_324 {dimension_numbers = #tpu.dot_dimension_numbers<[1], [0], [0], [1], [0, 0, 1, 1], [], []>} : vector<4x32xf32>, vector<32x32xf32>, vector<4x32xf32> -> vector<4x32xf32>
    %499 = arith.addf %497, %498 : vector<4x32xf32>
    %500 = math.tanh %499 : vector<4x32xf32>
    %501 = vector.shape_cast %500 : vector<4x32xf32> to vector<4x1x32xf32>
    %c0_325 = arith.constant 0 : index
    %c1_326 = arith.constant 1 : index
    %c0_327 = arith.constant 0 : index
    %502 = vector.load %arg8[%c0_325, %c1_326, %c0_327] : memref<4x8x32xf32, #tpu.memory_space<vmem>>, vector<4x1x32xf32>
    tpu.vector_store %arg8[%c0_325, %c1_326, %c0_327], %501 {strides = array<i32>} : memref<4x8x32xf32, #tpu.memory_space<vmem>>, vector<4x1x32xf32>,
    %503 = vector.extract_strided_slice %486 {offsets = [0, 2, 0], sizes = [4, 1, 32], strides = [1, 1, 1]} : vector<4x8x32xf32> to vector<4x1x32xf32>
    %504 = vector.shape_cast %503 : vector<4x1x32xf32> to vector<4x32xf32>
    %cst_328 = arith.constant dense<0.000000e+00> : vector<4x32xf32>
    %505 = tpu.matmul %500, %488, %cst_328 {dimension_numbers = #tpu.dot_dimension_numbers<[1], [0], [0], [1], [0, 0, 1, 1], [], []>} : vector<4x32xf32>, vector<32x32xf32>, vector<4x32xf32> -> vector<4x32xf32>
    %506 = arith.addf %504, %505 : vector<4x32xf32>
    %507 = math.tanh %506 : vector<4x32xf32>
    %508 = vector.shape_cast %507 : vector<4x32xf32> to vector<4x1x32xf32>
    %c0_329 = arith.constant 0 : index
    %c2_330 = arith.constant 2 : index
    %c0_331 = arith.constant 0 : index
    %509 = vector.load %arg8[%c0_329, %c2_330, %c0_331] : memref<4x8x32xf32, #tpu.memory_space<vmem>>, vector<4x1x32xf32>
    tpu.vector_store %arg8[%c0_329, %c2_330, %c0_331], %508 {strides = array<i32>} : memref<4x8x32xf32, #tpu.memory_space<vmem>>, vector<4x1x32xf32>,
    %510 = vector.extract_strided_slice %486 {offsets = [0, 3, 0], sizes = [4, 1, 32], strides = [1, 1, 1]} : vector<4x8x32xf32> to vector<4x1x32xf32>
    %511 = vector.shape_cast %510 : vector<4x1x32xf32> to vector<4x32xf32>
    %cst_332 = arith.constant dense<0.000000e+00> : vector<4x32xf32>
    %512 = tpu.matmul %507, %488, %cst_332 {dimension_numbers = #tpu.dot_dimension_numbers<[1], [0], [0], [1], [0, 0, 1, 1], [], []>} : vector<4x32xf32>, vector<32x32xf32>, vector<4x32xf32> -> vector<4x32xf32>
    %513 = arith.addf %511, %512 : vector<4x32xf32>
    %514 = math.tanh %513 : vector<4x32xf32>
    %515 = vector.shape_cast %514 : vector<4x32xf32> to vector<4x1x32xf32>
    %c0_333 = arith.constant 0 : index
    %c3_334 = arith.constant 3 : index
    %c0_335 = arith.constant 0 : index
    %516 = vector.load %arg8[%c0_333, %c3_334, %c0_335] : memref<4x8x32xf32, #tpu.memory_space<vmem>>, vector<4x1x32xf32>
    tpu.vector_store %arg8[%c0_333, %c3_334, %c0_335], %515 {strides = array<i32>} : memref<4x8x32xf32, #tpu.memory_space<vmem>>, vector<4x1x32xf32>,
    %517 = vector.extract_strided_slice %486 {offsets = [0, 4, 0], sizes = [4, 1, 32], strides = [1, 1, 1]} : vector<4x8x32xf32> to vector<4x1x32xf32>
    %518 = vector.shape_cast %517 : vector<4x1x32xf32> to vector<4x32xf32>
    %cst_336 = arith.constant dense<0.000000e+00> : vector<4x32xf32>
    %519 = tpu.matmul %514, %488, %cst_336 {dimension_numbers = #tpu.dot_dimension_numbers<[1], [0], [0], [1], [0, 0, 1, 1], [], []>} : vector<4x32xf32>, vector<32x32xf32>, vector<4x32xf32> -> vector<4x32xf32>
    %520 = arith.addf %518, %519 : vector<4x32xf32>
    %521 = math.tanh %520 : vector<4x32xf32>
    %522 = vector.shape_cast %521 : vector<4x32xf32> to vector<4x1x32xf32>
    %c0_337 = arith.constant 0 : index
    %c4_338 = arith.constant 4 : index
    %c0_339 = arith.constant 0 : index
    %523 = vector.load %arg8[%c0_337, %c4_338, %c0_339] : memref<4x8x32xf32, #tpu.memory_space<vmem>>, vector<4x1x32xf32>
    tpu.vector_store %arg8[%c0_337, %c4_338, %c0_339], %522 {strides = array<i32>} : memref<4x8x32xf32, #tpu.memory_space<vmem>>, vector<4x1x32xf32>,
    %524 = vector.extract_strided_slice %486 {offsets = [0, 5, 0], sizes = [4, 1, 32], strides = [1, 1, 1]} : vector<4x8x32xf32> to vector<4x1x32xf32>
    %525 = vector.shape_cast %524 : vector<4x1x32xf32> to vector<4x32xf32>
    %cst_340 = arith.constant dense<0.000000e+00> : vector<4x32xf32>
    %526 = tpu.matmul %521, %488, %cst_340 {dimension_numbers = #tpu.dot_dimension_numbers<[1], [0], [0], [1], [0, 0, 1, 1], [], []>} : vector<4x32xf32>, vector<32x32xf32>, vector<4x32xf32> -> vector<4x32xf32>
    %527 = arith.addf %525, %526 : vector<4x32xf32>
    %528 = math.tanh %527 : vector<4x32xf32>
    %529 = vector.shape_cast %528 : vector<4x32xf32> to vector<4x1x32xf32>
    %c0_341 = arith.constant 0 : index
    %c5_342 = arith.constant 5 : index
    %c0_343 = arith.constant 0 : index
    %530 = vector.load %arg8[%c0_341, %c5_342, %c0_343] : memref<4x8x32xf32, #tpu.memory_space<vmem>>, vector<4x1x32xf32>
    tpu.vector_store %arg8[%c0_341, %c5_342, %c0_343], %529 {strides = array<i32>} : memref<4x8x32xf32, #tpu.memory_space<vmem>>, vector<4x1x32xf32>,
    %531 = vector.extract_strided_slice %486 {offsets = [0, 6, 0], sizes = [4, 1, 32], strides = [1, 1, 1]} : vector<4x8x32xf32> to vector<4x1x32xf32>
    %532 = vector.shape_cast %531 : vector<4x1x32xf32> to vector<4x32xf32>
    %cst_344 = arith.constant dense<0.000000e+00> : vector<4x32xf32>
    %533 = tpu.matmul %528, %488, %cst_344 {dimension_numbers = #tpu.dot_dimension_numbers<[1], [0], [0], [1], [0, 0, 1, 1], [], []>} : vector<4x32xf32>, vector<32x32xf32>, vector<4x32xf32> -> vector<4x32xf32>
    %534 = arith.addf %532, %533 : vector<4x32xf32>
    %535 = math.tanh %534 : vector<4x32xf32>
    %536 = vector.shape_cast %535 : vector<4x32xf32> to vector<4x1x32xf32>
    %c0_345 = arith.constant 0 : index
    %c6_346 = arith.constant 6 : index
    %c0_347 = arith.constant 0 : index
    %537 = vector.load %arg8[%c0_345, %c6_346, %c0_347] : memref<4x8x32xf32, #tpu.memory_space<vmem>>, vector<4x1x32xf32>
    tpu.vector_store %arg8[%c0_345, %c6_346, %c0_347], %536 {strides = array<i32>} : memref<4x8x32xf32, #tpu.memory_space<vmem>>, vector<4x1x32xf32>,
    %538 = vector.extract_strided_slice %486 {offsets = [0, 7, 0], sizes = [4, 1, 32], strides = [1, 1, 1]} : vector<4x8x32xf32> to vector<4x1x32xf32>
    %539 = vector.shape_cast %538 : vector<4x1x32xf32> to vector<4x32xf32>
    %cst_348 = arith.constant dense<0.000000e+00> : vector<4x32xf32>
    %540 = tpu.matmul %535, %488, %cst_348 {dimension_numbers = #tpu.dot_dimension_numbers<[1], [0], [0], [1], [0, 0, 1, 1], [], []>} : vector<4x32xf32>, vector<32x32xf32>, vector<4x32xf32> -> vector<4x32xf32>
    %541 = arith.addf %539, %540 : vector<4x32xf32>
    %542 = math.tanh %541 : vector<4x32xf32>
    %543 = vector.shape_cast %542 : vector<4x32xf32> to vector<4x1x32xf32>
    %c0_349 = arith.constant 0 : index
    %c7_350 = arith.constant 7 : index
    %c0_351 = arith.constant 0 : index
    %544 = vector.load %arg8[%c0_349, %c7_350, %c0_351] : memref<4x8x32xf32, #tpu.memory_space<vmem>>, vector<4x1x32xf32>
    tpu.vector_store %arg8[%c0_349, %c7_350, %c0_351], %543 {strides = array<i32>} : memref<4x8x32xf32, #tpu.memory_space<vmem>>, vector<4x1x32xf32>,
    %c7_352 = arith.constant 7 : index
    %c0_353 = arith.constant 0 : index
    %c0_354 = arith.constant 0 : index
    %545 = vector.load %arg2[%c7_352, %c0_353, %c0_354] : memref<9x32x32xf32, #tpu.memory_space<vmem>>, vector<1x32x32xf32>
    %546 = vector.shape_cast %545 : vector<1x32x32xf32> to vector<32x32xf32>
    %c0_355 = arith.constant 0 : index
    %c0_356 = arith.constant 0 : index
    %c0_357 = arith.constant 0 : index
    %547 = vector.load %arg8[%c0_355, %c0_356, %c0_357] : memref<4x8x32xf32, #tpu.memory_space<vmem>>, vector<4x8x32xf32>
    %548 = vector.shape_cast %547 : vector<4x8x32xf32> to vector<32x32xf32>
    %cst_358 = arith.constant dense<0.000000e+00> : vector<32x32xf32>
    %549 = tpu.matmul %548, %546, %cst_358 {dimension_numbers = #tpu.dot_dimension_numbers<[1], [0], [0], [1], [0, 0, 1, 1], [], []>} : vector<32x32xf32>, vector<32x32xf32>, vector<32x32xf32> -> vector<32x32xf32>
    %c8 = arith.constant 8 : index
    %c0_359 = arith.constant 0 : index
    %c0_360 = arith.constant 0 : index
    %550 = vector.load %arg4[%c8, %c0_359, %c0_360] : memref<10x1x32xf32, #tpu.memory_space<vmem>>, vector<1x1x32xf32>
    %551 = vector.shape_cast %550 : vector<1x1x32xf32> to vector<1x32xf32>
    %552 = vector.broadcast %551 : vector<1x32xf32> to vector<32x32xf32>
    %553 = arith.addf %549, %552 : vector<32x32xf32>
    %554 = vector.shape_cast %553 : vector<32x32xf32> to vector<4x8x32xf32>
    %c8_361 = arith.constant 8 : index
    %c0_362 = arith.constant 0 : index
    %c0_363 = arith.constant 0 : index
    %555 = vector.load %arg3[%c8_361, %c0_362, %c0_363] : memref<10x32x32xf32, #tpu.memory_space<vmem>>, vector<1x32x32xf32>
    %556 = vector.shape_cast %555 : vector<1x32x32xf32> to vector<32x32xf32>
    %557 = vector.extract_strided_slice %554 {offsets = [0, 0, 0], sizes = [4, 1, 32], strides = [1, 1, 1]} : vector<4x8x32xf32> to vector<4x1x32xf32>
    %558 = vector.shape_cast %557 : vector<4x1x32xf32> to vector<4x32xf32>
    %cst_364 = arith.constant dense<0.000000e+00> : vector<4x32xf32>
    %559 = tpu.matmul %474, %556, %cst_364 {dimension_numbers = #tpu.dot_dimension_numbers<[1], [0], [0], [1], [0, 0, 1, 1], [], []>} : vector<4x32xf32>, vector<32x32xf32>, vector<4x32xf32> -> vector<4x32xf32>
    %560 = arith.addf %558, %559 : vector<4x32xf32>
    %561 = math.tanh %560 : vector<4x32xf32>
    %562 = vector.shape_cast %561 : vector<4x32xf32> to vector<4x1x32xf32>
    %c0_365 = arith.constant 0 : index
    %c0_366 = arith.constant 0 : index
    %c0_367 = arith.constant 0 : index
    %563 = vector.load %arg8[%c0_365, %c0_366, %c0_367] : memref<4x8x32xf32, #tpu.memory_space<vmem>>, vector<4x1x32xf32>
    tpu.vector_store %arg8[%c0_365, %c0_366, %c0_367], %562 {strides = array<i32>} : memref<4x8x32xf32, #tpu.memory_space<vmem>>, vector<4x1x32xf32>,
    %564 = vector.extract_strided_slice %554 {offsets = [0, 1, 0], sizes = [4, 1, 32], strides = [1, 1, 1]} : vector<4x8x32xf32> to vector<4x1x32xf32>
    %565 = vector.shape_cast %564 : vector<4x1x32xf32> to vector<4x32xf32>
    %cst_368 = arith.constant dense<0.000000e+00> : vector<4x32xf32>
    %566 = tpu.matmul %561, %556, %cst_368 {dimension_numbers = #tpu.dot_dimension_numbers<[1], [0], [0], [1], [0, 0, 1, 1], [], []>} : vector<4x32xf32>, vector<32x32xf32>, vector<4x32xf32> -> vector<4x32xf32>
    %567 = arith.addf %565, %566 : vector<4x32xf32>
    %568 = math.tanh %567 : vector<4x32xf32>
    %569 = vector.shape_cast %568 : vector<4x32xf32> to vector<4x1x32xf32>
    %c0_369 = arith.constant 0 : index
    %c1_370 = arith.constant 1 : index
    %c0_371 = arith.constant 0 : index
    %570 = vector.load %arg8[%c0_369, %c1_370, %c0_371] : memref<4x8x32xf32, #tpu.memory_space<vmem>>, vector<4x1x32xf32>
    tpu.vector_store %arg8[%c0_369, %c1_370, %c0_371], %569 {strides = array<i32>} : memref<4x8x32xf32, #tpu.memory_space<vmem>>, vector<4x1x32xf32>,
    %571 = vector.extract_strided_slice %554 {offsets = [0, 2, 0], sizes = [4, 1, 32], strides = [1, 1, 1]} : vector<4x8x32xf32> to vector<4x1x32xf32>
    %572 = vector.shape_cast %571 : vector<4x1x32xf32> to vector<4x32xf32>
    %cst_372 = arith.constant dense<0.000000e+00> : vector<4x32xf32>
    %573 = tpu.matmul %568, %556, %cst_372 {dimension_numbers = #tpu.dot_dimension_numbers<[1], [0], [0], [1], [0, 0, 1, 1], [], []>} : vector<4x32xf32>, vector<32x32xf32>, vector<4x32xf32> -> vector<4x32xf32>
    %574 = arith.addf %572, %573 : vector<4x32xf32>
    %575 = math.tanh %574 : vector<4x32xf32>
    %576 = vector.shape_cast %575 : vector<4x32xf32> to vector<4x1x32xf32>
    %c0_373 = arith.constant 0 : index
    %c2_374 = arith.constant 2 : index
    %c0_375 = arith.constant 0 : index
    %577 = vector.load %arg8[%c0_373, %c2_374, %c0_375] : memref<4x8x32xf32, #tpu.memory_space<vmem>>, vector<4x1x32xf32>
    tpu.vector_store %arg8[%c0_373, %c2_374, %c0_375], %576 {strides = array<i32>} : memref<4x8x32xf32, #tpu.memory_space<vmem>>, vector<4x1x32xf32>,
    %578 = vector.extract_strided_slice %554 {offsets = [0, 3, 0], sizes = [4, 1, 32], strides = [1, 1, 1]} : vector<4x8x32xf32> to vector<4x1x32xf32>
    %579 = vector.shape_cast %578 : vector<4x1x32xf32> to vector<4x32xf32>
    %cst_376 = arith.constant dense<0.000000e+00> : vector<4x32xf32>
    %580 = tpu.matmul %575, %556, %cst_376 {dimension_numbers = #tpu.dot_dimension_numbers<[1], [0], [0], [1], [0, 0, 1, 1], [], []>} : vector<4x32xf32>, vector<32x32xf32>, vector<4x32xf32> -> vector<4x32xf32>
    %581 = arith.addf %579, %580 : vector<4x32xf32>
    %582 = math.tanh %581 : vector<4x32xf32>
    %583 = vector.shape_cast %582 : vector<4x32xf32> to vector<4x1x32xf32>
    %c0_377 = arith.constant 0 : index
    %c3_378 = arith.constant 3 : index
    %c0_379 = arith.constant 0 : index
    %584 = vector.load %arg8[%c0_377, %c3_378, %c0_379] : memref<4x8x32xf32, #tpu.memory_space<vmem>>, vector<4x1x32xf32>
    tpu.vector_store %arg8[%c0_377, %c3_378, %c0_379], %583 {strides = array<i32>} : memref<4x8x32xf32, #tpu.memory_space<vmem>>, vector<4x1x32xf32>,
    %585 = vector.extract_strided_slice %554 {offsets = [0, 4, 0], sizes = [4, 1, 32], strides = [1, 1, 1]} : vector<4x8x32xf32> to vector<4x1x32xf32>
    %586 = vector.shape_cast %585 : vector<4x1x32xf32> to vector<4x32xf32>
    %cst_380 = arith.constant dense<0.000000e+00> : vector<4x32xf32>
    %587 = tpu.matmul %582, %556, %cst_380 {dimension_numbers = #tpu.dot_dimension_numbers<[1], [0], [0], [1], [0, 0, 1, 1], [], []>} : vector<4x32xf32>, vector<32x32xf32>, vector<4x32xf32> -> vector<4x32xf32>
    %588 = arith.addf %586, %587 : vector<4x32xf32>
    %589 = math.tanh %588 : vector<4x32xf32>
    %590 = vector.shape_cast %589 : vector<4x32xf32> to vector<4x1x32xf32>
    %c0_381 = arith.constant 0 : index
    %c4_382 = arith.constant 4 : index
    %c0_383 = arith.constant 0 : index
    %591 = vector.load %arg8[%c0_381, %c4_382, %c0_383] : memref<4x8x32xf32, #tpu.memory_space<vmem>>, vector<4x1x32xf32>
    tpu.vector_store %arg8[%c0_381, %c4_382, %c0_383], %590 {strides = array<i32>} : memref<4x8x32xf32, #tpu.memory_space<vmem>>, vector<4x1x32xf32>,
    %592 = vector.extract_strided_slice %554 {offsets = [0, 5, 0], sizes = [4, 1, 32], strides = [1, 1, 1]} : vector<4x8x32xf32> to vector<4x1x32xf32>
    %593 = vector.shape_cast %592 : vector<4x1x32xf32> to vector<4x32xf32>
    %cst_384 = arith.constant dense<0.000000e+00> : vector<4x32xf32>
    %594 = tpu.matmul %589, %556, %cst_384 {dimension_numbers = #tpu.dot_dimension_numbers<[1], [0], [0], [1], [0, 0, 1, 1], [], []>} : vector<4x32xf32>, vector<32x32xf32>, vector<4x32xf32> -> vector<4x32xf32>
    %595 = arith.addf %593, %594 : vector<4x32xf32>
    %596 = math.tanh %595 : vector<4x32xf32>
    %597 = vector.shape_cast %596 : vector<4x32xf32> to vector<4x1x32xf32>
    %c0_385 = arith.constant 0 : index
    %c5_386 = arith.constant 5 : index
    %c0_387 = arith.constant 0 : index
    %598 = vector.load %arg8[%c0_385, %c5_386, %c0_387] : memref<4x8x32xf32, #tpu.memory_space<vmem>>, vector<4x1x32xf32>
    tpu.vector_store %arg8[%c0_385, %c5_386, %c0_387], %597 {strides = array<i32>} : memref<4x8x32xf32, #tpu.memory_space<vmem>>, vector<4x1x32xf32>,
    %599 = vector.extract_strided_slice %554 {offsets = [0, 6, 0], sizes = [4, 1, 32], strides = [1, 1, 1]} : vector<4x8x32xf32> to vector<4x1x32xf32>
    %600 = vector.shape_cast %599 : vector<4x1x32xf32> to vector<4x32xf32>
    %cst_388 = arith.constant dense<0.000000e+00> : vector<4x32xf32>
    %601 = tpu.matmul %596, %556, %cst_388 {dimension_numbers = #tpu.dot_dimension_numbers<[1], [0], [0], [1], [0, 0, 1, 1], [], []>} : vector<4x32xf32>, vector<32x32xf32>, vector<4x32xf32> -> vector<4x32xf32>
    %602 = arith.addf %600, %601 : vector<4x32xf32>
    %603 = math.tanh %602 : vector<4x32xf32>
    %604 = vector.shape_cast %603 : vector<4x32xf32> to vector<4x1x32xf32>
    %c0_389 = arith.constant 0 : index
    %c6_390 = arith.constant 6 : index
    %c0_391 = arith.constant 0 : index
    %605 = vector.load %arg8[%c0_389, %c6_390, %c0_391] : memref<4x8x32xf32, #tpu.memory_space<vmem>>, vector<4x1x32xf32>
    tpu.vector_store %arg8[%c0_389, %c6_390, %c0_391], %604 {strides = array<i32>} : memref<4x8x32xf32, #tpu.memory_space<vmem>>, vector<4x1x32xf32>,
    %606 = vector.extract_strided_slice %554 {offsets = [0, 7, 0], sizes = [4, 1, 32], strides = [1, 1, 1]} : vector<4x8x32xf32> to vector<4x1x32xf32>
    %607 = vector.shape_cast %606 : vector<4x1x32xf32> to vector<4x32xf32>
    %cst_392 = arith.constant dense<0.000000e+00> : vector<4x32xf32>
    %608 = tpu.matmul %603, %556, %cst_392 {dimension_numbers = #tpu.dot_dimension_numbers<[1], [0], [0], [1], [0, 0, 1, 1], [], []>} : vector<4x32xf32>, vector<32x32xf32>, vector<4x32xf32> -> vector<4x32xf32>
    %609 = arith.addf %607, %608 : vector<4x32xf32>
    %610 = math.tanh %609 : vector<4x32xf32>
    %611 = vector.shape_cast %610 : vector<4x32xf32> to vector<4x1x32xf32>
    %c0_393 = arith.constant 0 : index
    %c7_394 = arith.constant 7 : index
    %c0_395 = arith.constant 0 : index
    %612 = vector.load %arg8[%c0_393, %c7_394, %c0_395] : memref<4x8x32xf32, #tpu.memory_space<vmem>>, vector<4x1x32xf32>
    tpu.vector_store %arg8[%c0_393, %c7_394, %c0_395], %611 {strides = array<i32>} : memref<4x8x32xf32, #tpu.memory_space<vmem>>, vector<4x1x32xf32>,
    %c8_396 = arith.constant 8 : index
    %c0_397 = arith.constant 0 : index
    %c0_398 = arith.constant 0 : index
    %613 = vector.load %arg2[%c8_396, %c0_397, %c0_398] : memref<9x32x32xf32, #tpu.memory_space<vmem>>, vector<1x32x32xf32>
    %614 = vector.shape_cast %613 : vector<1x32x32xf32> to vector<32x32xf32>
    %c0_399 = arith.constant 0 : index
    %c0_400 = arith.constant 0 : index
    %c0_401 = arith.constant 0 : index
    %615 = vector.load %arg8[%c0_399, %c0_400, %c0_401] : memref<4x8x32xf32, #tpu.memory_space<vmem>>, vector<4x8x32xf32>
    %616 = vector.shape_cast %615 : vector<4x8x32xf32> to vector<32x32xf32>
    %cst_402 = arith.constant dense<0.000000e+00> : vector<32x32xf32>
    %617 = tpu.matmul %616, %614, %cst_402 {dimension_numbers = #tpu.dot_dimension_numbers<[1], [0], [0], [1], [0, 0, 1, 1], [], []>} : vector<32x32xf32>, vector<32x32xf32>, vector<32x32xf32> -> vector<32x32xf32>
    %c9 = arith.constant 9 : index
    %c0_403 = arith.constant 0 : index
    %c0_404 = arith.constant 0 : index
    %618 = vector.load %arg4[%c9, %c0_403, %c0_404] : memref<10x1x32xf32, #tpu.memory_space<vmem>>, vector<1x1x32xf32>
    %619 = vector.shape_cast %618 : vector<1x1x32xf32> to vector<1x32xf32>
    %620 = vector.broadcast %619 : vector<1x32xf32> to vector<32x32xf32>
    %621 = arith.addf %617, %620 : vector<32x32xf32>
    %622 = vector.shape_cast %621 : vector<32x32xf32> to vector<4x8x32xf32>
    %c9_405 = arith.constant 9 : index
    %c0_406 = arith.constant 0 : index
    %c0_407 = arith.constant 0 : index
    %623 = vector.load %arg3[%c9_405, %c0_406, %c0_407] : memref<10x32x32xf32, #tpu.memory_space<vmem>>, vector<1x32x32xf32>
    %624 = vector.shape_cast %623 : vector<1x32x32xf32> to vector<32x32xf32>
    %625 = vector.extract_strided_slice %622 {offsets = [0, 0, 0], sizes = [4, 1, 32], strides = [1, 1, 1]} : vector<4x8x32xf32> to vector<4x1x32xf32>
    %626 = vector.shape_cast %625 : vector<4x1x32xf32> to vector<4x32xf32>
    %cst_408 = arith.constant dense<0.000000e+00> : vector<4x32xf32>
    %627 = tpu.matmul %542, %624, %cst_408 {dimension_numbers = #tpu.dot_dimension_numbers<[1], [0], [0], [1], [0, 0, 1, 1], [], []>} : vector<4x32xf32>, vector<32x32xf32>, vector<4x32xf32> -> vector<4x32xf32>
    %628 = arith.addf %626, %627 : vector<4x32xf32>
    %629 = math.tanh %628 : vector<4x32xf32>
    %630 = vector.shape_cast %629 : vector<4x32xf32> to vector<4x1x32xf32>
    %c0_409 = arith.constant 0 : index
    %c0_410 = arith.constant 0 : index
    %c0_411 = arith.constant 0 : index
    %631 = vector.load %arg8[%c0_409, %c0_410, %c0_411] : memref<4x8x32xf32, #tpu.memory_space<vmem>>, vector<4x1x32xf32>
    tpu.vector_store %arg8[%c0_409, %c0_410, %c0_411], %630 {strides = array<i32>} : memref<4x8x32xf32, #tpu.memory_space<vmem>>, vector<4x1x32xf32>,
    %632 = vector.extract_strided_slice %622 {offsets = [0, 1, 0], sizes = [4, 1, 32], strides = [1, 1, 1]} : vector<4x8x32xf32> to vector<4x1x32xf32>
    %633 = vector.shape_cast %632 : vector<4x1x32xf32> to vector<4x32xf32>
    %cst_412 = arith.constant dense<0.000000e+00> : vector<4x32xf32>
    %634 = tpu.matmul %629, %624, %cst_412 {dimension_numbers = #tpu.dot_dimension_numbers<[1], [0], [0], [1], [0, 0, 1, 1], [], []>} : vector<4x32xf32>, vector<32x32xf32>, vector<4x32xf32> -> vector<4x32xf32>
    %635 = arith.addf %633, %634 : vector<4x32xf32>
    %636 = math.tanh %635 : vector<4x32xf32>
    %637 = vector.shape_cast %636 : vector<4x32xf32> to vector<4x1x32xf32>
    %c0_413 = arith.constant 0 : index
    %c1_414 = arith.constant 1 : index
    %c0_415 = arith.constant 0 : index
    %638 = vector.load %arg8[%c0_413, %c1_414, %c0_415] : memref<4x8x32xf32, #tpu.memory_space<vmem>>, vector<4x1x32xf32>
    tpu.vector_store %arg8[%c0_413, %c1_414, %c0_415], %637 {strides = array<i32>} : memref<4x8x32xf32, #tpu.memory_space<vmem>>, vector<4x1x32xf32>,
    %639 = vector.extract_strided_slice %622 {offsets = [0, 2, 0], sizes = [4, 1, 32], strides = [1, 1, 1]} : vector<4x8x32xf32> to vector<4x1x32xf32>
    %640 = vector.shape_cast %639 : vector<4x1x32xf32> to vector<4x32xf32>
    %cst_416 = arith.constant dense<0.000000e+00> : vector<4x32xf32>
    %641 = tpu.matmul %636, %624, %cst_416 {dimension_numbers = #tpu.dot_dimension_numbers<[1], [0], [0], [1], [0, 0, 1, 1], [], []>} : vector<4x32xf32>, vector<32x32xf32>, vector<4x32xf32> -> vector<4x32xf32>
    %642 = arith.addf %640, %641 : vector<4x32xf32>
    %643 = math.tanh %642 : vector<4x32xf32>
    %644 = vector.shape_cast %643 : vector<4x32xf32> to vector<4x1x32xf32>
    %c0_417 = arith.constant 0 : index
    %c2_418 = arith.constant 2 : index
    %c0_419 = arith.constant 0 : index
    %645 = vector.load %arg8[%c0_417, %c2_418, %c0_419] : memref<4x8x32xf32, #tpu.memory_space<vmem>>, vector<4x1x32xf32>
    tpu.vector_store %arg8[%c0_417, %c2_418, %c0_419], %644 {strides = array<i32>} : memref<4x8x32xf32, #tpu.memory_space<vmem>>, vector<4x1x32xf32>,
    %646 = vector.extract_strided_slice %622 {offsets = [0, 3, 0], sizes = [4, 1, 32], strides = [1, 1, 1]} : vector<4x8x32xf32> to vector<4x1x32xf32>
    %647 = vector.shape_cast %646 : vector<4x1x32xf32> to vector<4x32xf32>
    %cst_420 = arith.constant dense<0.000000e+00> : vector<4x32xf32>
    %648 = tpu.matmul %643, %624, %cst_420 {dimension_numbers = #tpu.dot_dimension_numbers<[1], [0], [0], [1], [0, 0, 1, 1], [], []>} : vector<4x32xf32>, vector<32x32xf32>, vector<4x32xf32> -> vector<4x32xf32>
    %649 = arith.addf %647, %648 : vector<4x32xf32>
    %650 = math.tanh %649 : vector<4x32xf32>
    %651 = vector.shape_cast %650 : vector<4x32xf32> to vector<4x1x32xf32>
    %c0_421 = arith.constant 0 : index
    %c3_422 = arith.constant 3 : index
    %c0_423 = arith.constant 0 : index
    %652 = vector.load %arg8[%c0_421, %c3_422, %c0_423] : memref<4x8x32xf32, #tpu.memory_space<vmem>>, vector<4x1x32xf32>
    tpu.vector_store %arg8[%c0_421, %c3_422, %c0_423], %651 {strides = array<i32>} : memref<4x8x32xf32, #tpu.memory_space<vmem>>, vector<4x1x32xf32>,
    %653 = vector.extract_strided_slice %622 {offsets = [0, 4, 0], sizes = [4, 1, 32], strides = [1, 1, 1]} : vector<4x8x32xf32> to vector<4x1x32xf32>
    %654 = vector.shape_cast %653 : vector<4x1x32xf32> to vector<4x32xf32>
    %cst_424 = arith.constant dense<0.000000e+00> : vector<4x32xf32>
    %655 = tpu.matmul %650, %624, %cst_424 {dimension_numbers = #tpu.dot_dimension_numbers<[1], [0], [0], [1], [0, 0, 1, 1], [], []>} : vector<4x32xf32>, vector<32x32xf32>, vector<4x32xf32> -> vector<4x32xf32>
    %656 = arith.addf %654, %655 : vector<4x32xf32>
    %657 = math.tanh %656 : vector<4x32xf32>
    %658 = vector.shape_cast %657 : vector<4x32xf32> to vector<4x1x32xf32>
    %c0_425 = arith.constant 0 : index
    %c4_426 = arith.constant 4 : index
    %c0_427 = arith.constant 0 : index
    %659 = vector.load %arg8[%c0_425, %c4_426, %c0_427] : memref<4x8x32xf32, #tpu.memory_space<vmem>>, vector<4x1x32xf32>
    tpu.vector_store %arg8[%c0_425, %c4_426, %c0_427], %658 {strides = array<i32>} : memref<4x8x32xf32, #tpu.memory_space<vmem>>, vector<4x1x32xf32>,
    %660 = vector.extract_strided_slice %622 {offsets = [0, 5, 0], sizes = [4, 1, 32], strides = [1, 1, 1]} : vector<4x8x32xf32> to vector<4x1x32xf32>
    %661 = vector.shape_cast %660 : vector<4x1x32xf32> to vector<4x32xf32>
    %cst_428 = arith.constant dense<0.000000e+00> : vector<4x32xf32>
    %662 = tpu.matmul %657, %624, %cst_428 {dimension_numbers = #tpu.dot_dimension_numbers<[1], [0], [0], [1], [0, 0, 1, 1], [], []>} : vector<4x32xf32>, vector<32x32xf32>, vector<4x32xf32> -> vector<4x32xf32>
    %663 = arith.addf %661, %662 : vector<4x32xf32>
    %664 = math.tanh %663 : vector<4x32xf32>
    %665 = vector.shape_cast %664 : vector<4x32xf32> to vector<4x1x32xf32>
    %c0_429 = arith.constant 0 : index
    %c5_430 = arith.constant 5 : index
    %c0_431 = arith.constant 0 : index
    %666 = vector.load %arg8[%c0_429, %c5_430, %c0_431] : memref<4x8x32xf32, #tpu.memory_space<vmem>>, vector<4x1x32xf32>
    tpu.vector_store %arg8[%c0_429, %c5_430, %c0_431], %665 {strides = array<i32>} : memref<4x8x32xf32, #tpu.memory_space<vmem>>, vector<4x1x32xf32>,
    %667 = vector.extract_strided_slice %622 {offsets = [0, 6, 0], sizes = [4, 1, 32], strides = [1, 1, 1]} : vector<4x8x32xf32> to vector<4x1x32xf32>
    %668 = vector.shape_cast %667 : vector<4x1x32xf32> to vector<4x32xf32>
    %cst_432 = arith.constant dense<0.000000e+00> : vector<4x32xf32>
    %669 = tpu.matmul %664, %624, %cst_432 {dimension_numbers = #tpu.dot_dimension_numbers<[1], [0], [0], [1], [0, 0, 1, 1], [], []>} : vector<4x32xf32>, vector<32x32xf32>, vector<4x32xf32> -> vector<4x32xf32>
    %670 = arith.addf %668, %669 : vector<4x32xf32>
    %671 = math.tanh %670 : vector<4x32xf32>
    %672 = vector.shape_cast %671 : vector<4x32xf32> to vector<4x1x32xf32>
    %c0_433 = arith.constant 0 : index
    %c6_434 = arith.constant 6 : index
    %c0_435 = arith.constant 0 : index
    %673 = vector.load %arg8[%c0_433, %c6_434, %c0_435] : memref<4x8x32xf32, #tpu.memory_space<vmem>>, vector<4x1x32xf32>
    tpu.vector_store %arg8[%c0_433, %c6_434, %c0_435], %672 {strides = array<i32>} : memref<4x8x32xf32, #tpu.memory_space<vmem>>, vector<4x1x32xf32>,
    %674 = vector.extract_strided_slice %622 {offsets = [0, 7, 0], sizes = [4, 1, 32], strides = [1, 1, 1]} : vector<4x8x32xf32> to vector<4x1x32xf32>
    %675 = vector.shape_cast %674 : vector<4x1x32xf32> to vector<4x32xf32>
    %cst_436 = arith.constant dense<0.000000e+00> : vector<4x32xf32>
    %676 = tpu.matmul %671, %624, %cst_436 {dimension_numbers = #tpu.dot_dimension_numbers<[1], [0], [0], [1], [0, 0, 1, 1], [], []>} : vector<4x32xf32>, vector<32x32xf32>, vector<4x32xf32> -> vector<4x32xf32>
    %677 = arith.addf %675, %676 : vector<4x32xf32>
    %678 = math.tanh %677 : vector<4x32xf32>
    %679 = vector.shape_cast %678 : vector<4x32xf32> to vector<4x1x32xf32>
    %c0_437 = arith.constant 0 : index
    %c7_438 = arith.constant 7 : index
    %c0_439 = arith.constant 0 : index
    %680 = vector.load %arg8[%c0_437, %c7_438, %c0_439] : memref<4x8x32xf32, #tpu.memory_space<vmem>>, vector<4x1x32xf32>
    tpu.vector_store %arg8[%c0_437, %c7_438, %c0_439], %679 {strides = array<i32>} : memref<4x8x32xf32, #tpu.memory_space<vmem>>, vector<4x1x32xf32>,
    %c0_440 = arith.constant 0 : index
    %c0_441 = arith.constant 0 : index
    %c0_442 = arith.constant 0 : index
    %681 = vector.load %arg8[%c0_440, %c0_441, %c0_442] : memref<4x8x32xf32, #tpu.memory_space<vmem>>, vector<4x8x32xf32>
    %682 = vector.shape_cast %681 : vector<4x8x32xf32> to vector<32x32xf32>
    %c0_443 = arith.constant 0 : index
    %c0_444 = arith.constant 0 : index
    %683 = vector.load %arg5[%c0_443, %c0_444] : memref<32x8xf32, #tpu.memory_space<vmem>>, vector<32x8xf32>
    %cst_445 = arith.constant dense<0.000000e+00> : vector<32x8xf32>
    %684 = tpu.matmul %682, %683, %cst_445 {dimension_numbers = #tpu.dot_dimension_numbers<[1], [0], [0], [1], [0, 0, 1, 1], [], []>} : vector<32x32xf32>, vector<32x8xf32>, vector<32x8xf32> -> vector<32x8xf32>
    %c0_446 = arith.constant 0 : index
    %c0_447 = arith.constant 0 : index
    %685 = vector.load %arg6[%c0_446, %c0_447] : memref<1x8xf32, #tpu.memory_space<vmem>>, vector<1x8xf32>
    %686 = vector.broadcast %685 : vector<1x8xf32> to vector<32x8xf32>
    %687 = arith.addf %684, %686 : vector<32x8xf32>
    %688 = vector.shape_cast %687 : vector<32x8xf32> to vector<4x8x8xf32>
    %c0_448 = arith.constant 0 : index
    %c0_449 = arith.constant 0 : index
    %c0_450 = arith.constant 0 : index
    %689 = vector.load %arg7[%c0_448, %c0_449, %c0_450] : memref<4x8x8xf32, #tpu.memory_space<vmem>>, vector<4x8x8xf32>
    tpu.vector_store %arg7[%c0_448, %c0_449, %c0_450], %688 {strides = array<i32>} : memref<4x8x8xf32, #tpu.memory_space<vmem>>, vector<4x8x8xf32>,
    return
  }
}

</mosaic_0001>

<llo_original>
// kernel: model_forward.1
$region0: #{model_forward.1}
  #allocation0 [shape = 'u32[]', space=smem, size = 0x4, offset = 0x4, fixed_abs, tag = 'smem constant byte address 0x4 - core index']
  #allocation1 [shape = 'u32[72,128]{1,0:T(1,128)}', space=vmem, size = 0x9000, scoped, tag = 'internal scratch']
  #allocation2 [shape = 'f32[4,8,32]{2,1,0:T(8,128)}', space=vmem, size = 0x4000, scoped, tag = 'scratch operand']
  %s0 = inlined_call_operand.vmem [shape: f32[4,8,16], index: 0, kind: input, shape index: {}]
  %s1 = inlined_call_operand.hbm [shape: f32[16,32], index: 1, kind: input, shape index: {}]
  %s2 = inlined_call_operand.hbm [shape: f32[9,32,32], index: 2, kind: input, shape index: {}]
  %s3 = inlined_call_operand.hbm [shape: f32[10,32,32], index: 3, kind: input, shape index: {}]
  %s4 = inlined_call_operand.vmem [shape: f32[10,1,32], index: 4, kind: input, shape index: {}]
  %s5 = inlined_call_operand.vmem [shape: f32[32,8], index: 5, kind: input, shape index: {}]
  %s6 = inlined_call_operand.vmem [shape: f32[1,8], index: 6, kind: input, shape index: {}]
  %s7 = inlined_call_operand.hbm [shape: f32[4,8,8], index: 7, kind: output, shape index: {}]
  %s8 = sld [smem:[#allocation0]]
  $region50: #{model_forward.1} parent=0
    _
  %s10 = ssub.s32 1, %s8
  %s11 = scalar_select 0, %s10, %s8
  $region1: #{model_forward.1} parent=0
    #allocation3 [shape = 'u8[8192]{0}', space=vmem, size = 0x2000, scoped, tag = 'input window, operand 1, single buffered']
    #allocation4 [shape = 's32[1]{0}', space=sflag, size = 0x4, scoped, tag = 'scoped memory for model_forward.1']
    #allocation5 [shape = 's32[1]{0}', space=sflag, size = 0x4, scoped, tag = 'scoped memory for model_forward.1']
    #allocation6 [shape = 'u8[147456]{0}', space=vmem, size = 0x24000, scoped, tag = 'input window, operand 2, single buffered']
    #allocation7 [shape = 's32[1]{0}', space=sflag, size = 0x4, scoped, tag = 'scoped memory for model_forward.1']
    #allocation8 [shape = 'u8[163840]{0}', space=vmem, size = 0x28000, scoped, tag = 'input window, operand 3, single buffered']
    #allocation9 [shape = 'u8[16384]{0}', space=vmem, size = 0x4000, scoped, tag = 'output window, operand 0, single buffered']
    %12 = vsyncpa [#allocation4], 0
    %13 = vsyncpa [#allocation7], 0
    %14 = vsyncpa [#allocation5], 0
    // Predicated region
    $region2: #{model_forward.1} parent=1 // pred_check
      _
    $region3: #{model_forward.1} parent=1 // pred_check_branch
      %16 = sbr.rel (0) target = $region5
    $region4: #{model_forward.1} parent=1 // pred_region
      _
    $region5: #{model_forward.1} parent=1 // pred_fallthru
      _
    // Predicated region
    $region6: #{model_forward.1} parent=1 // pred_check
      _
    $region7: #{model_forward.1} parent=1 // pred_check_branch
      %18 = sbr.rel (0) target = $region9
    $region8: #{model_forward.1} parent=1 // pred_region
      %20 = vsyncadd [#allocation4], 0
      %s21 = sshll.u32 %s1, 4
      %s22 = int_to_ptr.hbm [resolvable:$true] %s21
      %s23 = sshll.u32 [#allocation3], 4
      %s24 = int_to_ptr.vmem [resolvable:$true] %s23
      %29 = dma.hbm_to_vmem [thread:$0]  %s22, 256, %s24, [#allocation4], 128, 128, 8
    $region9: #{model_forward.1} parent=1 // pred_fallthru
      _
    // Predicated region
    $region10: #{model_forward.1} parent=1 // pred_check
      _
    $region11: #{model_forward.1} parent=1 // pred_check_branch
      %31 = sbr.rel (0) target = $region13
    $region12: #{model_forward.1} parent=1 // pred_region
      %33 = vsyncadd [#allocation7], 0
      %s34 = sshll.u32 %s2, 4
      %s35 = int_to_ptr.hbm [resolvable:$true] %s34
      %s36 = sshll.u32 [#allocation6], 4
      %s37 = int_to_ptr.vmem [resolvable:$true] %s36
      %42 = dma.hbm_to_vmem [thread:$0]  %s35, 4608, %s37, [#allocation7], 128, 128, 8
    $region13: #{model_forward.1} parent=1 // pred_fallthru
      _
    // Predicated region
    $region14: #{model_forward.1} parent=1 // pred_check
      _
    $region15: #{model_forward.1} parent=1 // pred_check_branch
      %44 = sbr.rel (0) target = $region17
    $region16: #{model_forward.1} parent=1 // pred_region
      %46 = vsyncadd [#allocation7], 0
      %s47 = sshll.u32 %s3, 4
      %s48 = int_to_ptr.hbm [resolvable:$true] %s47
      %s49 = sshll.u32 [#allocation8], 4
      %s50 = int_to_ptr.vmem [resolvable:$true] %s49
      %55 = dma.hbm_to_vmem [thread:$0]  %s48, 5120, %s50, [#allocation7], 128, 128, 8
    $region17: #{model_forward.1} parent=1 // pred_fallthru
      _
    // Predicated region
    $region18: #{model_forward.1} parent=1 // pred_check
      _
    $region19: #{model_forward.1} parent=1 // pred_check_branch
      %57 = sbr.rel (0) target = $region21
    $region20: #{model_forward.1} parent=1 // pred_region
      _
    $region21: #{model_forward.1} parent=1 // pred_fallthru
      _
    // Predicated region
    $region22: #{model_forward.1} parent=1 // pred_check
      _
    $region23: #{model_forward.1} parent=1 // pred_check_branch
      %59 = sbr.rel (0) target = $region25
    $region24: #{model_forward.1} parent=1 // pred_region
      _
    $region25: #{model_forward.1} parent=1 // pred_fallthru
      _
    // Predicated region
    $region26: #{model_forward.1} parent=1 // pred_check
      _
    $region27: #{model_forward.1} parent=1 // pred_check_branch
      %61 = sbr.rel (0) target = $region29
    $region28: #{model_forward.1} parent=1 // pred_region
      _
    $region29: #{model_forward.1} parent=1 // pred_fallthru
      _
    // Predicated region
    $region30: #{model_forward.1} parent=1 // pred_check
      _
    $region31: #{model_forward.1} parent=1 // pred_check_branch
      %63 = sbr.rel (0) target = $region33
    $region32: #{model_forward.1} parent=1 // pred_region
      %65 = dma.done [#allocation4], 256
    $region33: #{model_forward.1} parent=1 // pred_fallthru
      _
    // Predicated region
    $region34: #{model_forward.1} parent=1 // pred_check
      _
    $region35: #{model_forward.1} parent=1 // pred_check_branch
      %67 = sbr.rel (0) target = $region37
    $region36: #{model_forward.1} parent=1 // pred_region
      %69 = dma.done [#allocation7], 4608
    $region37: #{model_forward.1} parent=1 // pred_fallthru
      _
    // Predicated region
    $region38: #{model_forward.1} parent=1 // pred_check
      _
    $region39: #{model_forward.1} parent=1 // pred_check_branch
      %71 = sbr.rel (0) target = $region41
    $region40: #{model_forward.1} parent=1 // pred_region
      %73 = dma.done [#allocation7], 5120
    $region41: #{model_forward.1} parent=1 // pred_fallthru
      _
    %v74 = vld [vmem:[#allocation3] sm:$0xff]
    %v75 = vld [vmem:[#allocation3 + $0x8] sm:$0xff]
    %v76 = vld [vmem:[%s0] sm:$0xff]
    %v77 = vld [vmem:[%s0 + $0x8] sm:$0xff]
    %v78 = vld [vmem:[%s0 + $0x10] sm:$0xff]
    %v79 = vld [vmem:[%s0 + $0x18] sm:$0xff]
    %v80 = vld [vmem:[%s4] sm:$0x1]
    %v82 = vperm.slane %v80, 0
    %vm84 = vcmask 130048
    %v86 = vsel %vm84, %v76, 0
    %v89 = vsel %vm84, %v77, 0
    %v92 = vsel %vm84, %v78, 0
    %v95 = vsel %vm84, %v79, 0
    %97 = vmatpush.msra.mxu0 0.0
    %98 = vmatpush.msra.mxu0 0.0
    %99 = vmatpush.msra.mxu0 0.0
    %100 = vmatpush.msra.mxu0 0.0
    %101 = vmatpush.msra.mxu0 0.0
    %102 = vmatpush.msra.mxu0 0.0
    %103 = vmatpush.msra.mxu0 0.0
    %104 = vmatpush.msra.mxu0 0.0
    %105 = vmatpush.msra.mxu0 0.0
    %106 = vmatpush.msra.mxu0 0.0
    %107 = vmatpush.msra.mxu0 0.0
    %108 = vmatpush.msra.mxu0 0.0
    %109 = vmatpush.msra.mxu0 0.0
    %110 = vmatpush.msra.mxu0 0.0
    %111 = vmatpush.msra.mxu0 %v75
    %112 = vmatpush.msra.mxu0 %v74
    %113 = vmatmul.f32.gmra.mxu0 %v86
    %v114 = vpop.f32.mrf.mxu0
    %v115 = vadd.f32 %v82, %v114
    %116 = vmatmul.f32.gmra.mxu0 %v89
    %v117 = vpop.f32.mrf.mxu0
    %v118 = vadd.f32 %v82, %v117
    %119 = vmatmul.f32.gmra.mxu0 %v92
    %v120 = vpop.f32.mrf.mxu0
    %v121 = vadd.f32 %v82, %v120
    %122 = vmatmul.f32.gmra.mxu0 %v95
    %v123 = vpop.f32.mrf.mxu0
    %v124 = vadd.f32 %v82, %v123
    %125 = vdwg.mxu0
    %v126 = vld [vmem:[#allocation8] sm:$0xff]
    %v127 = vld [vmem:[#allocation8 + $0x8] sm:$0xff]
    %v128 = vld [vmem:[#allocation8 + $0x10] sm:$0xff]
    %v129 = vld [vmem:[#allocation8 + $0x18] sm:$0xff]
    %vm130 = vcmask 261120
    %v132 = vsel %vm130, 0.0, 0
    %134 = vmatpush.msra.mxu0 0.0
    %135 = vmatpush.msra.mxu0 0.0
    %136 = vmatpush.msra.mxu0 0.0
    %137 = vmatpush.msra.mxu0 0.0
    %138 = vmatpush.msra.mxu0 0.0
    %139 = vmatpush.msra.mxu0 0.0
    %140 = vmatpush.msra.mxu0 0.0
    %141 = vmatpush.msra.mxu0 0.0
    %142 = vmatpush.msra.mxu0 0.0
    %143 = vmatpush.msra.mxu0 0.0
    %144 = vmatpush.msra.mxu0 0.0
    %145 = vmatpush.msra.mxu0 0.0
    %146 = vmatpush.msra.mxu0 %v129
    %147 = vmatpush.msra.mxu0 %v128
    %148 = vmatpush.msra.mxu0 %v127
    %149 = vmatpush.msra.mxu0 %v126
    %150 = vmatmul.f32.gmra.mxu0 %v132
    %v151 = vpop.f32.mrf.mxu0
    %v152 = vadd.f32 0.0, %v151
    %153 = vdwg.mxu0
    %v155 = vrot.slane %v152, 1
    %v156 = vrot.slane %v152, 2
    %v157 = vrot.slane %v152, 3
    %v162 = vadd.f32 %v115, %v152
    %v163 = vadd.f32 %v118, %v155
    %v164 = vadd.f32 %v121, %v156
    %v165 = vadd.f32 %v124, %v157
    %v166 = vtanh.pop %v162
    %v167 = vtanh.pop %v163
    %v168 = vtanh.pop %v164
    %v169 = vtanh.pop %v165
    %vm170 = vcmask 253952
    %171 = vst.msk [vmem:[#allocation2] sm:$0x1] %vm170, %v166
    %172 = vst.msk [vmem:[#allocation2 + $0x8] sm:$0x1] %vm170, %v167
    %173 = vst.msk [vmem:[#allocation2 + $0x10] sm:$0x1] %vm170, %v168
    %174 = vst.msk [vmem:[#allocation2 + $0x18] sm:$0x1] %vm170, %v169
    %v179 = vrot.slane %v167, 7
    %vm180 = vcmask 1041409
    %v181 = vsel %vm180, %v179, %v166
    %v182 = vrot.slane %v168, 6
    %vm183 = vcmask 1042434
    %v184 = vsel %vm183, %v182, %v181
    %v185 = vrot.slane %v169, 5
    %vm186 = vcmask 1043459
    %v187 = vsel %vm186, %v185, %v184
    %v188 = vsel %vm130, %v187, 0
    %190 = vmatpush.msra.mxu0 0.0
    %191 = vmatpush.msra.mxu0 0.0
    %192 = vmatpush.msra.mxu0 0.0
    %193 = vmatpush.msra.mxu0 0.0
    %194 = vmatpush.msra.mxu0 0.0
    %195 = vmatpush.msra.mxu0 0.0
    %196 = vmatpush.msra.mxu0 0.0
    %197 = vmatpush.msra.mxu0 0.0
    %198 = vmatpush.msra.mxu0 0.0
    %199 = vmatpush.msra.mxu0 0.0
    %200 = vmatpush.msra.mxu0 0.0
    %201 = vmatpush.msra.mxu0 0.0
    %202 = vmatpush.msra.mxu0 %v129
    %203 = vmatpush.msra.mxu0 %v128
    %204 = vmatpush.msra.mxu0 %v127
    %205 = vmatpush.msra.mxu0 %v126
    %206 = vmatmul.f32.gmra.mxu0 %v188
    %v207 = vpop.f32.mrf.mxu0
    %v208 = vadd.f32 0.0, %v207
    %209 = vdwg.mxu0
    %v211 = vrot.slane %v208, 7
    %v212 = vrot.slane %v208, 1
    %v213 = vrot.slane %v208, 2
    %v218 = vadd.f32 %v115, %v211
    %v219 = vadd.f32 %v118, %v208
    %v220 = vadd.f32 %v121, %v212
    %v221 = vadd.f32 %v124, %v213
    %v222 = vtanh.pop %v218
    %v223 = vtanh.pop %v219
    %v224 = vtanh.pop %v220
    %v225 = vtanh.pop %v221
    %vm226 = vcmask 254977
    %227 = vst.msk [vmem:[#allocation2] sm:$0x2] %vm226, %v222
    %228 = vst.msk [vmem:[#allocation2 + $0x8] sm:$0x2] %vm226, %v223
    %229 = vst.msk [vmem:[#allocation2 + $0x10] sm:$0x2] %vm226, %v224
    %230 = vst.msk [vmem:[#allocation2 + $0x18] sm:$0x2] %vm226, %v225
    %v235 = vrot.slane %v222, 1
    %v236 = vsel %vm180, %v223, %v235
    %v237 = vrot.slane %v224, 7
    %v238 = vsel %vm183, %v237, %v236
    %v239 = vrot.slane %v225, 6
    %v240 = vsel %vm186, %v239, %v238
    %v241 = vsel %vm130, %v240, 0
    %243 = vmatpush.msra.mxu0 0.0
    %244 = vmatpush.msra.mxu0 0.0
    %245 = vmatpush.msra.mxu0 0.0
    %246 = vmatpush.msra.mxu0 0.0
    %247 = vmatpush.msra.mxu0 0.0
    %248 = vmatpush.msra.mxu0 0.0
    %249 = vmatpush.msra.mxu0 0.0
    %250 = vmatpush.msra.mxu0 0.0
    %251 = vmatpush.msra.mxu0 0.0
    %252 = vmatpush.msra.mxu0 0.0
    %253 = vmatpush.msra.mxu0 0.0
    %254 = vmatpush.msra.mxu0 0.0
    %255 = vmatpush.msra.mxu0 %v129
    %256 = vmatpush.msra.mxu0 %v128
    %257 = vmatpush.msra.mxu0 %v127
    %258 = vmatpush.msra.mxu0 %v126
    %259 = vmatmul.f32.gmra.mxu0 %v241
    %v260 = vpop.f32.mrf.mxu0
    %v261 = vadd.f32 0.0, %v260
    %262 = vdwg.mxu0
    %v264 = vrot.slane %v261, 6
    %v265 = vrot.slane %v261, 7
    %v266 = vrot.slane %v261, 1
    %v271 = vadd.f32 %v115, %v264
    %v272 = vadd.f32 %v118, %v265
    %v273 = vadd.f32 %v121, %v261
    %v274 = vadd.f32 %v124, %v266
    %v275 = vtanh.pop %v271
    %v276 = vtanh.pop %v272
    %v277 = vtanh.pop %v273
    %v278 = vtanh.pop %v274
    %vm279 = vcmask 256002
    %280 = vst.msk [vmem:[#allocation2] sm:$0x4] %vm279, %v275
    %281 = vst.msk [vmem:[#allocation2 + $0x8] sm:$0x4] %vm279, %v276
    %282 = vst.msk [vmem:[#allocation2 + $0x10] sm:$0x4] %vm279, %v277
    %283 = vst.msk [vmem:[#allocation2 + $0x18] sm:$0x4] %vm279, %v278
    %v288 = vrot.slane %v275, 2
    %v289 = vrot.slane %v276, 1
    %v290 = vsel %vm180, %v289, %v288
    %v291 = vsel %vm183, %v277, %v290
    %v292 = vrot.slane %v278, 7
    %v293 = vsel %vm186, %v292, %v291
    %v294 = vsel %vm130, %v293, 0
    %296 = vmatpush.msra.mxu0 0.0
    %297 = vmatpush.msra.mxu0 0.0
    %298 = vmatpush.msra.mxu0 0.0
    %299 = vmatpush.msra.mxu0 0.0
    %300 = vmatpush.msra.mxu0 0.0
    %301 = vmatpush.msra.mxu0 0.0
    %302 = vmatpush.msra.mxu0 0.0
    %303 = vmatpush.msra.mxu0 0.0
    %304 = vmatpush.msra.mxu0 0.0
    %305 = vmatpush.msra.mxu0 0.0
    %306 = vmatpush.msra.mxu0 0.0
    %307 = vmatpush.msra.mxu0 0.0
    %308 = vmatpush.msra.mxu0 %v129
    %309 = vmatpush.msra.mxu0 %v128
    %310 = vmatpush.msra.mxu0 %v127
    %311 = vmatpush.msra.mxu0 %v126
    %312 = vmatmul.f32.gmra.mxu0 %v294
    %v313 = vpop.f32.mrf.mxu0
    %v314 = vadd.f32 0.0, %v313
    %315 = vdwg.mxu0
    %v317 = vrot.slane %v314, 5
    %v318 = vrot.slane %v314, 6
    %v319 = vrot.slane %v314, 7
    %v324 = vadd.f32 %v115, %v317
    %v325 = vadd.f32 %v118, %v318
    %v326 = vadd.f32 %v121, %v319
    %v327 = vadd.f32 %v124, %v314
    %v328 = vtanh.pop %v324
    %v329 = vtanh.pop %v325
    %v330 = vtanh.pop %v326
    %v331 = vtanh.pop %v327
    %vm332 = vcmask 257027
    %333 = vst.msk [vmem:[#allocation2] sm:$0x8] %vm332, %v328
    %334 = vst.msk [vmem:[#allocation2 + $0x8] sm:$0x8] %vm332, %v329
    %335 = vst.msk [vmem:[#allocation2 + $0x10] sm:$0x8] %vm332, %v330
    %336 = vst.msk [vmem:[#allocation2 + $0x18] sm:$0x8] %vm332, %v331
    %v341 = vrot.slane %v328, 3
    %v342 = vrot.slane %v329, 2
    %v343 = vsel %vm180, %v342, %v341
    %v344 = vrot.slane %v330, 1
    %v345 = vsel %vm183, %v344, %v343
    %v346 = vsel %vm186, %v331, %v345
    %v347 = vsel %vm130, %v346, 0
    %349 = vmatpush.msra.mxu0 0.0
    %350 = vmatpush.msra.mxu0 0.0
    %351 = vmatpush.msra.mxu0 0.0
    %352 = vmatpush.msra.mxu0 0.0
    %353 = vmatpush.msra.mxu0 0.0
    %354 = vmatpush.msra.mxu0 0.0
    %355 = vmatpush.msra.mxu0 0.0
    %356 = vmatpush.msra.mxu0 0.0
    %357 = vmatpush.msra.mxu0 0.0
    %358 = vmatpush.msra.mxu0 0.0
    %359 = vmatpush.msra.mxu0 0.0
    %360 = vmatpush.msra.mxu0 0.0
    %361 = vmatpush.msra.mxu0 %v129
    %362 = vmatpush.msra.mxu0 %v128
    %363 = vmatpush.msra.mxu0 %v127
    %364 = vmatpush.msra.mxu0 %v126
    %365 = vmatmul.f32.gmra.mxu0 %v347
    %v366 = vpop.f32.mrf.mxu0
    %v367 = vadd.f32 0.0, %v366
    %368 = vdwg.mxu0
    %v370 = vrot.slane %v367, 4
    %v371 = vrot.slane %v367, 5
    %v372 = vrot.slane %v367, 6
    %v373 = vrot.slane %v367, 7
    %v378 = vadd.f32 %v115, %v370
    %v379 = vadd.f32 %v118, %v371
    %v380 = vadd.f32 %v121, %v372
    %v381 = vadd.f32 %v124, %v373
    %v382 = vtanh.pop %v378
    %v383 = vtanh.pop %v379
    %v384 = vtanh.pop %v380
    %v385 = vtanh.pop %v381
    %vm386 = vcmask 258052
    %387 = vst.msk [vmem:[#allocation2] sm:$0x10] %vm386, %v382
    %388 = vst.msk [vmem:[#allocation2 + $0x8] sm:$0x10] %vm386, %v383
    %389 = vst.msk [vmem:[#allocation2 + $0x10] sm:$0x10] %vm386, %v384
    %390 = vst.msk [vmem:[#allocation2 + $0x18] sm:$0x10] %vm386, %v385
    %v395 = vrot.slane %v382, 4
    %v396 = vrot.slane %v383, 3
    %v397 = vsel %vm180, %v396, %v395
    %v398 = vrot.slane %v384, 2
    %v399 = vsel %vm183, %v398, %v397
    %v400 = vrot.slane %v385, 1
    %v401 = vsel %vm186, %v400, %v399
    %v402 = vsel %vm130, %v401, 0
    %404 = vmatpush.msra.mxu0 0.0
    %405 = vmatpush.msra.mxu0 0.0
    %406 = vmatpush.msra.mxu0 0.0
    %407 = vmatpush.msra.mxu0 0.0
    %408 = vmatpush.msra.mxu0 0.0
    %409 = vmatpush.msra.mxu0 0.0
    %410 = vmatpush.msra.mxu0 0.0
    %411 = vmatpush.msra.mxu0 0.0
    %412 = vmatpush.msra.mxu0 0.0
    %413 = vmatpush.msra.mxu0 0.0
    %414 = vmatpush.msra.mxu0 0.0
    %415 = vmatpush.msra.mxu0 0.0
    %416 = vmatpush.msra.mxu0 %v129
    %417 = vmatpush.msra.mxu0 %v128
    %418 = vmatpush.msra.mxu0 %v127
    %419 = vmatpush.msra.mxu0 %v126
    %420 = vmatmul.f32.gmra.mxu0 %v402
    %v421 = vpop.f32.mrf.mxu0
    %v422 = vadd.f32 0.0, %v421
    %423 = vdwg.mxu0
    %v425 = vrot.slane %v422, 3
    %v426 = vrot.slane %v422, 4
    %v427 = vrot.slane %v422, 5
    %v428 = vrot.slane %v422, 6
    %v433 = vadd.f32 %v115, %v425
    %v434 = vadd.f32 %v118, %v426
    %v435 = vadd.f32 %v121, %v427
    %v436 = vadd.f32 %v124, %v428
    %v437 = vtanh.pop %v433
    %v438 = vtanh.pop %v434
    %v439 = vtanh.pop %v435
    %v440 = vtanh.pop %v436
    %vm441 = vcmask 259077
    %442 = vst.msk [vmem:[#allocation2] sm:$0x20] %vm441, %v437
    %443 = vst.msk [vmem:[#allocation2 + $0x8] sm:$0x20] %vm441, %v438
    %444 = vst.msk [vmem:[#allocation2 + $0x10] sm:$0x20] %vm441, %v439
    %445 = vst.msk [vmem:[#allocation2 + $0x18] sm:$0x20] %vm441, %v440
    %v450 = vrot.slane %v437, 5
    %v451 = vrot.slane %v438, 4
    %v452 = vsel %vm180, %v451, %v450
    %v453 = vrot.slane %v439, 3
    %v454 = vsel %vm183, %v453, %v452
    %v455 = vrot.slane %v440, 2
    %v456 = vsel %vm186, %v455, %v454
    %v457 = vsel %vm130, %v456, 0
    %459 = vmatpush.msra.mxu0 0.0
    %460 = vmatpush.msra.mxu0 0.0
    %461 = vmatpush.msra.mxu0 0.0
    %462 = vmatpush.msra.mxu0 0.0
    %463 = vmatpush.msra.mxu0 0.0
    %464 = vmatpush.msra.mxu0 0.0
    %465 = vmatpush.msra.mxu0 0.0
    %466 = vmatpush.msra.mxu0 0.0
    %467 = vmatpush.msra.mxu0 0.0
    %468 = vmatpush.msra.mxu0 0.0
    %469 = vmatpush.msra.mxu0 0.0
    %470 = vmatpush.msra.mxu0 0.0
    %471 = vmatpush.msra.mxu0 %v129
    %472 = vmatpush.msra.mxu0 %v128
    %473 = vmatpush.msra.mxu0 %v127
    %474 = vmatpush.msra.mxu0 %v126
    %475 = vmatmul.f32.gmra.mxu0 %v457
    %v476 = vpop.f32.mrf.mxu0
    %v477 = vadd.f32 0.0, %v476
    %478 = vdwg.mxu0
    %v480 = vrot.slane %v477, 2
    %v481 = vrot.slane %v477, 3
    %v482 = vrot.slane %v477, 4
    %v483 = vrot.slane %v477, 5
    %v488 = vadd.f32 %v115, %v480
    %v489 = vadd.f32 %v118, %v481
    %v490 = vadd.f32 %v121, %v482
    %v491 = vadd.f32 %v124, %v483
    %v492 = vtanh.pop %v488
    %v493 = vtanh.pop %v489
    %v494 = vtanh.pop %v490
    %v495 = vtanh.pop %v491
    %vm496 = vcmask 260102
    %497 = vst.msk [vmem:[#allocation2] sm:$0x40] %vm496, %v492
    %498 = vst.msk [vmem:[#allocation2 + $0x8] sm:$0x40] %vm496, %v493
    %499 = vst.msk [vmem:[#allocation2 + $0x10] sm:$0x40] %vm496, %v494
    %500 = vst.msk [vmem:[#allocation2 + $0x18] sm:$0x40] %vm496, %v495
    %v505 = vrot.slane %v492, 6
    %v506 = vrot.slane %v493, 5
    %v507 = vsel %vm180, %v506, %v505
    %v508 = vrot.slane %v494, 4
    %v509 = vsel %vm183, %v508, %v507
    %v510 = vrot.slane %v495, 3
    %v511 = vsel %vm186, %v510, %v509
    %v512 = vsel %vm130, %v511, 0
    %514 = vmatpush.msra.mxu0 0.0
    %515 = vmatpush.msra.mxu0 0.0
    %516 = vmatpush.msra.mxu0 0.0
    %517 = vmatpush.msra.mxu0 0.0
    %518 = vmatpush.msra.mxu0 0.0
    %519 = vmatpush.msra.mxu0 0.0
    %520 = vmatpush.msra.mxu0 0.0
    %521 = vmatpush.msra.mxu0 0.0
    %522 = vmatpush.msra.mxu0 0.0
    %523 = vmatpush.msra.mxu0 0.0
    %524 = vmatpush.msra.mxu0 0.0
    %525 = vmatpush.msra.mxu0 0.0
    %526 = vmatpush.msra.mxu0 %v129
    %527 = vmatpush.msra.mxu0 %v128
    %528 = vmatpush.msra.mxu0 %v127
    %529 = vmatpush.msra.mxu0 %v126
    %530 = vmatmul.f32.gmra.mxu0 %v512
    %v531 = vpop.f32.mrf.mxu0
    %v532 = vadd.f32 0.0, %v531
    %533 = vdwg.mxu0
    %v535 = vrot.slane %v532, 1
    %v536 = vrot.slane %v532, 2
    %v537 = vrot.slane %v532, 3
    %v538 = vrot.slane %v532, 4
    %v543 = vadd.f32 %v115, %v535
    %v544 = vadd.f32 %v118, %v536
    %v545 = vadd.f32 %v121, %v537
    %v546 = vadd.f32 %v124, %v538
    %v547 = vtanh.pop %v543
    %v548 = vtanh.pop %v544
    %v549 = vtanh.pop %v545
    %v550 = vtanh.pop %v546
    %vm551 = vcmask 261127
    %552 = vst.msk [vmem:[#allocation2] sm:$0x80] %vm551, %v547
    %553 = vst.msk [vmem:[#allocation2 + $0x8] sm:$0x80] %vm551, %v548
    %554 = vst.msk [vmem:[#allocation2 + $0x10] sm:$0x80] %vm551, %v549
    %555 = vst.msk [vmem:[#allocation2 + $0x18] sm:$0x80] %vm551, %v550
    %v556 = vld [vmem:[#allocation6] sm:$0xff]
    %v557 = vld [vmem:[#allocation6 + $0x8] sm:$0xff]
    %v558 = vld [vmem:[#allocation6 + $0x10] sm:$0xff]
    %v559 = vld [vmem:[#allocation6 + $0x18] sm:$0xff]
    %v560 = vld [vmem:[#allocation2] sm:$0xff]
    %v561 = vld [vmem:[#allocation2 + $0x8] sm:$0xff]
    %v562 = vld [vmem:[#allocation2 + $0x10] sm:$0xff]
    %v563 = vld [vmem:[#allocation2 + $0x18] sm:$0xff]
    %s564 = scalar_lea.vmem %s4, 1
    %v565 = vld [vmem:[%s564] sm:$0x1]
    %v567 = vperm.slane %v565, 0
    %v570 = vsel %vm130, %v560, 0
    %v573 = vsel %vm130, %v561, 0
    %v576 = vsel %vm130, %v562, 0
    %v579 = vsel %vm130, %v563, 0
    %581 = vmatpush.msra.mxu0 0.0
    %582 = vmatpush.msra.mxu0 0.0
    %583 = vmatpush.msra.mxu0 0.0
    %584 = vmatpush.msra.mxu0 0.0
    %585 = vmatpush.msra.mxu0 0.0
    %586 = vmatpush.msra.mxu0 0.0
    %587 = vmatpush.msra.mxu0 0.0
    %588 = vmatpush.msra.mxu0 0.0
    %589 = vmatpush.msra.mxu0 0.0
    %590 = vmatpush.msra.mxu0 0.0
    %591 = vmatpush.msra.mxu0 0.0
    %592 = vmatpush.msra.mxu0 0.0
    %593 = vmatpush.msra.mxu0 %v559
    %594 = vmatpush.msra.mxu0 %v558
    %595 = vmatpush.msra.mxu0 %v557
    %596 = vmatpush.msra.mxu0 %v556
    %597 = vmatmul.f32.gmra.mxu0 %v570
    %v598 = vpop.f32.mrf.mxu0
    %v599 = vadd.f32 %v567, %v598
    %600 = vmatmul.f32.gmra.mxu0 %v573
    %v601 = vpop.f32.mrf.mxu0
    %v602 = vadd.f32 %v567, %v601
    %603 = vmatmul.f32.gmra.mxu0 %v576
    %v604 = vpop.f32.mrf.mxu0
    %v605 = vadd.f32 %v567, %v604
    %606 = vmatmul.f32.gmra.mxu0 %v579
    %v607 = vpop.f32.mrf.mxu0
    %v608 = vadd.f32 %v567, %v607
    %609 = vdwg.mxu0
    %s610 = scalar_lea.vmem [#allocation8], 32
    %v611 = vld [vmem:[%s610] sm:$0xff]
    %v612 = vld [vmem:[%s610 + $0x8] sm:$0xff]
    %v613 = vld [vmem:[%s610 + $0x10] sm:$0xff]
    %v614 = vld [vmem:[%s610 + $0x18] sm:$0xff]
    %615 = vmatpush.msra.mxu0 0.0
    %616 = vmatpush.msra.mxu0 0.0
    %617 = vmatpush.msra.mxu0 0.0
    %618 = vmatpush.msra.mxu0 0.0
    %619 = vmatpush.msra.mxu0 0.0
    %620 = vmatpush.msra.mxu0 0.0
    %621 = vmatpush.msra.mxu0 0.0
    %622 = vmatpush.msra.mxu0 0.0
    %623 = vmatpush.msra.mxu0 0.0
    %624 = vmatpush.msra.mxu0 0.0
    %625 = vmatpush.msra.mxu0 0.0
    %626 = vmatpush.msra.mxu0 0.0
    %627 = vmatpush.msra.mxu0 %v614
    %628 = vmatpush.msra.mxu0 %v613
    %629 = vmatpush.msra.mxu0 %v612
    %630 = vmatpush.msra.mxu0 %v611
    %631 = vmatmul.f32.gmra.mxu0 %v132
    %v632 = vpop.f32.mrf.mxu0
    %v633 = vadd.f32 0.0, %v632
    %634 = vdwg.mxu0
    %v636 = vrot.slane %v633, 1
    %v637 = vrot.slane %v633, 2
    %v638 = vrot.slane %v633, 3
    %v643 = vadd.f32 %v599, %v633
    %v644 = vadd.f32 %v602, %v636
    %v645 = vadd.f32 %v605, %v637
    %v646 = vadd.f32 %v608, %v638
    %v647 = vtanh.pop %v643
    %v648 = vtanh.pop %v644
    %v649 = vtanh.pop %v645
    %v650 = vtanh.pop %v646
    %651 = vst.msk [vmem:[#allocation2] sm:$0x1] %vm170, %v647
    %652 = vst.msk [vmem:[#allocation2 + $0x8] sm:$0x1] %vm170, %v648
    %653 = vst.msk [vmem:[#allocation2 + $0x10] sm:$0x1] %vm170, %v649
    %654 = vst.msk [vmem:[#allocation2 + $0x18] sm:$0x1] %vm170, %v650
    %v659 = vrot.slane %v648, 7
    %v660 = vsel %vm180, %v659, %v647
    %v661 = vrot.slane %v649, 6
    %v662 = vsel %vm183, %v661, %v660
    %v663 = vrot.slane %v650, 5
    %v664 = vsel %vm186, %v663, %v662
    %v665 = vsel %vm130, %v664, 0
    %667 = vmatpush.msra.mxu0 0.0
    %668 = vmatpush.msra.mxu0 0.0
    %669 = vmatpush.msra.mxu0 0.0
    %670 = vmatpush.msra.mxu0 0.0
    %671 = vmatpush.msra.mxu0 0.0
    %672 = vmatpush.msra.mxu0 0.0
    %673 = vmatpush.msra.mxu0 0.0
    %674 = vmatpush.msra.mxu0 0.0
    %675 = vmatpush.msra.mxu0 0.0
    %676 = vmatpush.msra.mxu0 0.0
    %677 = vmatpush.msra.mxu0 0.0
    %678 = vmatpush.msra.mxu0 0.0
    %679 = vmatpush.msra.mxu0 %v614
    %680 = vmatpush.msra.mxu0 %v613
    %681 = vmatpush.msra.mxu0 %v612
    %682 = vmatpush.msra.mxu0 %v611
    %683 = vmatmul.f32.gmra.mxu0 %v665
    %v684 = vpop.f32.mrf.mxu0
    %v685 = vadd.f32 0.0, %v684
    %686 = vdwg.mxu0
    %v688 = vrot.slane %v685, 7
    %v689 = vrot.slane %v685, 1
    %v690 = vrot.slane %v685, 2
    %v695 = vadd.f32 %v599, %v688
    %v696 = vadd.f32 %v602, %v685
    %v697 = vadd.f32 %v605, %v689
    %v698 = vadd.f32 %v608, %v690
    %v699 = vtanh.pop %v695
    %v700 = vtanh.pop %v696
    %v701 = vtanh.pop %v697
    %v702 = vtanh.pop %v698
    %703 = vst.msk [vmem:[#allocation2] sm:$0x2] %vm226, %v699
    %704 = vst.msk [vmem:[#allocation2 + $0x8] sm:$0x2] %vm226, %v700
    %705 = vst.msk [vmem:[#allocation2 + $0x10] sm:$0x2] %vm226, %v701
    %706 = vst.msk [vmem:[#allocation2 + $0x18] sm:$0x2] %vm226, %v702
    %v711 = vrot.slane %v699, 1
    %v712 = vsel %vm180, %v700, %v711
    %v713 = vrot.slane %v701, 7
    %v714 = vsel %vm183, %v713, %v712
    %v715 = vrot.slane %v702, 6
    %v716 = vsel %vm186, %v715, %v714
    %v717 = vsel %vm130, %v716, 0
    %719 = vmatpush.msra.mxu0 0.0
    %720 = vmatpush.msra.mxu0 0.0
    %721 = vmatpush.msra.mxu0 0.0
    %722 = vmatpush.msra.mxu0 0.0
    %723 = vmatpush.msra.mxu0 0.0
    %724 = vmatpush.msra.mxu0 0.0
    %725 = vmatpush.msra.mxu0 0.0
    %726 = vmatpush.msra.mxu0 0.0
    %727 = vmatpush.msra.mxu0 0.0
    %728 = vmatpush.msra.mxu0 0.0
    %729 = vmatpush.msra.mxu0 0.0
    %730 = vmatpush.msra.mxu0 0.0
    %731 = vmatpush.msra.mxu0 %v614
    %732 = vmatpush.msra.mxu0 %v613
    %733 = vmatpush.msra.mxu0 %v612
    %734 = vmatpush.msra.mxu0 %v611
    %735 = vmatmul.f32.gmra.mxu0 %v717
    %v736 = vpop.f32.mrf.mxu0
    %v737 = vadd.f32 0.0, %v736
    %738 = vdwg.mxu0
    %v740 = vrot.slane %v737, 6
    %v741 = vrot.slane %v737, 7
    %v742 = vrot.slane %v737, 1
    %v747 = vadd.f32 %v599, %v740
    %v748 = vadd.f32 %v602, %v741
    %v749 = vadd.f32 %v605, %v737
    %v750 = vadd.f32 %v608, %v742
    %v751 = vtanh.pop %v747
    %v752 = vtanh.pop %v748
    %v753 = vtanh.pop %v749
    %v754 = vtanh.pop %v750
    %755 = vst.msk [vmem:[#allocation2] sm:$0x4] %vm279, %v751
    %756 = vst.msk [vmem:[#allocation2 + $0x8] sm:$0x4] %vm279, %v752
    %757 = vst.msk [vmem:[#allocation2 + $0x10] sm:$0x4] %vm279, %v753
    %758 = vst.msk [vmem:[#allocation2 + $0x18] sm:$0x4] %vm279, %v754
    %v763 = vrot.slane %v751, 2
    %v764 = vrot.slane %v752, 1
    %v765 = vsel %vm180, %v764, %v763
    %v766 = vsel %vm183, %v753, %v765
    %v767 = vrot.slane %v754, 7
    %v768 = vsel %vm186, %v767, %v766
    %v769 = vsel %vm130, %v768, 0
    %771 = vmatpush.msra.mxu0 0.0
    %772 = vmatpush.msra.mxu0 0.0
    %773 = vmatpush.msra.mxu0 0.0
    %774 = vmatpush.msra.mxu0 0.0
    %775 = vmatpush.msra.mxu0 0.0
    %776 = vmatpush.msra.mxu0 0.0
    %777 = vmatpush.msra.mxu0 0.0
    %778 = vmatpush.msra.mxu0 0.0
    %779 = vmatpush.msra.mxu0 0.0
    %780 = vmatpush.msra.mxu0 0.0
    %781 = vmatpush.msra.mxu0 0.0
    %782 = vmatpush.msra.mxu0 0.0
    %783 = vmatpush.msra.mxu0 %v614
    %784 = vmatpush.msra.mxu0 %v613
    %785 = vmatpush.msra.mxu0 %v612
    %786 = vmatpush.msra.mxu0 %v611
    %787 = vmatmul.f32.gmra.mxu0 %v769
    %v788 = vpop.f32.mrf.mxu0
    %v789 = vadd.f32 0.0, %v788
    %790 = vdwg.mxu0
    %v792 = vrot.slane %v789, 5
    %v793 = vrot.slane %v789, 6
    %v794 = vrot.slane %v789, 7
    %v799 = vadd.f32 %v599, %v792
    %v800 = vadd.f32 %v602, %v793
    %v801 = vadd.f32 %v605, %v794
    %v802 = vadd.f32 %v608, %v789
    %v803 = vtanh.pop %v799
    %v804 = vtanh.pop %v800
    %v805 = vtanh.pop %v801
    %v806 = vtanh.pop %v802
    %807 = vst.msk [vmem:[#allocation2] sm:$0x8] %vm332, %v803
    %808 = vst.msk [vmem:[#allocation2 + $0x8] sm:$0x8] %vm332, %v804
    %809 = vst.msk [vmem:[#allocation2 + $0x10] sm:$0x8] %vm332, %v805
    %810 = vst.msk [vmem:[#allocation2 + $0x18] sm:$0x8] %vm332, %v806
    %v815 = vrot.slane %v803, 3
    %v816 = vrot.slane %v804, 2
    %v817 = vsel %vm180, %v816, %v815
    %v818 = vrot.slane %v805, 1
    %v819 = vsel %vm183, %v818, %v817
    %v820 = vsel %vm186, %v806, %v819
    %v821 = vsel %vm130, %v820, 0
    %823 = vmatpush.msra.mxu0 0.0
    %824 = vmatpush.msra.mxu0 0.0
    %825 = vmatpush.msra.mxu0 0.0
    %826 = vmatpush.msra.mxu0 0.0
    %827 = vmatpush.msra.mxu0 0.0
    %828 = vmatpush.msra.mxu0 0.0
    %829 = vmatpush.msra.mxu0 0.0
    %830 = vmatpush.msra.mxu0 0.0
    %831 = vmatpush.msra.mxu0 0.0
    %832 = vmatpush.msra.mxu0 0.0
    %833 = vmatpush.msra.mxu0 0.0
    %834 = vmatpush.msra.mxu0 0.0
    %835 = vmatpush.msra.mxu0 %v614
    %836 = vmatpush.msra.mxu0 %v613
    %837 = vmatpush.msra.mxu0 %v612
    %838 = vmatpush.msra.mxu0 %v611
    %839 = vmatmul.f32.gmra.mxu0 %v821
    %v840 = vpop.f32.mrf.mxu0
    %v841 = vadd.f32 0.0, %v840
    %842 = vdwg.mxu0
    %v844 = vrot.slane %v841, 4
    %v845 = vrot.slane %v841, 5
    %v846 = vrot.slane %v841, 6
    %v847 = vrot.slane %v841, 7
    %v852 = vadd.f32 %v599, %v844
    %v853 = vadd.f32 %v602, %v845
    %v854 = vadd.f32 %v605, %v846
    %v855 = vadd.f32 %v608, %v847
    %v856 = vtanh.pop %v852
    %v857 = vtanh.pop %v853
    %v858 = vtanh.pop %v854
    %v859 = vtanh.pop %v855
    %860 = vst.msk [vmem:[#allocation2] sm:$0x10] %vm386, %v856
    %861 = vst.msk [vmem:[#allocation2 + $0x8] sm:$0x10] %vm386, %v857
    %862 = vst.msk [vmem:[#allocation2 + $0x10] sm:$0x10] %vm386, %v858
    %863 = vst.msk [vmem:[#allocation2 + $0x18] sm:$0x10] %vm386, %v859
    %v868 = vrot.slane %v856, 4
    %v869 = vrot.slane %v857, 3
    %v870 = vsel %vm180, %v869, %v868
    %v871 = vrot.slane %v858, 2
    %v872 = vsel %vm183, %v871, %v870
    %v873 = vrot.slane %v859, 1
    %v874 = vsel %vm186, %v873, %v872
    %v875 = vsel %vm130, %v874, 0
    %877 = vmatpush.msra.mxu0 0.0
    %878 = vmatpush.msra.mxu0 0.0
    %879 = vmatpush.msra.mxu0 0.0
    %880 = vmatpush.msra.mxu0 0.0
    %881 = vmatpush.msra.mxu0 0.0
    %882 = vmatpush.msra.mxu0 0.0
    %883 = vmatpush.msra.mxu0 0.0
    %884 = vmatpush.msra.mxu0 0.0
    %885 = vmatpush.msra.mxu0 0.0
    %886 = vmatpush.msra.mxu0 0.0
    %887 = vmatpush.msra.mxu0 0.0
    %888 = vmatpush.msra.mxu0 0.0
    %889 = vmatpush.msra.mxu0 %v614
    %890 = vmatpush.msra.mxu0 %v613
    %891 = vmatpush.msra.mxu0 %v612
    %892 = vmatpush.msra.mxu0 %v611
    %893 = vmatmul.f32.gmra.mxu0 %v875
    %v894 = vpop.f32.mrf.mxu0
    %v895 = vadd.f32 0.0, %v894
    %896 = vdwg.mxu0
    %v898 = vrot.slane %v895, 3
    %v899 = vrot.slane %v895, 4
    %v900 = vrot.slane %v895, 5
    %v901 = vrot.slane %v895, 6
    %v906 = vadd.f32 %v599, %v898
    %v907 = vadd.f32 %v602, %v899
    %v908 = vadd.f32 %v605, %v900
    %v909 = vadd.f32 %v608, %v901
    %v910 = vtanh.pop %v906
    %v911 = vtanh.pop %v907
    %v912 = vtanh.pop %v908
    %v913 = vtanh.pop %v909
    %914 = vst.msk [vmem:[#allocation2] sm:$0x20] %vm441, %v910
    %915 = vst.msk [vmem:[#allocation2 + $0x8] sm:$0x20] %vm441, %v911
    %916 = vst.msk [vmem:[#allocation2 + $0x10] sm:$0x20] %vm441, %v912
    %917 = vst.msk [vmem:[#allocation2 + $0x18] sm:$0x20] %vm441, %v913
    %v922 = vrot.slane %v910, 5
    %v923 = vrot.slane %v911, 4
    %v924 = vsel %vm180, %v923, %v922
    %v925 = vrot.slane %v912, 3
    %v926 = vsel %vm183, %v925, %v924
    %v927 = vrot.slane %v913, 2
    %v928 = vsel %vm186, %v927, %v926
    %v929 = vsel %vm130, %v928, 0
    %931 = vmatpush.msra.mxu0 0.0
    %932 = vmatpush.msra.mxu0 0.0
    %933 = vmatpush.msra.mxu0 0.0
    %934 = vmatpush.msra.mxu0 0.0
    %935 = vmatpush.msra.mxu0 0.0
    %936 = vmatpush.msra.mxu0 0.0
    %937 = vmatpush.msra.mxu0 0.0
    %938 = vmatpush.msra.mxu0 0.0
    %939 = vmatpush.msra.mxu0 0.0
    %940 = vmatpush.msra.mxu0 0.0
    %941 = vmatpush.msra.mxu0 0.0
    %942 = vmatpush.msra.mxu0 0.0
    %943 = vmatpush.msra.mxu0 %v614
    %944 = vmatpush.msra.mxu0 %v613
    %945 = vmatpush.msra.mxu0 %v612
    %946 = vmatpush.msra.mxu0 %v611
    %947 = vmatmul.f32.gmra.mxu0 %v929
    %v948 = vpop.f32.mrf.mxu0
    %v949 = vadd.f32 0.0, %v948
    %950 = vdwg.mxu0
    %v952 = vrot.slane %v949, 2
    %v953 = vrot.slane %v949, 3
    %v954 = vrot.slane %v949, 4
    %v955 = vrot.slane %v949, 5
    %v960 = vadd.f32 %v599, %v952
    %v961 = vadd.f32 %v602, %v953
    %v962 = vadd.f32 %v605, %v954
    %v963 = vadd.f32 %v608, %v955
    %v964 = vtanh.pop %v960
    %v965 = vtanh.pop %v961
    %v966 = vtanh.pop %v962
    %v967 = vtanh.pop %v963
    %968 = vst.msk [vmem:[#allocation2] sm:$0x40] %vm496, %v964
    %969 = vst.msk [vmem:[#allocation2 + $0x8] sm:$0x40] %vm496, %v965
    %970 = vst.msk [vmem:[#allocation2 + $0x10] sm:$0x40] %vm496, %v966
    %971 = vst.msk [vmem:[#allocation2 + $0x18] sm:$0x40] %vm496, %v967
    %v976 = vrot.slane %v964, 6
    %v977 = vrot.slane %v965, 5
    %v978 = vsel %vm180, %v977, %v976
    %v979 = vrot.slane %v966, 4
    %v980 = vsel %vm183, %v979, %v978
    %v981 = vrot.slane %v967, 3
    %v982 = vsel %vm186, %v981, %v980
    %v983 = vsel %vm130, %v982, 0
    %985 = vmatpush.msra.mxu0 0.0
    %986 = vmatpush.msra.mxu0 0.0
    %987 = vmatpush.msra.mxu0 0.0
    %988 = vmatpush.msra.mxu0 0.0
    %989 = vmatpush.msra.mxu0 0.0
    %990 = vmatpush.msra.mxu0 0.0
    %991 = vmatpush.msra.mxu0 0.0
    %992 = vmatpush.msra.mxu0 0.0
    %993 = vmatpush.msra.mxu0 0.0
    %994 = vmatpush.msra.mxu0 0.0
    %995 = vmatpush.msra.mxu0 0.0
    %996 = vmatpush.msra.mxu0 0.0
    %997 = vmatpush.msra.mxu0 %v614
    %998 = vmatpush.msra.mxu0 %v613
    %999 = vmatpush.msra.mxu0 %v612
    %1000 = vmatpush.msra.mxu0 %v611
    %1001 = vmatmul.f32.gmra.mxu0 %v983
    %v1002 = vpop.f32.mrf.mxu0
    %v1003 = vadd.f32 0.0, %v1002
    %1004 = vdwg.mxu0
    %v1006 = vrot.slane %v1003, 1
    %v1007 = vrot.slane %v1003, 2
    %v1008 = vrot.slane %v1003, 3
    %v1009 = vrot.slane %v1003, 4
    %v1014 = vadd.f32 %v599, %v1006
    %v1015 = vadd.f32 %v602, %v1007
    %v1016 = vadd.f32 %v605, %v1008
    %v1017 = vadd.f32 %v608, %v1009
    %v1018 = vtanh.pop %v1014
    %v1019 = vtanh.pop %v1015
    %v1020 = vtanh.pop %v1016
    %v1021 = vtanh.pop %v1017
    %1022 = vst.msk [vmem:[#allocation2] sm:$0x80] %vm551, %v1018
    %1023 = vst.msk [vmem:[#allocation2 + $0x8] sm:$0x80] %vm551, %v1019
    %1024 = vst.msk [vmem:[#allocation2 + $0x10] sm:$0x80] %vm551, %v1020
    %1025 = vst.msk [vmem:[#allocation2 + $0x18] sm:$0x80] %vm551, %v1021
    %s1026 = scalar_lea.vmem [#allocation6], 32
    %v1027 = vld [vmem:[%s1026] sm:$0xff]
    %v1028 = vld [vmem:[%s1026 + $0x8] sm:$0xff]
    %v1029 = vld [vmem:[%s1026 + $0x10] sm:$0xff]
    %v1030 = vld [vmem:[%s1026 + $0x18] sm:$0xff]
    %v1031 = vld [vmem:[#allocation2] sm:$0xff]
    %v1032 = vld [vmem:[#allocation2 + $0x8] sm:$0xff]
    %v1033 = vld [vmem:[#allocation2 + $0x10] sm:$0xff]
    %v1034 = vld [vmem:[#allocation2 + $0x18] sm:$0xff]
    %s1035 = scalar_lea.vmem %s4, 2
    %v1036 = vld [vmem:[%s1035] sm:$0x1]
    %v1038 = vperm.slane %v1036, 0
    %v1041 = vsel %vm130, %v1031, 0
    %v1044 = vsel %vm130, %v1032, 0
    %v1047 = vsel %vm130, %v1033, 0
    %v1050 = vsel %vm130, %v1034, 0
    %1052 = vmatpush.msra.mxu0 0.0
    %1053 = vmatpush.msra.mxu0 0.0
    %1054 = vmatpush.msra.mxu0 0.0
    %1055 = vmatpush.msra.mxu0 0.0
    %1056 = vmatpush.msra.mxu0 0.0
    %1057 = vmatpush.msra.mxu0 0.0
    %1058 = vmatpush.msra.mxu0 0.0
    %1059 = vmatpush.msra.mxu0 0.0
    %1060 = vmatpush.msra.mxu0 0.0
    %1061 = vmatpush.msra.mxu0 0.0
    %1062 = vmatpush.msra.mxu0 0.0
    %1063 = vmatpush.msra.mxu0 0.0
    %1064 = vmatpush.msra.mxu0 %v1030
    %1065 = vmatpush.msra.mxu0 %v1029
    %1066 = vmatpush.msra.mxu0 %v1028
    %1067 = vmatpush.msra.mxu0 %v1027
    %1068 = vmatmul.f32.gmra.mxu0 %v1041
    %v1069 = vpop.f32.mrf.mxu0
    %v1070 = vadd.f32 %v1038, %v1069
    %1071 = vmatmul.f32.gmra.mxu0 %v1044
    %v1072 = vpop.f32.mrf.mxu0
    %v1073 = vadd.f32 %v1038, %v1072
    %1074 = vmatmul.f32.gmra.mxu0 %v1047
    %v1075 = vpop.f32.mrf.mxu0
    %v1076 = vadd.f32 %v1038, %v1075
    %1077 = vmatmul.f32.gmra.mxu0 %v1050
    %v1078 = vpop.f32.mrf.mxu0
    %v1079 = vadd.f32 %v1038, %v1078
    %1080 = vdwg.mxu0
    %s1081 = scalar_lea.vmem [#allocation8], 64
    %v1082 = vld [vmem:[%s1081] sm:$0xff]
    %v1083 = vld [vmem:[%s1081 + $0x8] sm:$0xff]
    %v1084 = vld [vmem:[%s1081 + $0x10] sm:$0xff]
    %v1085 = vld [vmem:[%s1081 + $0x18] sm:$0xff]
    %v1090 = vrot.slane %v547, 7
    %v1091 = vrot.slane %v548, 6
    %v1092 = vsel %vm180, %v1091, %v1090
    %v1093 = vrot.slane %v549, 5
    %v1094 = vsel %vm183, %v1093, %v1092
    %v1095 = vrot.slane %v550, 4
    %v1096 = vsel %vm186, %v1095, %v1094
    %v1097 = vsel %vm130, %v1096, 0
    %1099 = vmatpush.msra.mxu0 0.0
    %1100 = vmatpush.msra.mxu0 0.0
    %1101 = vmatpush.msra.mxu0 0.0
    %1102 = vmatpush.msra.mxu0 0.0
    %1103 = vmatpush.msra.mxu0 0.0
    %1104 = vmatpush.msra.mxu0 0.0
    %1105 = vmatpush.msra.mxu0 0.0
    %1106 = vmatpush.msra.mxu0 0.0
    %1107 = vmatpush.msra.mxu0 0.0
    %1108 = vmatpush.msra.mxu0 0.0
    %1109 = vmatpush.msra.mxu0 0.0
    %1110 = vmatpush.msra.mxu0 0.0
    %1111 = vmatpush.msra.mxu0 %v1085
    %1112 = vmatpush.msra.mxu0 %v1084
    %1113 = vmatpush.msra.mxu0 %v1083
    %1114 = vmatpush.msra.mxu0 %v1082
    %1115 = vmatmul.f32.gmra.mxu0 %v1097
    %v1116 = vpop.f32.mrf.mxu0
    %v1117 = vadd.f32 0.0, %v1116
    %1118 = vdwg.mxu0
    %v1120 = vrot.slane %v1117, 1
    %v1121 = vrot.slane %v1117, 2
    %v1122 = vrot.slane %v1117, 3
    %v1127 = vadd.f32 %v1070, %v1117
    %v1128 = vadd.f32 %v1073, %v1120
    %v1129 = vadd.f32 %v1076, %v1121
    %v1130 = vadd.f32 %v1079, %v1122
    %v1131 = vtanh.pop %v1127
    %v1132 = vtanh.pop %v1128
    %v1133 = vtanh.pop %v1129
    %v1134 = vtanh.pop %v1130
    %1135 = vst.msk [vmem:[#allocation2] sm:$0x1] %vm170, %v1131
    %1136 = vst.msk [vmem:[#allocation2 + $0x8] sm:$0x1] %vm170, %v1132
    %1137 = vst.msk [vmem:[#allocation2 + $0x10] sm:$0x1] %vm170, %v1133
    %1138 = vst.msk [vmem:[#allocation2 + $0x18] sm:$0x1] %vm170, %v1134
    %v1143 = vrot.slane %v1132, 7
    %v1144 = vsel %vm180, %v1143, %v1131
    %v1145 = vrot.slane %v1133, 6
    %v1146 = vsel %vm183, %v1145, %v1144
    %v1147 = vrot.slane %v1134, 5
    %v1148 = vsel %vm186, %v1147, %v1146
    %v1149 = vsel %vm130, %v1148, 0
    %1151 = vmatpush.msra.mxu0 0.0
    %1152 = vmatpush.msra.mxu0 0.0
    %1153 = vmatpush.msra.mxu0 0.0
    %1154 = vmatpush.msra.mxu0 0.0
    %1155 = vmatpush.msra.mxu0 0.0
    %1156 = vmatpush.msra.mxu0 0.0
    %1157 = vmatpush.msra.mxu0 0.0
    %1158 = vmatpush.msra.mxu0 0.0
    %1159 = vmatpush.msra.mxu0 0.0
    %1160 = vmatpush.msra.mxu0 0.0
    %1161 = vmatpush.msra.mxu0 0.0
    %1162 = vmatpush.msra.mxu0 0.0
    %1163 = vmatpush.msra.mxu0 %v1085
    %1164 = vmatpush.msra.mxu0 %v1084
    %1165 = vmatpush.msra.mxu0 %v1083
    %1166 = vmatpush.msra.mxu0 %v1082
    %1167 = vmatmul.f32.gmra.mxu0 %v1149
    %v1168 = vpop.f32.mrf.mxu0
    %v1169 = vadd.f32 0.0, %v1168
    %1170 = vdwg.mxu0
    %v1172 = vrot.slane %v1169, 7
    %v1173 = vrot.slane %v1169, 1
    %v1174 = vrot.slane %v1169, 2
    %v1179 = vadd.f32 %v1070, %v1172
    %v1180 = vadd.f32 %v1073, %v1169
    %v1181 = vadd.f32 %v1076, %v1173
    %v1182 = vadd.f32 %v1079, %v1174
    %v1183 = vtanh.pop %v1179
    %v1184 = vtanh.pop %v1180
    %v1185 = vtanh.pop %v1181
    %v1186 = vtanh.pop %v1182
    %1187 = vst.msk [vmem:[#allocation2] sm:$0x2] %vm226, %v1183
    %1188 = vst.msk [vmem:[#allocation2 + $0x8] sm:$0x2] %vm226, %v1184
    %1189 = vst.msk [vmem:[#allocation2 + $0x10] sm:$0x2] %vm226, %v1185
    %1190 = vst.msk [vmem:[#allocation2 + $0x18] sm:$0x2] %vm226, %v1186
    %v1195 = vrot.slane %v1183, 1
    %v1196 = vsel %vm180, %v1184, %v1195
    %v1197 = vrot.slane %v1185, 7
    %v1198 = vsel %vm183, %v1197, %v1196
    %v1199 = vrot.slane %v1186, 6
    %v1200 = vsel %vm186, %v1199, %v1198
    %v1201 = vsel %vm130, %v1200, 0
    %1203 = vmatpush.msra.mxu0 0.0
    %1204 = vmatpush.msra.mxu0 0.0
    %1205 = vmatpush.msra.mxu0 0.0
    %1206 = vmatpush.msra.mxu0 0.0
    %1207 = vmatpush.msra.mxu0 0.0
    %1208 = vmatpush.msra.mxu0 0.0
    %1209 = vmatpush.msra.mxu0 0.0
    %1210 = vmatpush.msra.mxu0 0.0
    %1211 = vmatpush.msra.mxu0 0.0
    %1212 = vmatpush.msra.mxu0 0.0
    %1213 = vmatpush.msra.mxu0 0.0
    %1214 = vmatpush.msra.mxu0 0.0
    %1215 = vmatpush.msra.mxu0 %v1085
    %1216 = vmatpush.msra.mxu0 %v1084
    %1217 = vmatpush.msra.mxu0 %v1083
    %1218 = vmatpush.msra.mxu0 %v1082
    %1219 = vmatmul.f32.gmra.mxu0 %v1201
    %v1220 = vpop.f32.mrf.mxu0
    %v1221 = vadd.f32 0.0, %v1220
    %1222 = vdwg.mxu0
    %v1224 = vrot.slane %v1221, 6
    %v1225 = vrot.slane %v1221, 7
    %v1226 = vrot.slane %v1221, 1
    %v1231 = vadd.f32 %v1070, %v1224
    %v1232 = vadd.f32 %v1073, %v1225
    %v1233 = vadd.f32 %v1076, %v1221
    %v1234 = vadd.f32 %v1079, %v1226
    %v1235 = vtanh.pop %v1231
    %v1236 = vtanh.pop %v1232
    %v1237 = vtanh.pop %v1233
    %v1238 = vtanh.pop %v1234
    %1239 = vst.msk [vmem:[#allocation2] sm:$0x4] %vm279, %v1235
    %1240 = vst.msk [vmem:[#allocation2 + $0x8] sm:$0x4] %vm279, %v1236
    %1241 = vst.msk [vmem:[#allocation2 + $0x10] sm:$0x4] %vm279, %v1237
    %1242 = vst.msk [vmem:[#allocation2 + $0x18] sm:$0x4] %vm279, %v1238
    %v1247 = vrot.slane %v1235, 2
    %v1248 = vrot.slane %v1236, 1
    %v1249 = vsel %vm180, %v1248, %v1247
    %v1250 = vsel %vm183, %v1237, %v1249
    %v1251 = vrot.slane %v1238, 7
    %v1252 = vsel %vm186, %v1251, %v1250
    %v1253 = vsel %vm130, %v1252, 0
    %1255 = vmatpush.msra.mxu0 0.0
    %1256 = vmatpush.msra.mxu0 0.0
    %1257 = vmatpush.msra.mxu0 0.0
    %1258 = vmatpush.msra.mxu0 0.0
    %1259 = vmatpush.msra.mxu0 0.0
    %1260 = vmatpush.msra.mxu0 0.0
    %1261 = vmatpush.msra.mxu0 0.0
    %1262 = vmatpush.msra.mxu0 0.0
    %1263 = vmatpush.msra.mxu0 0.0
    %1264 = vmatpush.msra.mxu0 0.0
    %1265 = vmatpush.msra.mxu0 0.0
    %1266 = vmatpush.msra.mxu0 0.0
    %1267 = vmatpush.msra.mxu0 %v1085
    %1268 = vmatpush.msra.mxu0 %v1084
    %1269 = vmatpush.msra.mxu0 %v1083
    %1270 = vmatpush.msra.mxu0 %v1082
    %1271 = vmatmul.f32.gmra.mxu0 %v1253
    %v1272 = vpop.f32.mrf.mxu0
    %v1273 = vadd.f32 0.0, %v1272
    %1274 = vdwg.mxu0
    %v1276 = vrot.slane %v1273, 5
    %v1277 = vrot.slane %v1273, 6
    %v1278 = vrot.slane %v1273, 7
    %v1283 = vadd.f32 %v1070, %v1276
    %v1284 = vadd.f32 %v1073, %v1277
    %v1285 = vadd.f32 %v1076, %v1278
    %v1286 = vadd.f32 %v1079, %v1273
    %v1287 = vtanh.pop %v1283
    %v1288 = vtanh.pop %v1284
    %v1289 = vtanh.pop %v1285
    %v1290 = vtanh.pop %v1286
    %1291 = vst.msk [vmem:[#allocation2] sm:$0x8] %vm332, %v1287
    %1292 = vst.msk [vmem:[#allocation2 + $0x8] sm:$0x8] %vm332, %v1288
    %1293 = vst.msk [vmem:[#allocation2 + $0x10] sm:$0x8] %vm332, %v1289
    %1294 = vst.msk [vmem:[#allocation2 + $0x18] sm:$0x8] %vm332, %v1290
    %v1299 = vrot.slane %v1287, 3
    %v1300 = vrot.slane %v1288, 2
    %v1301 = vsel %vm180, %v1300, %v1299
    %v1302 = vrot.slane %v1289, 1
    %v1303 = vsel %vm183, %v1302, %v1301
    %v1304 = vsel %vm186, %v1290, %v1303
    %v1305 = vsel %vm130, %v1304, 0
    %1307 = vmatpush.msra.mxu0 0.0
    %1308 = vmatpush.msra.mxu0 0.0
    %1309 = vmatpush.msra.mxu0 0.0
    %1310 = vmatpush.msra.mxu0 0.0
    %1311 = vmatpush.msra.mxu0 0.0
    %1312 = vmatpush.msra.mxu0 0.0
    %1313 = vmatpush.msra.mxu0 0.0
    %1314 = vmatpush.msra.mxu0 0.0
    %1315 = vmatpush.msra.mxu0 0.0
    %1316 = vmatpush.msra.mxu0 0.0
    %1317 = vmatpush.msra.mxu0 0.0
    %1318 = vmatpush.msra.mxu0 0.0
    %1319 = vmatpush.msra.mxu0 %v1085
    %1320 = vmatpush.msra.mxu0 %v1084
    %1321 = vmatpush.msra.mxu0 %v1083
    %1322 = vmatpush.msra.mxu0 %v1082
    %1323 = vmatmul.f32.gmra.mxu0 %v1305
    %v1324 = vpop.f32.mrf.mxu0
    %v1325 = vadd.f32 0.0, %v1324
    %1326 = vdwg.mxu0
    %v1328 = vrot.slane %v1325, 4
    %v1329 = vrot.slane %v1325, 5
    %v1330 = vrot.slane %v1325, 6
    %v1331 = vrot.slane %v1325, 7
    %v1336 = vadd.f32 %v1070, %v1328
    %v1337 = vadd.f32 %v1073, %v1329
    %v1338 = vadd.f32 %v1076, %v1330
    %v1339 = vadd.f32 %v1079, %v1331
    %v1340 = vtanh.pop %v1336
    %v1341 = vtanh.pop %v1337
    %v1342 = vtanh.pop %v1338
    %v1343 = vtanh.pop %v1339
    %1344 = vst.msk [vmem:[#allocation2] sm:$0x10] %vm386, %v1340
    %1345 = vst.msk [vmem:[#allocation2 + $0x8] sm:$0x10] %vm386, %v1341
    %1346 = vst.msk [vmem:[#allocation2 + $0x10] sm:$0x10] %vm386, %v1342
    %1347 = vst.msk [vmem:[#allocation2 + $0x18] sm:$0x10] %vm386, %v1343
    %v1352 = vrot.slane %v1340, 4
    %v1353 = vrot.slane %v1341, 3
    %v1354 = vsel %vm180, %v1353, %v1352
    %v1355 = vrot.slane %v1342, 2
    %v1356 = vsel %vm183, %v1355, %v1354
    %v1357 = vrot.slane %v1343, 1
    %v1358 = vsel %vm186, %v1357, %v1356
    %v1359 = vsel %vm130, %v1358, 0
    %1361 = vmatpush.msra.mxu0 0.0
    %1362 = vmatpush.msra.mxu0 0.0
    %1363 = vmatpush.msra.mxu0 0.0
    %1364 = vmatpush.msra.mxu0 0.0
    %1365 = vmatpush.msra.mxu0 0.0
    %1366 = vmatpush.msra.mxu0 0.0
    %1367 = vmatpush.msra.mxu0 0.0
    %1368 = vmatpush.msra.mxu0 0.0
    %1369 = vmatpush.msra.mxu0 0.0
    %1370 = vmatpush.msra.mxu0 0.0
    %1371 = vmatpush.msra.mxu0 0.0
    %1372 = vmatpush.msra.mxu0 0.0
    %1373 = vmatpush.msra.mxu0 %v1085
    %1374 = vmatpush.msra.mxu0 %v1084
    %1375 = vmatpush.msra.mxu0 %v1083
    %1376 = vmatpush.msra.mxu0 %v1082
    %1377 = vmatmul.f32.gmra.mxu0 %v1359
    %v1378 = vpop.f32.mrf.mxu0
    %v1379 = vadd.f32 0.0, %v1378
    %1380 = vdwg.mxu0
    %v1382 = vrot.slane %v1379, 3
    %v1383 = vrot.slane %v1379, 4
    %v1384 = vrot.slane %v1379, 5
    %v1385 = vrot.slane %v1379, 6
    %v1390 = vadd.f32 %v1070, %v1382
    %v1391 = vadd.f32 %v1073, %v1383
    %v1392 = vadd.f32 %v1076, %v1384
    %v1393 = vadd.f32 %v1079, %v1385
    %v1394 = vtanh.pop %v1390
    %v1395 = vtanh.pop %v1391
    %v1396 = vtanh.pop %v1392
    %v1397 = vtanh.pop %v1393
    %1398 = vst.msk [vmem:[#allocation2] sm:$0x20] %vm441, %v1394
    %1399 = vst.msk [vmem:[#allocation2 + $0x8] sm:$0x20] %vm441, %v1395
    %1400 = vst.msk [vmem:[#allocation2 + $0x10] sm:$0x20] %vm441, %v1396
    %1401 = vst.msk [vmem:[#allocation2 + $0x18] sm:$0x20] %vm441, %v1397
    %v1406 = vrot.slane %v1394, 5
    %v1407 = vrot.slane %v1395, 4
    %v1408 = vsel %vm180, %v1407, %v1406
    %v1409 = vrot.slane %v1396, 3
    %v1410 = vsel %vm183, %v1409, %v1408
    %v1411 = vrot.slane %v1397, 2
    %v1412 = vsel %vm186, %v1411, %v1410
    %v1413 = vsel %vm130, %v1412, 0
    %1415 = vmatpush.msra.mxu0 0.0
    %1416 = vmatpush.msra.mxu0 0.0
    %1417 = vmatpush.msra.mxu0 0.0
    %1418 = vmatpush.msra.mxu0 0.0
    %1419 = vmatpush.msra.mxu0 0.0
    %1420 = vmatpush.msra.mxu0 0.0
    %1421 = vmatpush.msra.mxu0 0.0
    %1422 = vmatpush.msra.mxu0 0.0
    %1423 = vmatpush.msra.mxu0 0.0
    %1424 = vmatpush.msra.mxu0 0.0
    %1425 = vmatpush.msra.mxu0 0.0
    %1426 = vmatpush.msra.mxu0 0.0
    %1427 = vmatpush.msra.mxu0 %v1085
    %1428 = vmatpush.msra.mxu0 %v1084
    %1429 = vmatpush.msra.mxu0 %v1083
    %1430 = vmatpush.msra.mxu0 %v1082
    %1431 = vmatmul.f32.gmra.mxu0 %v1413
    %v1432 = vpop.f32.mrf.mxu0
    %v1433 = vadd.f32 0.0, %v1432
    %1434 = vdwg.mxu0
    %v1436 = vrot.slane %v1433, 2
    %v1437 = vrot.slane %v1433, 3
    %v1438 = vrot.slane %v1433, 4
    %v1439 = vrot.slane %v1433, 5
    %v1444 = vadd.f32 %v1070, %v1436
    %v1445 = vadd.f32 %v1073, %v1437
    %v1446 = vadd.f32 %v1076, %v1438
    %v1447 = vadd.f32 %v1079, %v1439
    %v1448 = vtanh.pop %v1444
    %v1449 = vtanh.pop %v1445
    %v1450 = vtanh.pop %v1446
    %v1451 = vtanh.pop %v1447
    %1452 = vst.msk [vmem:[#allocation2] sm:$0x40] %vm496, %v1448
    %1453 = vst.msk [vmem:[#allocation2 + $0x8] sm:$0x40] %vm496, %v1449
    %1454 = vst.msk [vmem:[#allocation2 + $0x10] sm:$0x40] %vm496, %v1450
    %1455 = vst.msk [vmem:[#allocation2 + $0x18] sm:$0x40] %vm496, %v1451
    %v1460 = vrot.slane %v1448, 6
    %v1461 = vrot.slane %v1449, 5
    %v1462 = vsel %vm180, %v1461, %v1460
    %v1463 = vrot.slane %v1450, 4
    %v1464 = vsel %vm183, %v1463, %v1462
    %v1465 = vrot.slane %v1451, 3
    %v1466 = vsel %vm186, %v1465, %v1464
    %v1467 = vsel %vm130, %v1466, 0
    %1469 = vmatpush.msra.mxu0 0.0
    %1470 = vmatpush.msra.mxu0 0.0
    %1471 = vmatpush.msra.mxu0 0.0
    %1472 = vmatpush.msra.mxu0 0.0
    %1473 = vmatpush.msra.mxu0 0.0
    %1474 = vmatpush.msra.mxu0 0.0
    %1475 = vmatpush.msra.mxu0 0.0
    %1476 = vmatpush.msra.mxu0 0.0
    %1477 = vmatpush.msra.mxu0 0.0
    %1478 = vmatpush.msra.mxu0 0.0
    %1479 = vmatpush.msra.mxu0 0.0
    %1480 = vmatpush.msra.mxu0 0.0
    %1481 = vmatpush.msra.mxu0 %v1085
    %1482 = vmatpush.msra.mxu0 %v1084
    %1483 = vmatpush.msra.mxu0 %v1083
    %1484 = vmatpush.msra.mxu0 %v1082
    %1485 = vmatmul.f32.gmra.mxu0 %v1467
    %v1486 = vpop.f32.mrf.mxu0
    %v1487 = vadd.f32 0.0, %v1486
    %1488 = vdwg.mxu0
    %v1490 = vrot.slane %v1487, 1
    %v1491 = vrot.slane %v1487, 2
    %v1492 = vrot.slane %v1487, 3
    %v1493 = vrot.slane %v1487, 4
    %v1498 = vadd.f32 %v1070, %v1490
    %v1499 = vadd.f32 %v1073, %v1491
    %v1500 = vadd.f32 %v1076, %v1492
    %v1501 = vadd.f32 %v1079, %v1493
    %v1502 = vtanh.pop %v1498
    %v1503 = vtanh.pop %v1499
    %v1504 = vtanh.pop %v1500
    %v1505 = vtanh.pop %v1501
    %1506 = vst.msk [vmem:[#allocation2] sm:$0x80] %vm551, %v1502
    %1507 = vst.msk [vmem:[#allocation2 + $0x8] sm:$0x80] %vm551, %v1503
    %1508 = vst.msk [vmem:[#allocation2 + $0x10] sm:$0x80] %vm551, %v1504
    %1509 = vst.msk [vmem:[#allocation2 + $0x18] sm:$0x80] %vm551, %v1505
    %s1510 = scalar_lea.vmem [#allocation6], 64
    %v1511 = vld [vmem:[%s1510] sm:$0xff]
    %v1512 = vld [vmem:[%s1510 + $0x8] sm:$0xff]
    %v1513 = vld [vmem:[%s1510 + $0x10] sm:$0xff]
    %v1514 = vld [vmem:[%s1510 + $0x18] sm:$0xff]
    %v1515 = vld [vmem:[#allocation2] sm:$0xff]
    %v1516 = vld [vmem:[#allocation2 + $0x8] sm:$0xff]
    %v1517 = vld [vmem:[#allocation2 + $0x10] sm:$0xff]
    %v1518 = vld [vmem:[#allocation2 + $0x18] sm:$0xff]
    %s1519 = scalar_lea.vmem %s4, 3
    %v1520 = vld [vmem:[%s1519] sm:$0x1]
    %v1522 = vperm.slane %v1520, 0
    %v1525 = vsel %vm130, %v1515, 0
    %v1528 = vsel %vm130, %v1516, 0
    %v1531 = vsel %vm130, %v1517, 0
    %v1534 = vsel %vm130, %v1518, 0
    %1536 = vmatpush.msra.mxu0 0.0
    %1537 = vmatpush.msra.mxu0 0.0
    %1538 = vmatpush.msra.mxu0 0.0
    %1539 = vmatpush.msra.mxu0 0.0
    %1540 = vmatpush.msra.mxu0 0.0
    %1541 = vmatpush.msra.mxu0 0.0
    %1542 = vmatpush.msra.mxu0 0.0
    %1543 = vmatpush.msra.mxu0 0.0
    %1544 = vmatpush.msra.mxu0 0.0
    %1545 = vmatpush.msra.mxu0 0.0
    %1546 = vmatpush.msra.mxu0 0.0
    %1547 = vmatpush.msra.mxu0 0.0
    %1548 = vmatpush.msra.mxu0 %v1514
    %1549 = vmatpush.msra.mxu0 %v1513
    %1550 = vmatpush.msra.mxu0 %v1512
    %1551 = vmatpush.msra.mxu0 %v1511
    %1552 = vmatmul.f32.gmra.mxu0 %v1525
    %v1553 = vpop.f32.mrf.mxu0
    %v1554 = vadd.f32 %v1522, %v1553
    %1555 = vmatmul.f32.gmra.mxu0 %v1528
    %v1556 = vpop.f32.mrf.mxu0
    %v1557 = vadd.f32 %v1522, %v1556
    %1558 = vmatmul.f32.gmra.mxu0 %v1531
    %v1559 = vpop.f32.mrf.mxu0
    %v1560 = vadd.f32 %v1522, %v1559
    %1561 = vmatmul.f32.gmra.mxu0 %v1534
    %v1562 = vpop.f32.mrf.mxu0
    %v1563 = vadd.f32 %v1522, %v1562
    %1564 = vdwg.mxu0
    %s1565 = scalar_lea.vmem [#allocation8], 96
    %v1566 = vld [vmem:[%s1565] sm:$0xff]
    %v1567 = vld [vmem:[%s1565 + $0x8] sm:$0xff]
    %v1568 = vld [vmem:[%s1565 + $0x10] sm:$0xff]
    %v1569 = vld [vmem:[%s1565 + $0x18] sm:$0xff]
    %v1574 = vrot.slane %v1018, 7
    %v1575 = vrot.slane %v1019, 6
    %v1576 = vsel %vm180, %v1575, %v1574
    %v1577 = vrot.slane %v1020, 5
    %v1578 = vsel %vm183, %v1577, %v1576
    %v1579 = vrot.slane %v1021, 4
    %v1580 = vsel %vm186, %v1579, %v1578
    %v1581 = vsel %vm130, %v1580, 0
    %1583 = vmatpush.msra.mxu0 0.0
    %1584 = vmatpush.msra.mxu0 0.0
    %1585 = vmatpush.msra.mxu0 0.0
    %1586 = vmatpush.msra.mxu0 0.0
    %1587 = vmatpush.msra.mxu0 0.0
    %1588 = vmatpush.msra.mxu0 0.0
    %1589 = vmatpush.msra.mxu0 0.0
    %1590 = vmatpush.msra.mxu0 0.0
    %1591 = vmatpush.msra.mxu0 0.0
    %1592 = vmatpush.msra.mxu0 0.0
    %1593 = vmatpush.msra.mxu0 0.0
    %1594 = vmatpush.msra.mxu0 0.0
    %1595 = vmatpush.msra.mxu0 %v1569
    %1596 = vmatpush.msra.mxu0 %v1568
    %1597 = vmatpush.msra.mxu0 %v1567
    %1598 = vmatpush.msra.mxu0 %v1566
    %1599 = vmatmul.f32.gmra.mxu0 %v1581
    %v1600 = vpop.f32.mrf.mxu0
    %v1601 = vadd.f32 0.0, %v1600
    %1602 = vdwg.mxu0
    %v1604 = vrot.slane %v1601, 1
    %v1605 = vrot.slane %v1601, 2
    %v1606 = vrot.slane %v1601, 3
    %v1611 = vadd.f32 %v1554, %v1601
    %v1612 = vadd.f32 %v1557, %v1604
    %v1613 = vadd.f32 %v1560, %v1605
    %v1614 = vadd.f32 %v1563, %v1606
    %v1615 = vtanh.pop %v1611
    %v1616 = vtanh.pop %v1612
    %v1617 = vtanh.pop %v1613
    %v1618 = vtanh.pop %v1614
    %1619 = vst.msk [vmem:[#allocation2] sm:$0x1] %vm170, %v1615
    %1620 = vst.msk [vmem:[#allocation2 + $0x8] sm:$0x1] %vm170, %v1616
    %1621 = vst.msk [vmem:[#allocation2 + $0x10] sm:$0x1] %vm170, %v1617
    %1622 = vst.msk [vmem:[#allocation2 + $0x18] sm:$0x1] %vm170, %v1618
    %v1627 = vrot.slane %v1616, 7
    %v1628 = vsel %vm180, %v1627, %v1615
    %v1629 = vrot.slane %v1617, 6
    %v1630 = vsel %vm183, %v1629, %v1628
    %v1631 = vrot.slane %v1618, 5
    %v1632 = vsel %vm186, %v1631, %v1630
    %v1633 = vsel %vm130, %v1632, 0
    %1635 = vmatpush.msra.mxu0 0.0
    %1636 = vmatpush.msra.mxu0 0.0
    %1637 = vmatpush.msra.mxu0 0.0
    %1638 = vmatpush.msra.mxu0 0.0
    %1639 = vmatpush.msra.mxu0 0.0
    %1640 = vmatpush.msra.mxu0 0.0
    %1641 = vmatpush.msra.mxu0 0.0
    %1642 = vmatpush.msra.mxu0 0.0
    %1643 = vmatpush.msra.mxu0 0.0
    %1644 = vmatpush.msra.mxu0 0.0
    %1645 = vmatpush.msra.mxu0 0.0
    %1646 = vmatpush.msra.mxu0 0.0
    %1647 = vmatpush.msra.mxu0 %v1569
    %1648 = vmatpush.msra.mxu0 %v1568
    %1649 = vmatpush.msra.mxu0 %v1567
    %1650 = vmatpush.msra.mxu0 %v1566
    %1651 = vmatmul.f32.gmra.mxu0 %v1633
    %v1652 = vpop.f32.mrf.mxu0
    %v1653 = vadd.f32 0.0, %v1652
    %1654 = vdwg.mxu0
    %v1656 = vrot.slane %v1653, 7
    %v1657 = vrot.slane %v1653, 1
    %v1658 = vrot.slane %v1653, 2
    %v1663 = vadd.f32 %v1554, %v1656
    %v1664 = vadd.f32 %v1557, %v1653
    %v1665 = vadd.f32 %v1560, %v1657
    %v1666 = vadd.f32 %v1563, %v1658
    %v1667 = vtanh.pop %v1663
    %v1668 = vtanh.pop %v1664
    %v1669 = vtanh.pop %v1665
    %v1670 = vtanh.pop %v1666
    %1671 = vst.msk [vmem:[#allocation2] sm:$0x2] %vm226, %v1667
    %1672 = vst.msk [vmem:[#allocation2 + $0x8] sm:$0x2] %vm226, %v1668
    %1673 = vst.msk [vmem:[#allocation2 + $0x10] sm:$0x2] %vm226, %v1669
    %1674 = vst.msk [vmem:[#allocation2 + $0x18] sm:$0x2] %vm226, %v1670
    %v1679 = vrot.slane %v1667, 1
    %v1680 = vsel %vm180, %v1668, %v1679
    %v1681 = vrot.slane %v1669, 7
    %v1682 = vsel %vm183, %v1681, %v1680
    %v1683 = vrot.slane %v1670, 6
    %v1684 = vsel %vm186, %v1683, %v1682
    %v1685 = vsel %vm130, %v1684, 0
    %1687 = vmatpush.msra.mxu0 0.0
    %1688 = vmatpush.msra.mxu0 0.0
    %1689 = vmatpush.msra.mxu0 0.0
    %1690 = vmatpush.msra.mxu0 0.0
    %1691 = vmatpush.msra.mxu0 0.0
    %1692 = vmatpush.msra.mxu0 0.0
    %1693 = vmatpush.msra.mxu0 0.0
    %1694 = vmatpush.msra.mxu0 0.0
    %1695 = vmatpush.msra.mxu0 0.0
    %1696 = vmatpush.msra.mxu0 0.0
    %1697 = vmatpush.msra.mxu0 0.0
    %1698 = vmatpush.msra.mxu0 0.0
    %1699 = vmatpush.msra.mxu0 %v1569
    %1700 = vmatpush.msra.mxu0 %v1568
    %1701 = vmatpush.msra.mxu0 %v1567
    %1702 = vmatpush.msra.mxu0 %v1566
    %1703 = vmatmul.f32.gmra.mxu0 %v1685
    %v1704 = vpop.f32.mrf.mxu0
    %v1705 = vadd.f32 0.0, %v1704
    %1706 = vdwg.mxu0
    %v1708 = vrot.slane %v1705, 6
    %v1709 = vrot.slane %v1705, 7
    %v1710 = vrot.slane %v1705, 1
    %v1715 = vadd.f32 %v1554, %v1708
    %v1716 = vadd.f32 %v1557, %v1709
    %v1717 = vadd.f32 %v1560, %v1705
    %v1718 = vadd.f32 %v1563, %v1710
    %v1719 = vtanh.pop %v1715
    %v1720 = vtanh.pop %v1716
    %v1721 = vtanh.pop %v1717
    %v1722 = vtanh.pop %v1718
    %1723 = vst.msk [vmem:[#allocation2] sm:$0x4] %vm279, %v1719
    %1724 = vst.msk [vmem:[#allocation2 + $0x8] sm:$0x4] %vm279, %v1720
    %1725 = vst.msk [vmem:[#allocation2 + $0x10] sm:$0x4] %vm279, %v1721
    %1726 = vst.msk [vmem:[#allocation2 + $0x18] sm:$0x4] %vm279, %v1722
    %v1731 = vrot.slane %v1719, 2
    %v1732 = vrot.slane %v1720, 1
    %v1733 = vsel %vm180, %v1732, %v1731
    %v1734 = vsel %vm183, %v1721, %v1733
    %v1735 = vrot.slane %v1722, 7
    %v1736 = vsel %vm186, %v1735, %v1734
    %v1737 = vsel %vm130, %v1736, 0
    %1739 = vmatpush.msra.mxu0 0.0
    %1740 = vmatpush.msra.mxu0 0.0
    %1741 = vmatpush.msra.mxu0 0.0
    %1742 = vmatpush.msra.mxu0 0.0
    %1743 = vmatpush.msra.mxu0 0.0
    %1744 = vmatpush.msra.mxu0 0.0
    %1745 = vmatpush.msra.mxu0 0.0
    %1746 = vmatpush.msra.mxu0 0.0
    %1747 = vmatpush.msra.mxu0 0.0
    %1748 = vmatpush.msra.mxu0 0.0
    %1749 = vmatpush.msra.mxu0 0.0
    %1750 = vmatpush.msra.mxu0 0.0
    %1751 = vmatpush.msra.mxu0 %v1569
    %1752 = vmatpush.msra.mxu0 %v1568
    %1753 = vmatpush.msra.mxu0 %v1567
    %1754 = vmatpush.msra.mxu0 %v1566
    %1755 = vmatmul.f32.gmra.mxu0 %v1737
    %v1756 = vpop.f32.mrf.mxu0
    %v1757 = vadd.f32 0.0, %v1756
    %1758 = vdwg.mxu0
    %v1760 = vrot.slane %v1757, 5
    %v1761 = vrot.slane %v1757, 6
    %v1762 = vrot.slane %v1757, 7
    %v1767 = vadd.f32 %v1554, %v1760
    %v1768 = vadd.f32 %v1557, %v1761
    %v1769 = vadd.f32 %v1560, %v1762
    %v1770 = vadd.f32 %v1563, %v1757
    %v1771 = vtanh.pop %v1767
    %v1772 = vtanh.pop %v1768
    %v1773 = vtanh.pop %v1769
    %v1774 = vtanh.pop %v1770
    %1775 = vst.msk [vmem:[#allocation2] sm:$0x8] %vm332, %v1771
    %1776 = vst.msk [vmem:[#allocation2 + $0x8] sm:$0x8] %vm332, %v1772
    %1777 = vst.msk [vmem:[#allocation2 + $0x10] sm:$0x8] %vm332, %v1773
    %1778 = vst.msk [vmem:[#allocation2 + $0x18] sm:$0x8] %vm332, %v1774
    %v1783 = vrot.slane %v1771, 3
    %v1784 = vrot.slane %v1772, 2
    %v1785 = vsel %vm180, %v1784, %v1783
    %v1786 = vrot.slane %v1773, 1
    %v1787 = vsel %vm183, %v1786, %v1785
    %v1788 = vsel %vm186, %v1774, %v1787
    %v1789 = vsel %vm130, %v1788, 0
    %1791 = vmatpush.msra.mxu0 0.0
    %1792 = vmatpush.msra.mxu0 0.0
    %1793 = vmatpush.msra.mxu0 0.0
    %1794 = vmatpush.msra.mxu0 0.0
    %1795 = vmatpush.msra.mxu0 0.0
    %1796 = vmatpush.msra.mxu0 0.0
    %1797 = vmatpush.msra.mxu0 0.0
    %1798 = vmatpush.msra.mxu0 0.0
    %1799 = vmatpush.msra.mxu0 0.0
    %1800 = vmatpush.msra.mxu0 0.0
    %1801 = vmatpush.msra.mxu0 0.0
    %1802 = vmatpush.msra.mxu0 0.0
    %1803 = vmatpush.msra.mxu0 %v1569
    %1804 = vmatpush.msra.mxu0 %v1568
    %1805 = vmatpush.msra.mxu0 %v1567
    %1806 = vmatpush.msra.mxu0 %v1566
    %1807 = vmatmul.f32.gmra.mxu0 %v1789
    %v1808 = vpop.f32.mrf.mxu0
    %v1809 = vadd.f32 0.0, %v1808
    %1810 = vdwg.mxu0
    %v1812 = vrot.slane %v1809, 4
    %v1813 = vrot.slane %v1809, 5
    %v1814 = vrot.slane %v1809, 6
    %v1815 = vrot.slane %v1809, 7
    %v1820 = vadd.f32 %v1554, %v1812
    %v1821 = vadd.f32 %v1557, %v1813
    %v1822 = vadd.f32 %v1560, %v1814
    %v1823 = vadd.f32 %v1563, %v1815
    %v1824 = vtanh.pop %v1820
    %v1825 = vtanh.pop %v1821
    %v1826 = vtanh.pop %v1822
    %v1827 = vtanh.pop %v1823
    %1828 = vst.msk [vmem:[#allocation2] sm:$0x10] %vm386, %v1824
    %1829 = vst.msk [vmem:[#allocation2 + $0x8] sm:$0x10] %vm386, %v1825
    %1830 = vst.msk [vmem:[#allocation2 + $0x10] sm:$0x10] %vm386, %v1826
    %1831 = vst.msk [vmem:[#allocation2 + $0x18] sm:$0x10] %vm386, %v1827
    %v1836 = vrot.slane %v1824, 4
    %v1837 = vrot.slane %v1825, 3
    %v1838 = vsel %vm180, %v1837, %v1836
    %v1839 = vrot.slane %v1826, 2
    %v1840 = vsel %vm183, %v1839, %v1838
    %v1841 = vrot.slane %v1827, 1
    %v1842 = vsel %vm186, %v1841, %v1840
    %v1843 = vsel %vm130, %v1842, 0
    %1845 = vmatpush.msra.mxu0 0.0
    %1846 = vmatpush.msra.mxu0 0.0
    %1847 = vmatpush.msra.mxu0 0.0
    %1848 = vmatpush.msra.mxu0 0.0
    %1849 = vmatpush.msra.mxu0 0.0
    %1850 = vmatpush.msra.mxu0 0.0
    %1851 = vmatpush.msra.mxu0 0.0
    %1852 = vmatpush.msra.mxu0 0.0
    %1853 = vmatpush.msra.mxu0 0.0
    %1854 = vmatpush.msra.mxu0 0.0
    %1855 = vmatpush.msra.mxu0 0.0
    %1856 = vmatpush.msra.mxu0 0.0
    %1857 = vmatpush.msra.mxu0 %v1569
    %1858 = vmatpush.msra.mxu0 %v1568
    %1859 = vmatpush.msra.mxu0 %v1567
    %1860 = vmatpush.msra.mxu0 %v1566
    %1861 = vmatmul.f32.gmra.mxu0 %v1843
    %v1862 = vpop.f32.mrf.mxu0
    %v1863 = vadd.f32 0.0, %v1862
    %1864 = vdwg.mxu0
    %v1866 = vrot.slane %v1863, 3
    %v1867 = vrot.slane %v1863, 4
    %v1868 = vrot.slane %v1863, 5
    %v1869 = vrot.slane %v1863, 6
    %v1874 = vadd.f32 %v1554, %v1866
    %v1875 = vadd.f32 %v1557, %v1867
    %v1876 = vadd.f32 %v1560, %v1868
    %v1877 = vadd.f32 %v1563, %v1869
    %v1878 = vtanh.pop %v1874
    %v1879 = vtanh.pop %v1875
    %v1880 = vtanh.pop %v1876
    %v1881 = vtanh.pop %v1877
    %1882 = vst.msk [vmem:[#allocation2] sm:$0x20] %vm441, %v1878
    %1883 = vst.msk [vmem:[#allocation2 + $0x8] sm:$0x20] %vm441, %v1879
    %1884 = vst.msk [vmem:[#allocation2 + $0x10] sm:$0x20] %vm441, %v1880
    %1885 = vst.msk [vmem:[#allocation2 + $0x18] sm:$0x20] %vm441, %v1881
    %v1890 = vrot.slane %v1878, 5
    %v1891 = vrot.slane %v1879, 4
    %v1892 = vsel %vm180, %v1891, %v1890
    %v1893 = vrot.slane %v1880, 3
    %v1894 = vsel %vm183, %v1893, %v1892
    %v1895 = vrot.slane %v1881, 2
    %v1896 = vsel %vm186, %v1895, %v1894
    %v1897 = vsel %vm130, %v1896, 0
    %1899 = vmatpush.msra.mxu0 0.0
    %1900 = vmatpush.msra.mxu0 0.0
    %1901 = vmatpush.msra.mxu0 0.0
    %1902 = vmatpush.msra.mxu0 0.0
    %1903 = vmatpush.msra.mxu0 0.0
    %1904 = vmatpush.msra.mxu0 0.0
    %1905 = vmatpush.msra.mxu0 0.0
    %1906 = vmatpush.msra.mxu0 0.0
    %1907 = vmatpush.msra.mxu0 0.0
    %1908 = vmatpush.msra.mxu0 0.0
    %1909 = vmatpush.msra.mxu0 0.0
    %1910 = vmatpush.msra.mxu0 0.0
    %1911 = vmatpush.msra.mxu0 %v1569
    %1912 = vmatpush.msra.mxu0 %v1568
    %1913 = vmatpush.msra.mxu0 %v1567
    %1914 = vmatpush.msra.mxu0 %v1566
    %1915 = vmatmul.f32.gmra.mxu0 %v1897
    %v1916 = vpop.f32.mrf.mxu0
    %v1917 = vadd.f32 0.0, %v1916
    %1918 = vdwg.mxu0
    %v1920 = vrot.slane %v1917, 2
    %v1921 = vrot.slane %v1917, 3
    %v1922 = vrot.slane %v1917, 4
    %v1923 = vrot.slane %v1917, 5
    %v1928 = vadd.f32 %v1554, %v1920
    %v1929 = vadd.f32 %v1557, %v1921
    %v1930 = vadd.f32 %v1560, %v1922
    %v1931 = vadd.f32 %v1563, %v1923
    %v1932 = vtanh.pop %v1928
    %v1933 = vtanh.pop %v1929
    %v1934 = vtanh.pop %v1930
    %v1935 = vtanh.pop %v1931
    %1936 = vst.msk [vmem:[#allocation2] sm:$0x40] %vm496, %v1932
    %1937 = vst.msk [vmem:[#allocation2 + $0x8] sm:$0x40] %vm496, %v1933
    %1938 = vst.msk [vmem:[#allocation2 + $0x10] sm:$0x40] %vm496, %v1934
    %1939 = vst.msk [vmem:[#allocation2 + $0x18] sm:$0x40] %vm496, %v1935
    %v1944 = vrot.slane %v1932, 6
    %v1945 = vrot.slane %v1933, 5
    %v1946 = vsel %vm180, %v1945, %v1944
    %v1947 = vrot.slane %v1934, 4
    %v1948 = vsel %vm183, %v1947, %v1946
    %v1949 = vrot.slane %v1935, 3
    %v1950 = vsel %vm186, %v1949, %v1948
    %v1951 = vsel %vm130, %v1950, 0
    %1953 = vmatpush.msra.mxu0 0.0
    %1954 = vmatpush.msra.mxu0 0.0
    %1955 = vmatpush.msra.mxu0 0.0
    %1956 = vmatpush.msra.mxu0 0.0
    %1957 = vmatpush.msra.mxu0 0.0
    %1958 = vmatpush.msra.mxu0 0.0
    %1959 = vmatpush.msra.mxu0 0.0
    %1960 = vmatpush.msra.mxu0 0.0
    %1961 = vmatpush.msra.mxu0 0.0
    %1962 = vmatpush.msra.mxu0 0.0
    %1963 = vmatpush.msra.mxu0 0.0
    %1964 = vmatpush.msra.mxu0 0.0
    %1965 = vmatpush.msra.mxu0 %v1569
    %1966 = vmatpush.msra.mxu0 %v1568
    %1967 = vmatpush.msra.mxu0 %v1567
    %1968 = vmatpush.msra.mxu0 %v1566
    %1969 = vmatmul.f32.gmra.mxu0 %v1951
    %v1970 = vpop.f32.mrf.mxu0
    %v1971 = vadd.f32 0.0, %v1970
    %1972 = vdwg.mxu0
    %v1974 = vrot.slane %v1971, 1
    %v1975 = vrot.slane %v1971, 2
    %v1976 = vrot.slane %v1971, 3
    %v1977 = vrot.slane %v1971, 4
    %v1982 = vadd.f32 %v1554, %v1974
    %v1983 = vadd.f32 %v1557, %v1975
    %v1984 = vadd.f32 %v1560, %v1976
    %v1985 = vadd.f32 %v1563, %v1977
    %v1986 = vtanh.pop %v1982
    %v1987 = vtanh.pop %v1983
    %v1988 = vtanh.pop %v1984
    %v1989 = vtanh.pop %v1985
    %1990 = vst.msk [vmem:[#allocation2] sm:$0x80] %vm551, %v1986
    %1991 = vst.msk [vmem:[#allocation2 + $0x8] sm:$0x80] %vm551, %v1987
    %1992 = vst.msk [vmem:[#allocation2 + $0x10] sm:$0x80] %vm551, %v1988
    %1993 = vst.msk [vmem:[#allocation2 + $0x18] sm:$0x80] %vm551, %v1989
    %s1994 = scalar_lea.vmem [#allocation6], 96
    %v1995 = vld [vmem:[%s1994] sm:$0xff]
    %v1996 = vld [vmem:[%s1994 + $0x8] sm:$0xff]
    %v1997 = vld [vmem:[%s1994 + $0x10] sm:$0xff]
    %v1998 = vld [vmem:[%s1994 + $0x18] sm:$0xff]
    %v1999 = vld [vmem:[#allocation2] sm:$0xff]
    %v2000 = vld [vmem:[#allocation2 + $0x8] sm:$0xff]
    %v2001 = vld [vmem:[#allocation2 + $0x10] sm:$0xff]
    %v2002 = vld [vmem:[#allocation2 + $0x18] sm:$0xff]
    %s2003 = scalar_lea.vmem %s4, 4
    %v2004 = vld [vmem:[%s2003] sm:$0x1]
    %v2006 = vperm.slane %v2004, 0
    %v2009 = vsel %vm130, %v1999, 0
    %v2012 = vsel %vm130, %v2000, 0
    %v2015 = vsel %vm130, %v2001, 0
    %v2018 = vsel %vm130, %v2002, 0
    %2020 = vmatpush.msra.mxu0 0.0
    %2021 = vmatpush.msra.mxu0 0.0
    %2022 = vmatpush.msra.mxu0 0.0
    %2023 = vmatpush.msra.mxu0 0.0
    %2024 = vmatpush.msra.mxu0 0.0
    %2025 = vmatpush.msra.mxu0 0.0
    %2026 = vmatpush.msra.mxu0 0.0
    %2027 = vmatpush.msra.mxu0 0.0
    %2028 = vmatpush.msra.mxu0 0.0
    %2029 = vmatpush.msra.mxu0 0.0
    %2030 = vmatpush.msra.mxu0 0.0
    %2031 = vmatpush.msra.mxu0 0.0
    %2032 = vmatpush.msra.mxu0 %v1998
    %2033 = vmatpush.msra.mxu0 %v1997
    %2034 = vmatpush.msra.mxu0 %v1996
    %2035 = vmatpush.msra.mxu0 %v1995
    %2036 = vmatmul.f32.gmra.mxu0 %v2009
    %v2037 = vpop.f32.mrf.mxu0
    %v2038 = vadd.f32 %v2006, %v2037
    %2039 = vmatmul.f32.gmra.mxu0 %v2012
    %v2040 = vpop.f32.mrf.mxu0
    %v2041 = vadd.f32 %v2006, %v2040
    %2042 = vmatmul.f32.gmra.mxu0 %v2015
    %v2043 = vpop.f32.mrf.mxu0
    %v2044 = vadd.f32 %v2006, %v2043
    %2045 = vmatmul.f32.gmra.mxu0 %v2018
    %v2046 = vpop.f32.mrf.mxu0
    %v2047 = vadd.f32 %v2006, %v2046
    %2048 = vdwg.mxu0
    %s2049 = scalar_lea.vmem [#allocation8], 128
    %v2050 = vld [vmem:[%s2049] sm:$0xff]
    %v2051 = vld [vmem:[%s2049 + $0x8] sm:$0xff]
    %v2052 = vld [vmem:[%s2049 + $0x10] sm:$0xff]
    %v2053 = vld [vmem:[%s2049 + $0x18] sm:$0xff]
    %v2058 = vrot.slane %v1502, 7
    %v2059 = vrot.slane %v1503, 6
    %v2060 = vsel %vm180, %v2059, %v2058
    %v2061 = vrot.slane %v1504, 5
    %v2062 = vsel %vm183, %v2061, %v2060
    %v2063 = vrot.slane %v1505, 4
    %v2064 = vsel %vm186, %v2063, %v2062
    %v2065 = vsel %vm130, %v2064, 0
    %2067 = vmatpush.msra.mxu0 0.0
    %2068 = vmatpush.msra.mxu0 0.0
    %2069 = vmatpush.msra.mxu0 0.0
    %2070 = vmatpush.msra.mxu0 0.0
    %2071 = vmatpush.msra.mxu0 0.0
    %2072 = vmatpush.msra.mxu0 0.0
    %2073 = vmatpush.msra.mxu0 0.0
    %2074 = vmatpush.msra.mxu0 0.0
    %2075 = vmatpush.msra.mxu0 0.0
    %2076 = vmatpush.msra.mxu0 0.0
    %2077 = vmatpush.msra.mxu0 0.0
    %2078 = vmatpush.msra.mxu0 0.0
    %2079 = vmatpush.msra.mxu0 %v2053
    %2080 = vmatpush.msra.mxu0 %v2052
    %2081 = vmatpush.msra.mxu0 %v2051
    %2082 = vmatpush.msra.mxu0 %v2050
    %2083 = vmatmul.f32.gmra.mxu0 %v2065
    %v2084 = vpop.f32.mrf.mxu0
    %v2085 = vadd.f32 0.0, %v2084
    %2086 = vdwg.mxu0
    %v2088 = vrot.slane %v2085, 1
    %v2089 = vrot.slane %v2085, 2
    %v2090 = vrot.slane %v2085, 3
    %v2095 = vadd.f32 %v2038, %v2085
    %v2096 = vadd.f32 %v2041, %v2088
    %v2097 = vadd.f32 %v2044, %v2089
    %v2098 = vadd.f32 %v2047, %v2090
    %v2099 = vtanh.pop %v2095
    %v2100 = vtanh.pop %v2096
    %v2101 = vtanh.pop %v2097
    %v2102 = vtanh.pop %v2098
    %2103 = vst.msk [vmem:[#allocation2] sm:$0x1] %vm170, %v2099
    %2104 = vst.msk [vmem:[#allocation2 + $0x8] sm:$0x1] %vm170, %v2100
    %2105 = vst.msk [vmem:[#allocation2 + $0x10] sm:$0x1] %vm170, %v2101
    %2106 = vst.msk [vmem:[#allocation2 + $0x18] sm:$0x1] %vm170, %v2102
    %v2111 = vrot.slane %v2100, 7
    %v2112 = vsel %vm180, %v2111, %v2099
    %v2113 = vrot.slane %v2101, 6
    %v2114 = vsel %vm183, %v2113, %v2112
    %v2115 = vrot.slane %v2102, 5
    %v2116 = vsel %vm186, %v2115, %v2114
    %v2117 = vsel %vm130, %v2116, 0
    %2119 = vmatpush.msra.mxu0 0.0
    %2120 = vmatpush.msra.mxu0 0.0
    %2121 = vmatpush.msra.mxu0 0.0
    %2122 = vmatpush.msra.mxu0 0.0
    %2123 = vmatpush.msra.mxu0 0.0
    %2124 = vmatpush.msra.mxu0 0.0
    %2125 = vmatpush.msra.mxu0 0.0
    %2126 = vmatpush.msra.mxu0 0.0
    %2127 = vmatpush.msra.mxu0 0.0
    %2128 = vmatpush.msra.mxu0 0.0
    %2129 = vmatpush.msra.mxu0 0.0
    %2130 = vmatpush.msra.mxu0 0.0
    %2131 = vmatpush.msra.mxu0 %v2053
    %2132 = vmatpush.msra.mxu0 %v2052
    %2133 = vmatpush.msra.mxu0 %v2051
    %2134 = vmatpush.msra.mxu0 %v2050
    %2135 = vmatmul.f32.gmra.mxu0 %v2117
    %v2136 = vpop.f32.mrf.mxu0
    %v2137 = vadd.f32 0.0, %v2136
    %2138 = vdwg.mxu0
    %v2140 = vrot.slane %v2137, 7
    %v2141 = vrot.slane %v2137, 1
    %v2142 = vrot.slane %v2137, 2
    %v2147 = vadd.f32 %v2038, %v2140
    %v2148 = vadd.f32 %v2041, %v2137
    %v2149 = vadd.f32 %v2044, %v2141
    %v2150 = vadd.f32 %v2047, %v2142
    %v2151 = vtanh.pop %v2147
    %v2152 = vtanh.pop %v2148
    %v2153 = vtanh.pop %v2149
    %v2154 = vtanh.pop %v2150
    %2155 = vst.msk [vmem:[#allocation2] sm:$0x2] %vm226, %v2151
    %2156 = vst.msk [vmem:[#allocation2 + $0x8] sm:$0x2] %vm226, %v2152
    %2157 = vst.msk [vmem:[#allocation2 + $0x10] sm:$0x2] %vm226, %v2153
    %2158 = vst.msk [vmem:[#allocation2 + $0x18] sm:$0x2] %vm226, %v2154
    %v2163 = vrot.slane %v2151, 1
    %v2164 = vsel %vm180, %v2152, %v2163
    %v2165 = vrot.slane %v2153, 7
    %v2166 = vsel %vm183, %v2165, %v2164
    %v2167 = vrot.slane %v2154, 6
    %v2168 = vsel %vm186, %v2167, %v2166
    %v2169 = vsel %vm130, %v2168, 0
    %2171 = vmatpush.msra.mxu0 0.0
    %2172 = vmatpush.msra.mxu0 0.0
    %2173 = vmatpush.msra.mxu0 0.0
    %2174 = vmatpush.msra.mxu0 0.0
    %2175 = vmatpush.msra.mxu0 0.0
    %2176 = vmatpush.msra.mxu0 0.0
    %2177 = vmatpush.msra.mxu0 0.0
    %2178 = vmatpush.msra.mxu0 0.0
    %2179 = vmatpush.msra.mxu0 0.0
    %2180 = vmatpush.msra.mxu0 0.0
    %2181 = vmatpush.msra.mxu0 0.0
    %2182 = vmatpush.msra.mxu0 0.0
    %2183 = vmatpush.msra.mxu0 %v2053
    %2184 = vmatpush.msra.mxu0 %v2052
    %2185 = vmatpush.msra.mxu0 %v2051
    %2186 = vmatpush.msra.mxu0 %v2050
    %2187 = vmatmul.f32.gmra.mxu0 %v2169
    %v2188 = vpop.f32.mrf.mxu0
    %v2189 = vadd.f32 0.0, %v2188
    %2190 = vdwg.mxu0
    %v2192 = vrot.slane %v2189, 6
    %v2193 = vrot.slane %v2189, 7
    %v2194 = vrot.slane %v2189, 1
    %v2199 = vadd.f32 %v2038, %v2192
    %v2200 = vadd.f32 %v2041, %v2193
    %v2201 = vadd.f32 %v2044, %v2189
    %v2202 = vadd.f32 %v2047, %v2194
    %v2203 = vtanh.pop %v2199
    %v2204 = vtanh.pop %v2200
    %v2205 = vtanh.pop %v2201
    %v2206 = vtanh.pop %v2202
    %2207 = vst.msk [vmem:[#allocation2] sm:$0x4] %vm279, %v2203
    %2208 = vst.msk [vmem:[#allocation2 + $0x8] sm:$0x4] %vm279, %v2204
    %2209 = vst.msk [vmem:[#allocation2 + $0x10] sm:$0x4] %vm279, %v2205
    %2210 = vst.msk [vmem:[#allocation2 + $0x18] sm:$0x4] %vm279, %v2206
    %v2215 = vrot.slane %v2203, 2
    %v2216 = vrot.slane %v2204, 1
    %v2217 = vsel %vm180, %v2216, %v2215
    %v2218 = vsel %vm183, %v2205, %v2217
    %v2219 = vrot.slane %v2206, 7
    %v2220 = vsel %vm186, %v2219, %v2218
    %v2221 = vsel %vm130, %v2220, 0
    %2223 = vmatpush.msra.mxu0 0.0
    %2224 = vmatpush.msra.mxu0 0.0
    %2225 = vmatpush.msra.mxu0 0.0
    %2226 = vmatpush.msra.mxu0 0.0
    %2227 = vmatpush.msra.mxu0 0.0
    %2228 = vmatpush.msra.mxu0 0.0
    %2229 = vmatpush.msra.mxu0 0.0
    %2230 = vmatpush.msra.mxu0 0.0
    %2231 = vmatpush.msra.mxu0 0.0
    %2232 = vmatpush.msra.mxu0 0.0
    %2233 = vmatpush.msra.mxu0 0.0
    %2234 = vmatpush.msra.mxu0 0.0
    %2235 = vmatpush.msra.mxu0 %v2053
    %2236 = vmatpush.msra.mxu0 %v2052
    %2237 = vmatpush.msra.mxu0 %v2051
    %2238 = vmatpush.msra.mxu0 %v2050
    %2239 = vmatmul.f32.gmra.mxu0 %v2221
    %v2240 = vpop.f32.mrf.mxu0
    %v2241 = vadd.f32 0.0, %v2240
    %2242 = vdwg.mxu0
    %v2244 = vrot.slane %v2241, 5
    %v2245 = vrot.slane %v2241, 6
    %v2246 = vrot.slane %v2241, 7
    %v2251 = vadd.f32 %v2038, %v2244
    %v2252 = vadd.f32 %v2041, %v2245
    %v2253 = vadd.f32 %v2044, %v2246
    %v2254 = vadd.f32 %v2047, %v2241
    %v2255 = vtanh.pop %v2251
    %v2256 = vtanh.pop %v2252
    %v2257 = vtanh.pop %v2253
    %v2258 = vtanh.pop %v2254
    %2259 = vst.msk [vmem:[#allocation2] sm:$0x8] %vm332, %v2255
    %2260 = vst.msk [vmem:[#allocation2 + $0x8] sm:$0x8] %vm332, %v2256
    %2261 = vst.msk [vmem:[#allocation2 + $0x10] sm:$0x8] %vm332, %v2257
    %2262 = vst.msk [vmem:[#allocation2 + $0x18] sm:$0x8] %vm332, %v2258
    %v2267 = vrot.slane %v2255, 3
    %v2268 = vrot.slane %v2256, 2
    %v2269 = vsel %vm180, %v2268, %v2267
    %v2270 = vrot.slane %v2257, 1
    %v2271 = vsel %vm183, %v2270, %v2269
    %v2272 = vsel %vm186, %v2258, %v2271
    %v2273 = vsel %vm130, %v2272, 0
    %2275 = vmatpush.msra.mxu0 0.0
    %2276 = vmatpush.msra.mxu0 0.0
    %2277 = vmatpush.msra.mxu0 0.0
    %2278 = vmatpush.msra.mxu0 0.0
    %2279 = vmatpush.msra.mxu0 0.0
    %2280 = vmatpush.msra.mxu0 0.0
    %2281 = vmatpush.msra.mxu0 0.0
    %2282 = vmatpush.msra.mxu0 0.0
    %2283 = vmatpush.msra.mxu0 0.0
    %2284 = vmatpush.msra.mxu0 0.0
    %2285 = vmatpush.msra.mxu0 0.0
    %2286 = vmatpush.msra.mxu0 0.0
    %2287 = vmatpush.msra.mxu0 %v2053
    %2288 = vmatpush.msra.mxu0 %v2052
    %2289 = vmatpush.msra.mxu0 %v2051
    %2290 = vmatpush.msra.mxu0 %v2050
    %2291 = vmatmul.f32.gmra.mxu0 %v2273
    %v2292 = vpop.f32.mrf.mxu0
    %v2293 = vadd.f32 0.0, %v2292
    %2294 = vdwg.mxu0
    %v2296 = vrot.slane %v2293, 4
    %v2297 = vrot.slane %v2293, 5
    %v2298 = vrot.slane %v2293, 6
    %v2299 = vrot.slane %v2293, 7
    %v2304 = vadd.f32 %v2038, %v2296
    %v2305 = vadd.f32 %v2041, %v2297
    %v2306 = vadd.f32 %v2044, %v2298
    %v2307 = vadd.f32 %v2047, %v2299
    %v2308 = vtanh.pop %v2304
    %v2309 = vtanh.pop %v2305
    %v2310 = vtanh.pop %v2306
    %v2311 = vtanh.pop %v2307
    %2312 = vst.msk [vmem:[#allocation2] sm:$0x10] %vm386, %v2308
    %2313 = vst.msk [vmem:[#allocation2 + $0x8] sm:$0x10] %vm386, %v2309
    %2314 = vst.msk [vmem:[#allocation2 + $0x10] sm:$0x10] %vm386, %v2310
    %2315 = vst.msk [vmem:[#allocation2 + $0x18] sm:$0x10] %vm386, %v2311
    %v2320 = vrot.slane %v2308, 4
    %v2321 = vrot.slane %v2309, 3
    %v2322 = vsel %vm180, %v2321, %v2320
    %v2323 = vrot.slane %v2310, 2
    %v2324 = vsel %vm183, %v2323, %v2322
    %v2325 = vrot.slane %v2311, 1
    %v2326 = vsel %vm186, %v2325, %v2324
    %v2327 = vsel %vm130, %v2326, 0
    %2329 = vmatpush.msra.mxu0 0.0
    %2330 = vmatpush.msra.mxu0 0.0
    %2331 = vmatpush.msra.mxu0 0.0
    %2332 = vmatpush.msra.mxu0 0.0
    %2333 = vmatpush.msra.mxu0 0.0
    %2334 = vmatpush.msra.mxu0 0.0
    %2335 = vmatpush.msra.mxu0 0.0
    %2336 = vmatpush.msra.mxu0 0.0
    %2337 = vmatpush.msra.mxu0 0.0
    %2338 = vmatpush.msra.mxu0 0.0
    %2339 = vmatpush.msra.mxu0 0.0
    %2340 = vmatpush.msra.mxu0 0.0
    %2341 = vmatpush.msra.mxu0 %v2053
    %2342 = vmatpush.msra.mxu0 %v2052
    %2343 = vmatpush.msra.mxu0 %v2051
    %2344 = vmatpush.msra.mxu0 %v2050
    %2345 = vmatmul.f32.gmra.mxu0 %v2327
    %v2346 = vpop.f32.mrf.mxu0
    %v2347 = vadd.f32 0.0, %v2346
    %2348 = vdwg.mxu0
    %v2350 = vrot.slane %v2347, 3
    %v2351 = vrot.slane %v2347, 4
    %v2352 = vrot.slane %v2347, 5
    %v2353 = vrot.slane %v2347, 6
    %v2358 = vadd.f32 %v2038, %v2350
    %v2359 = vadd.f32 %v2041, %v2351
    %v2360 = vadd.f32 %v2044, %v2352
    %v2361 = vadd.f32 %v2047, %v2353
    %v2362 = vtanh.pop %v2358
    %v2363 = vtanh.pop %v2359
    %v2364 = vtanh.pop %v2360
    %v2365 = vtanh.pop %v2361
    %2366 = vst.msk [vmem:[#allocation2] sm:$0x20] %vm441, %v2362
    %2367 = vst.msk [vmem:[#allocation2 + $0x8] sm:$0x20] %vm441, %v2363
    %2368 = vst.msk [vmem:[#allocation2 + $0x10] sm:$0x20] %vm441, %v2364
    %2369 = vst.msk [vmem:[#allocation2 + $0x18] sm:$0x20] %vm441, %v2365
    %v2374 = vrot.slane %v2362, 5
    %v2375 = vrot.slane %v2363, 4
    %v2376 = vsel %vm180, %v2375, %v2374
    %v2377 = vrot.slane %v2364, 3
    %v2378 = vsel %vm183, %v2377, %v2376
    %v2379 = vrot.slane %v2365, 2
    %v2380 = vsel %vm186, %v2379, %v2378
    %v2381 = vsel %vm130, %v2380, 0
    %2383 = vmatpush.msra.mxu0 0.0
    %2384 = vmatpush.msra.mxu0 0.0
    %2385 = vmatpush.msra.mxu0 0.0
    %2386 = vmatpush.msra.mxu0 0.0
    %2387 = vmatpush.msra.mxu0 0.0
    %2388 = vmatpush.msra.mxu0 0.0
    %2389 = vmatpush.msra.mxu0 0.0
    %2390 = vmatpush.msra.mxu0 0.0
    %2391 = vmatpush.msra.mxu0 0.0
    %2392 = vmatpush.msra.mxu0 0.0
    %2393 = vmatpush.msra.mxu0 0.0
    %2394 = vmatpush.msra.mxu0 0.0
    %2395 = vmatpush.msra.mxu0 %v2053
    %2396 = vmatpush.msra.mxu0 %v2052
    %2397 = vmatpush.msra.mxu0 %v2051
    %2398 = vmatpush.msra.mxu0 %v2050
    %2399 = vmatmul.f32.gmra.mxu0 %v2381
    %v2400 = vpop.f32.mrf.mxu0
    %v2401 = vadd.f32 0.0, %v2400
    %2402 = vdwg.mxu0
    %v2404 = vrot.slane %v2401, 2
    %v2405 = vrot.slane %v2401, 3
    %v2406 = vrot.slane %v2401, 4
    %v2407 = vrot.slane %v2401, 5
    %v2412 = vadd.f32 %v2038, %v2404
    %v2413 = vadd.f32 %v2041, %v2405
    %v2414 = vadd.f32 %v2044, %v2406
    %v2415 = vadd.f32 %v2047, %v2407
    %v2416 = vtanh.pop %v2412
    %v2417 = vtanh.pop %v2413
    %v2418 = vtanh.pop %v2414
    %v2419 = vtanh.pop %v2415
    %2420 = vst.msk [vmem:[#allocation2] sm:$0x40] %vm496, %v2416
    %2421 = vst.msk [vmem:[#allocation2 + $0x8] sm:$0x40] %vm496, %v2417
    %2422 = vst.msk [vmem:[#allocation2 + $0x10] sm:$0x40] %vm496, %v2418
    %2423 = vst.msk [vmem:[#allocation2 + $0x18] sm:$0x40] %vm496, %v2419
    %v2428 = vrot.slane %v2416, 6
    %v2429 = vrot.slane %v2417, 5
    %v2430 = vsel %vm180, %v2429, %v2428
    %v2431 = vrot.slane %v2418, 4
    %v2432 = vsel %vm183, %v2431, %v2430
    %v2433 = vrot.slane %v2419, 3
    %v2434 = vsel %vm186, %v2433, %v2432
    %v2435 = vsel %vm130, %v2434, 0
    %2437 = vmatpush.msra.mxu0 0.0
    %2438 = vmatpush.msra.mxu0 0.0
    %2439 = vmatpush.msra.mxu0 0.0
    %2440 = vmatpush.msra.mxu0 0.0
    %2441 = vmatpush.msra.mxu0 0.0
    %2442 = vmatpush.msra.mxu0 0.0
    %2443 = vmatpush.msra.mxu0 0.0
    %2444 = vmatpush.msra.mxu0 0.0
    %2445 = vmatpush.msra.mxu0 0.0
    %2446 = vmatpush.msra.mxu0 0.0
    %2447 = vmatpush.msra.mxu0 0.0
    %2448 = vmatpush.msra.mxu0 0.0
    %2449 = vmatpush.msra.mxu0 %v2053
    %2450 = vmatpush.msra.mxu0 %v2052
    %2451 = vmatpush.msra.mxu0 %v2051
    %2452 = vmatpush.msra.mxu0 %v2050
    %2453 = vmatmul.f32.gmra.mxu0 %v2435
    %v2454 = vpop.f32.mrf.mxu0
    %v2455 = vadd.f32 0.0, %v2454
    %2456 = vdwg.mxu0
    %v2458 = vrot.slane %v2455, 1
    %v2459 = vrot.slane %v2455, 2
    %v2460 = vrot.slane %v2455, 3
    %v2461 = vrot.slane %v2455, 4
    %v2466 = vadd.f32 %v2038, %v2458
    %v2467 = vadd.f32 %v2041, %v2459
    %v2468 = vadd.f32 %v2044, %v2460
    %v2469 = vadd.f32 %v2047, %v2461
    %v2470 = vtanh.pop %v2466
    %v2471 = vtanh.pop %v2467
    %v2472 = vtanh.pop %v2468
    %v2473 = vtanh.pop %v2469
    %2474 = vst.msk [vmem:[#allocation2] sm:$0x80] %vm551, %v2470
    %2475 = vst.msk [vmem:[#allocation2 + $0x8] sm:$0x80] %vm551, %v2471
    %2476 = vst.msk [vmem:[#allocation2 + $0x10] sm:$0x80] %vm551, %v2472
    %2477 = vst.msk [vmem:[#allocation2 + $0x18] sm:$0x80] %vm551, %v2473
    %s2478 = scalar_lea.vmem [#allocation6], 128
    %v2479 = vld [vmem:[%s2478] sm:$0xff]
    %v2480 = vld [vmem:[%s2478 + $0x8] sm:$0xff]
    %v2481 = vld [vmem:[%s2478 + $0x10] sm:$0xff]
    %v2482 = vld [vmem:[%s2478 + $0x18] sm:$0xff]
    %v2483 = vld [vmem:[#allocation2] sm:$0xff]
    %v2484 = vld [vmem:[#allocation2 + $0x8] sm:$0xff]
    %v2485 = vld [vmem:[#allocation2 + $0x10] sm:$0xff]
    %v2486 = vld [vmem:[#allocation2 + $0x18] sm:$0xff]
    %s2487 = scalar_lea.vmem %s4, 5
    %v2488 = vld [vmem:[%s2487] sm:$0x1]
    %v2490 = vperm.slane %v2488, 0
    %v2493 = vsel %vm130, %v2483, 0
    %v2496 = vsel %vm130, %v2484, 0
    %v2499 = vsel %vm130, %v2485, 0
    %v2502 = vsel %vm130, %v2486, 0
    %2504 = vmatpush.msra.mxu0 0.0
    %2505 = vmatpush.msra.mxu0 0.0
    %2506 = vmatpush.msra.mxu0 0.0
    %2507 = vmatpush.msra.mxu0 0.0
    %2508 = vmatpush.msra.mxu0 0.0
    %2509 = vmatpush.msra.mxu0 0.0
    %2510 = vmatpush.msra.mxu0 0.0
    %2511 = vmatpush.msra.mxu0 0.0
    %2512 = vmatpush.msra.mxu0 0.0
    %2513 = vmatpush.msra.mxu0 0.0
    %2514 = vmatpush.msra.mxu0 0.0
    %2515 = vmatpush.msra.mxu0 0.0
    %2516 = vmatpush.msra.mxu0 %v2482
    %2517 = vmatpush.msra.mxu0 %v2481
    %2518 = vmatpush.msra.mxu0 %v2480
    %2519 = vmatpush.msra.mxu0 %v2479
    %2520 = vmatmul.f32.gmra.mxu0 %v2493
    %v2521 = vpop.f32.mrf.mxu0
    %v2522 = vadd.f32 %v2490, %v2521
    %2523 = vmatmul.f32.gmra.mxu0 %v2496
    %v2524 = vpop.f32.mrf.mxu0
    %v2525 = vadd.f32 %v2490, %v2524
    %2526 = vmatmul.f32.gmra.mxu0 %v2499
    %v2527 = vpop.f32.mrf.mxu0
    %v2528 = vadd.f32 %v2490, %v2527
    %2529 = vmatmul.f32.gmra.mxu0 %v2502
    %v2530 = vpop.f32.mrf.mxu0
    %v2531 = vadd.f32 %v2490, %v2530
    %2532 = vdwg.mxu0
    %s2533 = scalar_lea.vmem [#allocation8], 160
    %v2534 = vld [vmem:[%s2533] sm:$0xff]
    %v2535 = vld [vmem:[%s2533 + $0x8] sm:$0xff]
    %v2536 = vld [vmem:[%s2533 + $0x10] sm:$0xff]
    %v2537 = vld [vmem:[%s2533 + $0x18] sm:$0xff]
    %v2542 = vrot.slane %v1986, 7
    %v2543 = vrot.slane %v1987, 6
    %v2544 = vsel %vm180, %v2543, %v2542
    %v2545 = vrot.slane %v1988, 5
    %v2546 = vsel %vm183, %v2545, %v2544
    %v2547 = vrot.slane %v1989, 4
    %v2548 = vsel %vm186, %v2547, %v2546
    %v2549 = vsel %vm130, %v2548, 0
    %2551 = vmatpush.msra.mxu0 0.0
    %2552 = vmatpush.msra.mxu0 0.0
    %2553 = vmatpush.msra.mxu0 0.0
    %2554 = vmatpush.msra.mxu0 0.0
    %2555 = vmatpush.msra.mxu0 0.0
    %2556 = vmatpush.msra.mxu0 0.0
    %2557 = vmatpush.msra.mxu0 0.0
    %2558 = vmatpush.msra.mxu0 0.0
    %2559 = vmatpush.msra.mxu0 0.0
    %2560 = vmatpush.msra.mxu0 0.0
    %2561 = vmatpush.msra.mxu0 0.0
    %2562 = vmatpush.msra.mxu0 0.0
    %2563 = vmatpush.msra.mxu0 %v2537
    %2564 = vmatpush.msra.mxu0 %v2536
    %2565 = vmatpush.msra.mxu0 %v2535
    %2566 = vmatpush.msra.mxu0 %v2534
    %2567 = vmatmul.f32.gmra.mxu0 %v2549
    %v2568 = vpop.f32.mrf.mxu0
    %v2569 = vadd.f32 0.0, %v2568
    %2570 = vdwg.mxu0
    %v2572 = vrot.slane %v2569, 1
    %v2573 = vrot.slane %v2569, 2
    %v2574 = vrot.slane %v2569, 3
    %v2579 = vadd.f32 %v2522, %v2569
    %v2580 = vadd.f32 %v2525, %v2572
    %v2581 = vadd.f32 %v2528, %v2573
    %v2582 = vadd.f32 %v2531, %v2574
    %v2583 = vtanh.pop %v2579
    %v2584 = vtanh.pop %v2580
    %v2585 = vtanh.pop %v2581
    %v2586 = vtanh.pop %v2582
    %2587 = vst.msk [vmem:[#allocation2] sm:$0x1] %vm170, %v2583
    %2588 = vst.msk [vmem:[#allocation2 + $0x8] sm:$0x1] %vm170, %v2584
    %2589 = vst.msk [vmem:[#allocation2 + $0x10] sm:$0x1] %vm170, %v2585
    %2590 = vst.msk [vmem:[#allocation2 + $0x18] sm:$0x1] %vm170, %v2586
    %v2595 = vrot.slane %v2584, 7
    %v2596 = vsel %vm180, %v2595, %v2583
    %v2597 = vrot.slane %v2585, 6
    %v2598 = vsel %vm183, %v2597, %v2596
    %v2599 = vrot.slane %v2586, 5
    %v2600 = vsel %vm186, %v2599, %v2598
    %v2601 = vsel %vm130, %v2600, 0
    %2603 = vmatpush.msra.mxu0 0.0
    %2604 = vmatpush.msra.mxu0 0.0
    %2605 = vmatpush.msra.mxu0 0.0
    %2606 = vmatpush.msra.mxu0 0.0
    %2607 = vmatpush.msra.mxu0 0.0
    %2608 = vmatpush.msra.mxu0 0.0
    %2609 = vmatpush.msra.mxu0 0.0
    %2610 = vmatpush.msra.mxu0 0.0
    %2611 = vmatpush.msra.mxu0 0.0
    %2612 = vmatpush.msra.mxu0 0.0
    %2613 = vmatpush.msra.mxu0 0.0
    %2614 = vmatpush.msra.mxu0 0.0
    %2615 = vmatpush.msra.mxu0 %v2537
    %2616 = vmatpush.msra.mxu0 %v2536
    %2617 = vmatpush.msra.mxu0 %v2535
    %2618 = vmatpush.msra.mxu0 %v2534
    %2619 = vmatmul.f32.gmra.mxu0 %v2601
    %v2620 = vpop.f32.mrf.mxu0
    %v2621 = vadd.f32 0.0, %v2620
    %2622 = vdwg.mxu0
    %v2624 = vrot.slane %v2621, 7
    %v2625 = vrot.slane %v2621, 1
    %v2626 = vrot.slane %v2621, 2
    %v2631 = vadd.f32 %v2522, %v2624
    %v2632 = vadd.f32 %v2525, %v2621
    %v2633 = vadd.f32 %v2528, %v2625
    %v2634 = vadd.f32 %v2531, %v2626
    %v2635 = vtanh.pop %v2631
    %v2636 = vtanh.pop %v2632
    %v2637 = vtanh.pop %v2633
    %v2638 = vtanh.pop %v2634
    %2639 = vst.msk [vmem:[#allocation2] sm:$0x2] %vm226, %v2635
    %2640 = vst.msk [vmem:[#allocation2 + $0x8] sm:$0x2] %vm226, %v2636
    %2641 = vst.msk [vmem:[#allocation2 + $0x10] sm:$0x2] %vm226, %v2637
    %2642 = vst.msk [vmem:[#allocation2 + $0x18] sm:$0x2] %vm226, %v2638
    %v2647 = vrot.slane %v2635, 1
    %v2648 = vsel %vm180, %v2636, %v2647
    %v2649 = vrot.slane %v2637, 7
    %v2650 = vsel %vm183, %v2649, %v2648
    %v2651 = vrot.slane %v2638, 6
    %v2652 = vsel %vm186, %v2651, %v2650
    %v2653 = vsel %vm130, %v2652, 0
    %2655 = vmatpush.msra.mxu0 0.0
    %2656 = vmatpush.msra.mxu0 0.0
    %2657 = vmatpush.msra.mxu0 0.0
    %2658 = vmatpush.msra.mxu0 0.0
    %2659 = vmatpush.msra.mxu0 0.0
    %2660 = vmatpush.msra.mxu0 0.0
    %2661 = vmatpush.msra.mxu0 0.0
    %2662 = vmatpush.msra.mxu0 0.0
    %2663 = vmatpush.msra.mxu0 0.0
    %2664 = vmatpush.msra.mxu0 0.0
    %2665 = vmatpush.msra.mxu0 0.0
    %2666 = vmatpush.msra.mxu0 0.0
    %2667 = vmatpush.msra.mxu0 %v2537
    %2668 = vmatpush.msra.mxu0 %v2536
    %2669 = vmatpush.msra.mxu0 %v2535
    %2670 = vmatpush.msra.mxu0 %v2534
    %2671 = vmatmul.f32.gmra.mxu0 %v2653
    %v2672 = vpop.f32.mrf.mxu0
    %v2673 = vadd.f32 0.0, %v2672
    %2674 = vdwg.mxu0
    %v2676 = vrot.slane %v2673, 6
    %v2677 = vrot.slane %v2673, 7
    %v2678 = vrot.slane %v2673, 1
    %v2683 = vadd.f32 %v2522, %v2676
    %v2684 = vadd.f32 %v2525, %v2677
    %v2685 = vadd.f32 %v2528, %v2673
    %v2686 = vadd.f32 %v2531, %v2678
    %v2687 = vtanh.pop %v2683
    %v2688 = vtanh.pop %v2684
    %v2689 = vtanh.pop %v2685
    %v2690 = vtanh.pop %v2686
    %2691 = vst.msk [vmem:[#allocation2] sm:$0x4] %vm279, %v2687
    %2692 = vst.msk [vmem:[#allocation2 + $0x8] sm:$0x4] %vm279, %v2688
    %2693 = vst.msk [vmem:[#allocation2 + $0x10] sm:$0x4] %vm279, %v2689
    %2694 = vst.msk [vmem:[#allocation2 + $0x18] sm:$0x4] %vm279, %v2690
    %v2699 = vrot.slane %v2687, 2
    %v2700 = vrot.slane %v2688, 1
    %v2701 = vsel %vm180, %v2700, %v2699
    %v2702 = vsel %vm183, %v2689, %v2701
    %v2703 = vrot.slane %v2690, 7
    %v2704 = vsel %vm186, %v2703, %v2702
    %v2705 = vsel %vm130, %v2704, 0
    %2707 = vmatpush.msra.mxu0 0.0
    %2708 = vmatpush.msra.mxu0 0.0
    %2709 = vmatpush.msra.mxu0 0.0
    %2710 = vmatpush.msra.mxu0 0.0
    %2711 = vmatpush.msra.mxu0 0.0
    %2712 = vmatpush.msra.mxu0 0.0
    %2713 = vmatpush.msra.mxu0 0.0
    %2714 = vmatpush.msra.mxu0 0.0
    %2715 = vmatpush.msra.mxu0 0.0
    %2716 = vmatpush.msra.mxu0 0.0
    %2717 = vmatpush.msra.mxu0 0.0
    %2718 = vmatpush.msra.mxu0 0.0
    %2719 = vmatpush.msra.mxu0 %v2537
    %2720 = vmatpush.msra.mxu0 %v2536
    %2721 = vmatpush.msra.mxu0 %v2535
    %2722 = vmatpush.msra.mxu0 %v2534
    %2723 = vmatmul.f32.gmra.mxu0 %v2705
    %v2724 = vpop.f32.mrf.mxu0
    %v2725 = vadd.f32 0.0, %v2724
    %2726 = vdwg.mxu0
    %v2728 = vrot.slane %v2725, 5
    %v2729 = vrot.slane %v2725, 6
    %v2730 = vrot.slane %v2725, 7
    %v2735 = vadd.f32 %v2522, %v2728
    %v2736 = vadd.f32 %v2525, %v2729
    %v2737 = vadd.f32 %v2528, %v2730
    %v2738 = vadd.f32 %v2531, %v2725
    %v2739 = vtanh.pop %v2735
    %v2740 = vtanh.pop %v2736
    %v2741 = vtanh.pop %v2737
    %v2742 = vtanh.pop %v2738
    %2743 = vst.msk [vmem:[#allocation2] sm:$0x8] %vm332, %v2739
    %2744 = vst.msk [vmem:[#allocation2 + $0x8] sm:$0x8] %vm332, %v2740
    %2745 = vst.msk [vmem:[#allocation2 + $0x10] sm:$0x8] %vm332, %v2741
    %2746 = vst.msk [vmem:[#allocation2 + $0x18] sm:$0x8] %vm332, %v2742
    %v2751 = vrot.slane %v2739, 3
    %v2752 = vrot.slane %v2740, 2
    %v2753 = vsel %vm180, %v2752, %v2751
    %v2754 = vrot.slane %v2741, 1
    %v2755 = vsel %vm183, %v2754, %v2753
    %v2756 = vsel %vm186, %v2742, %v2755
    %v2757 = vsel %vm130, %v2756, 0
    %2759 = vmatpush.msra.mxu0 0.0
    %2760 = vmatpush.msra.mxu0 0.0
    %2761 = vmatpush.msra.mxu0 0.0
    %2762 = vmatpush.msra.mxu0 0.0
    %2763 = vmatpush.msra.mxu0 0.0
    %2764 = vmatpush.msra.mxu0 0.0
    %2765 = vmatpush.msra.mxu0 0.0
    %2766 = vmatpush.msra.mxu0 0.0
    %2767 = vmatpush.msra.mxu0 0.0
    %2768 = vmatpush.msra.mxu0 0.0
    %2769 = vmatpush.msra.mxu0 0.0
    %2770 = vmatpush.msra.mxu0 0.0
    %2771 = vmatpush.msra.mxu0 %v2537
    %2772 = vmatpush.msra.mxu0 %v2536
    %2773 = vmatpush.msra.mxu0 %v2535
    %2774 = vmatpush.msra.mxu0 %v2534
    %2775 = vmatmul.f32.gmra.mxu0 %v2757
    %v2776 = vpop.f32.mrf.mxu0
    %v2777 = vadd.f32 0.0, %v2776
    %2778 = vdwg.mxu0
    %v2780 = vrot.slane %v2777, 4
    %v2781 = vrot.slane %v2777, 5
    %v2782 = vrot.slane %v2777, 6
    %v2783 = vrot.slane %v2777, 7
    %v2788 = vadd.f32 %v2522, %v2780
    %v2789 = vadd.f32 %v2525, %v2781
    %v2790 = vadd.f32 %v2528, %v2782
    %v2791 = vadd.f32 %v2531, %v2783
    %v2792 = vtanh.pop %v2788
    %v2793 = vtanh.pop %v2789
    %v2794 = vtanh.pop %v2790
    %v2795 = vtanh.pop %v2791
    %2796 = vst.msk [vmem:[#allocation2] sm:$0x10] %vm386, %v2792
    %2797 = vst.msk [vmem:[#allocation2 + $0x8] sm:$0x10] %vm386, %v2793
    %2798 = vst.msk [vmem:[#allocation2 + $0x10] sm:$0x10] %vm386, %v2794
    %2799 = vst.msk [vmem:[#allocation2 + $0x18] sm:$0x10] %vm386, %v2795
    %v2804 = vrot.slane %v2792, 4
    %v2805 = vrot.slane %v2793, 3
    %v2806 = vsel %vm180, %v2805, %v2804
    %v2807 = vrot.slane %v2794, 2
    %v2808 = vsel %vm183, %v2807, %v2806
    %v2809 = vrot.slane %v2795, 1
    %v2810 = vsel %vm186, %v2809, %v2808
    %v2811 = vsel %vm130, %v2810, 0
    %2813 = vmatpush.msra.mxu0 0.0
    %2814 = vmatpush.msra.mxu0 0.0
    %2815 = vmatpush.msra.mxu0 0.0
    %2816 = vmatpush.msra.mxu0 0.0
    %2817 = vmatpush.msra.mxu0 0.0
    %2818 = vmatpush.msra.mxu0 0.0
    %2819 = vmatpush.msra.mxu0 0.0
    %2820 = vmatpush.msra.mxu0 0.0
    %2821 = vmatpush.msra.mxu0 0.0
    %2822 = vmatpush.msra.mxu0 0.0
    %2823 = vmatpush.msra.mxu0 0.0
    %2824 = vmatpush.msra.mxu0 0.0
    %2825 = vmatpush.msra.mxu0 %v2537
    %2826 = vmatpush.msra.mxu0 %v2536
    %2827 = vmatpush.msra.mxu0 %v2535
    %2828 = vmatpush.msra.mxu0 %v2534
    %2829 = vmatmul.f32.gmra.mxu0 %v2811
    %v2830 = vpop.f32.mrf.mxu0
    %v2831 = vadd.f32 0.0, %v2830
    %2832 = vdwg.mxu0
    %v2834 = vrot.slane %v2831, 3
    %v2835 = vrot.slane %v2831, 4
    %v2836 = vrot.slane %v2831, 5
    %v2837 = vrot.slane %v2831, 6
    %v2842 = vadd.f32 %v2522, %v2834
    %v2843 = vadd.f32 %v2525, %v2835
    %v2844 = vadd.f32 %v2528, %v2836
    %v2845 = vadd.f32 %v2531, %v2837
    %v2846 = vtanh.pop %v2842
    %v2847 = vtanh.pop %v2843
    %v2848 = vtanh.pop %v2844
    %v2849 = vtanh.pop %v2845
    %2850 = vst.msk [vmem:[#allocation2] sm:$0x20] %vm441, %v2846
    %2851 = vst.msk [vmem:[#allocation2 + $0x8] sm:$0x20] %vm441, %v2847
    %2852 = vst.msk [vmem:[#allocation2 + $0x10] sm:$0x20] %vm441, %v2848
    %2853 = vst.msk [vmem:[#allocation2 + $0x18] sm:$0x20] %vm441, %v2849
    %v2858 = vrot.slane %v2846, 5
    %v2859 = vrot.slane %v2847, 4
    %v2860 = vsel %vm180, %v2859, %v2858
    %v2861 = vrot.slane %v2848, 3
    %v2862 = vsel %vm183, %v2861, %v2860
    %v2863 = vrot.slane %v2849, 2
    %v2864 = vsel %vm186, %v2863, %v2862
    %v2865 = vsel %vm130, %v2864, 0
    %2867 = vmatpush.msra.mxu0 0.0
    %2868 = vmatpush.msra.mxu0 0.0
    %2869 = vmatpush.msra.mxu0 0.0
    %2870 = vmatpush.msra.mxu0 0.0
    %2871 = vmatpush.msra.mxu0 0.0
    %2872 = vmatpush.msra.mxu0 0.0
    %2873 = vmatpush.msra.mxu0 0.0
    %2874 = vmatpush.msra.mxu0 0.0
    %2875 = vmatpush.msra.mxu0 0.0
    %2876 = vmatpush.msra.mxu0 0.0
    %2877 = vmatpush.msra.mxu0 0.0
    %2878 = vmatpush.msra.mxu0 0.0
    %2879 = vmatpush.msra.mxu0 %v2537
    %2880 = vmatpush.msra.mxu0 %v2536
    %2881 = vmatpush.msra.mxu0 %v2535
    %2882 = vmatpush.msra.mxu0 %v2534
    %2883 = vmatmul.f32.gmra.mxu0 %v2865
    %v2884 = vpop.f32.mrf.mxu0
    %v2885 = vadd.f32 0.0, %v2884
    %2886 = vdwg.mxu0
    %v2888 = vrot.slane %v2885, 2
    %v2889 = vrot.slane %v2885, 3
    %v2890 = vrot.slane %v2885, 4
    %v2891 = vrot.slane %v2885, 5
    %v2896 = vadd.f32 %v2522, %v2888
    %v2897 = vadd.f32 %v2525, %v2889
    %v2898 = vadd.f32 %v2528, %v2890
    %v2899 = vadd.f32 %v2531, %v2891
    %v2900 = vtanh.pop %v2896
    %v2901 = vtanh.pop %v2897
    %v2902 = vtanh.pop %v2898
    %v2903 = vtanh.pop %v2899
    %2904 = vst.msk [vmem:[#allocation2] sm:$0x40] %vm496, %v2900
    %2905 = vst.msk [vmem:[#allocation2 + $0x8] sm:$0x40] %vm496, %v2901
    %2906 = vst.msk [vmem:[#allocation2 + $0x10] sm:$0x40] %vm496, %v2902
    %2907 = vst.msk [vmem:[#allocation2 + $0x18] sm:$0x40] %vm496, %v2903
    %v2912 = vrot.slane %v2900, 6
    %v2913 = vrot.slane %v2901, 5
    %v2914 = vsel %vm180, %v2913, %v2912
    %v2915 = vrot.slane %v2902, 4
    %v2916 = vsel %vm183, %v2915, %v2914
    %v2917 = vrot.slane %v2903, 3
    %v2918 = vsel %vm186, %v2917, %v2916
    %v2919 = vsel %vm130, %v2918, 0
    %2921 = vmatpush.msra.mxu0 0.0
    %2922 = vmatpush.msra.mxu0 0.0
    %2923 = vmatpush.msra.mxu0 0.0
    %2924 = vmatpush.msra.mxu0 0.0
    %2925 = vmatpush.msra.mxu0 0.0
    %2926 = vmatpush.msra.mxu0 0.0
    %2927 = vmatpush.msra.mxu0 0.0
    %2928 = vmatpush.msra.mxu0 0.0
    %2929 = vmatpush.msra.mxu0 0.0
    %2930 = vmatpush.msra.mxu0 0.0
    %2931 = vmatpush.msra.mxu0 0.0
    %2932 = vmatpush.msra.mxu0 0.0
    %2933 = vmatpush.msra.mxu0 %v2537
    %2934 = vmatpush.msra.mxu0 %v2536
    %2935 = vmatpush.msra.mxu0 %v2535
    %2936 = vmatpush.msra.mxu0 %v2534
    %2937 = vmatmul.f32.gmra.mxu0 %v2919
    %v2938 = vpop.f32.mrf.mxu0
    %v2939 = vadd.f32 0.0, %v2938
    %2940 = vdwg.mxu0
    %v2942 = vrot.slane %v2939, 1
    %v2943 = vrot.slane %v2939, 2
    %v2944 = vrot.slane %v2939, 3
    %v2945 = vrot.slane %v2939, 4
    %v2950 = vadd.f32 %v2522, %v2942
    %v2951 = vadd.f32 %v2525, %v2943
    %v2952 = vadd.f32 %v2528, %v2944
    %v2953 = vadd.f32 %v2531, %v2945
    %v2954 = vtanh.pop %v2950
    %v2955 = vtanh.pop %v2951
    %v2956 = vtanh.pop %v2952
    %v2957 = vtanh.pop %v2953
    %2958 = vst.msk [vmem:[#allocation2] sm:$0x80] %vm551, %v2954
    %2959 = vst.msk [vmem:[#allocation2 + $0x8] sm:$0x80] %vm551, %v2955
    %2960 = vst.msk [vmem:[#allocation2 + $0x10] sm:$0x80] %vm551, %v2956
    %2961 = vst.msk [vmem:[#allocation2 + $0x18] sm:$0x80] %vm551, %v2957
    %s2962 = scalar_lea.vmem [#allocation6], 160
    %v2963 = vld [vmem:[%s2962] sm:$0xff]
    %v2964 = vld [vmem:[%s2962 + $0x8] sm:$0xff]
    %v2965 = vld [vmem:[%s2962 + $0x10] sm:$0xff]
    %v2966 = vld [vmem:[%s2962 + $0x18] sm:$0xff]
    %v2967 = vld [vmem:[#allocation2] sm:$0xff]
    %v2968 = vld [vmem:[#allocation2 + $0x8] sm:$0xff]
    %v2969 = vld [vmem:[#allocation2 + $0x10] sm:$0xff]
    %v2970 = vld [vmem:[#allocation2 + $0x18] sm:$0xff]
    %s2971 = scalar_lea.vmem %s4, 6
    %v2972 = vld [vmem:[%s2971] sm:$0x1]
    %v2974 = vperm.slane %v2972, 0
    %v2977 = vsel %vm130, %v2967, 0
    %v2980 = vsel %vm130, %v2968, 0
    %v2983 = vsel %vm130, %v2969, 0
    %v2986 = vsel %vm130, %v2970, 0
    %2988 = vmatpush.msra.mxu0 0.0
    %2989 = vmatpush.msra.mxu0 0.0
    %2990 = vmatpush.msra.mxu0 0.0
    %2991 = vmatpush.msra.mxu0 0.0
    %2992 = vmatpush.msra.mxu0 0.0
    %2993 = vmatpush.msra.mxu0 0.0
    %2994 = vmatpush.msra.mxu0 0.0
    %2995 = vmatpush.msra.mxu0 0.0
    %2996 = vmatpush.msra.mxu0 0.0
    %2997 = vmatpush.msra.mxu0 0.0
    %2998 = vmatpush.msra.mxu0 0.0
    %2999 = vmatpush.msra.mxu0 0.0
    %3000 = vmatpush.msra.mxu0 %v2966
    %3001 = vmatpush.msra.mxu0 %v2965
    %3002 = vmatpush.msra.mxu0 %v2964
    %3003 = vmatpush.msra.mxu0 %v2963
    %3004 = vmatmul.f32.gmra.mxu0 %v2977
    %v3005 = vpop.f32.mrf.mxu0
    %v3006 = vadd.f32 %v2974, %v3005
    %3007 = vmatmul.f32.gmra.mxu0 %v2980
    %v3008 = vpop.f32.mrf.mxu0
    %v3009 = vadd.f32 %v2974, %v3008
    %3010 = vmatmul.f32.gmra.mxu0 %v2983
    %v3011 = vpop.f32.mrf.mxu0
    %v3012 = vadd.f32 %v2974, %v3011
    %3013 = vmatmul.f32.gmra.mxu0 %v2986
    %v3014 = vpop.f32.mrf.mxu0
    %v3015 = vadd.f32 %v2974, %v3014
    %3016 = vdwg.mxu0
    %s3017 = scalar_lea.vmem [#allocation8], 192
    %v3018 = vld [vmem:[%s3017] sm:$0xff]
    %v3019 = vld [vmem:[%s3017 + $0x8] sm:$0xff]
    %v3020 = vld [vmem:[%s3017 + $0x10] sm:$0xff]
    %v3021 = vld [vmem:[%s3017 + $0x18] sm:$0xff]
    %v3026 = vrot.slane %v2470, 7
    %v3027 = vrot.slane %v2471, 6
    %v3028 = vsel %vm180, %v3027, %v3026
    %v3029 = vrot.slane %v2472, 5
    %v3030 = vsel %vm183, %v3029, %v3028
    %v3031 = vrot.slane %v2473, 4
    %v3032 = vsel %vm186, %v3031, %v3030
    %v3033 = vsel %vm130, %v3032, 0
    %3035 = vmatpush.msra.mxu0 0.0
    %3036 = vmatpush.msra.mxu0 0.0
    %3037 = vmatpush.msra.mxu0 0.0
    %3038 = vmatpush.msra.mxu0 0.0
    %3039 = vmatpush.msra.mxu0 0.0
    %3040 = vmatpush.msra.mxu0 0.0
    %3041 = vmatpush.msra.mxu0 0.0
    %3042 = vmatpush.msra.mxu0 0.0
    %3043 = vmatpush.msra.mxu0 0.0
    %3044 = vmatpush.msra.mxu0 0.0
    %3045 = vmatpush.msra.mxu0 0.0
    %3046 = vmatpush.msra.mxu0 0.0
    %3047 = vmatpush.msra.mxu0 %v3021
    %3048 = vmatpush.msra.mxu0 %v3020
    %3049 = vmatpush.msra.mxu0 %v3019
    %3050 = vmatpush.msra.mxu0 %v3018
    %3051 = vmatmul.f32.gmra.mxu0 %v3033
    %v3052 = vpop.f32.mrf.mxu0
    %v3053 = vadd.f32 0.0, %v3052
    %3054 = vdwg.mxu0
    %v3056 = vrot.slane %v3053, 1
    %v3057 = vrot.slane %v3053, 2
    %v3058 = vrot.slane %v3053, 3
    %v3063 = vadd.f32 %v3006, %v3053
    %v3064 = vadd.f32 %v3009, %v3056
    %v3065 = vadd.f32 %v3012, %v3057
    %v3066 = vadd.f32 %v3015, %v3058
    %v3067 = vtanh.pop %v3063
    %v3068 = vtanh.pop %v3064
    %v3069 = vtanh.pop %v3065
    %v3070 = vtanh.pop %v3066
    %3071 = vst.msk [vmem:[#allocation2] sm:$0x1] %vm170, %v3067
    %3072 = vst.msk [vmem:[#allocation2 + $0x8] sm:$0x1] %vm170, %v3068
    %3073 = vst.msk [vmem:[#allocation2 + $0x10] sm:$0x1] %vm170, %v3069
    %3074 = vst.msk [vmem:[#allocation2 + $0x18] sm:$0x1] %vm170, %v3070
    %v3079 = vrot.slane %v3068, 7
    %v3080 = vsel %vm180, %v3079, %v3067
    %v3081 = vrot.slane %v3069, 6
    %v3082 = vsel %vm183, %v3081, %v3080
    %v3083 = vrot.slane %v3070, 5
    %v3084 = vsel %vm186, %v3083, %v3082
    %v3085 = vsel %vm130, %v3084, 0
    %3087 = vmatpush.msra.mxu0 0.0
    %3088 = vmatpush.msra.mxu0 0.0
    %3089 = vmatpush.msra.mxu0 0.0
    %3090 = vmatpush.msra.mxu0 0.0
    %3091 = vmatpush.msra.mxu0 0.0
    %3092 = vmatpush.msra.mxu0 0.0
    %3093 = vmatpush.msra.mxu0 0.0
    %3094 = vmatpush.msra.mxu0 0.0
    %3095 = vmatpush.msra.mxu0 0.0
    %3096 = vmatpush.msra.mxu0 0.0
    %3097 = vmatpush.msra.mxu0 0.0
    %3098 = vmatpush.msra.mxu0 0.0
    %3099 = vmatpush.msra.mxu0 %v3021
    %3100 = vmatpush.msra.mxu0 %v3020
    %3101 = vmatpush.msra.mxu0 %v3019
    %3102 = vmatpush.msra.mxu0 %v3018
    %3103 = vmatmul.f32.gmra.mxu0 %v3085
    %v3104 = vpop.f32.mrf.mxu0
    %v3105 = vadd.f32 0.0, %v3104
    %3106 = vdwg.mxu0
    %v3108 = vrot.slane %v3105, 7
    %v3109 = vrot.slane %v3105, 1
    %v3110 = vrot.slane %v3105, 2
    %v3115 = vadd.f32 %v3006, %v3108
    %v3116 = vadd.f32 %v3009, %v3105
    %v3117 = vadd.f32 %v3012, %v3109
    %v3118 = vadd.f32 %v3015, %v3110
    %v3119 = vtanh.pop %v3115
    %v3120 = vtanh.pop %v3116
    %v3121 = vtanh.pop %v3117
    %v3122 = vtanh.pop %v3118
    %3123 = vst.msk [vmem:[#allocation2] sm:$0x2] %vm226, %v3119
    %3124 = vst.msk [vmem:[#allocation2 + $0x8] sm:$0x2] %vm226, %v3120
    %3125 = vst.msk [vmem:[#allocation2 + $0x10] sm:$0x2] %vm226, %v3121
    %3126 = vst.msk [vmem:[#allocation2 + $0x18] sm:$0x2] %vm226, %v3122
    %v3131 = vrot.slane %v3119, 1
    %v3132 = vsel %vm180, %v3120, %v3131
    %v3133 = vrot.slane %v3121, 7
    %v3134 = vsel %vm183, %v3133, %v3132
    %v3135 = vrot.slane %v3122, 6
    %v3136 = vsel %vm186, %v3135, %v3134
    %v3137 = vsel %vm130, %v3136, 0
    %3139 = vmatpush.msra.mxu0 0.0
    %3140 = vmatpush.msra.mxu0 0.0
    %3141 = vmatpush.msra.mxu0 0.0
    %3142 = vmatpush.msra.mxu0 0.0
    %3143 = vmatpush.msra.mxu0 0.0
    %3144 = vmatpush.msra.mxu0 0.0
    %3145 = vmatpush.msra.mxu0 0.0
    %3146 = vmatpush.msra.mxu0 0.0
    %3147 = vmatpush.msra.mxu0 0.0
    %3148 = vmatpush.msra.mxu0 0.0
    %3149 = vmatpush.msra.mxu0 0.0
    %3150 = vmatpush.msra.mxu0 0.0
    %3151 = vmatpush.msra.mxu0 %v3021
    %3152 = vmatpush.msra.mxu0 %v3020
    %3153 = vmatpush.msra.mxu0 %v3019
    %3154 = vmatpush.msra.mxu0 %v3018
    %3155 = vmatmul.f32.gmra.mxu0 %v3137
    %v3156 = vpop.f32.mrf.mxu0
    %v3157 = vadd.f32 0.0, %v3156
    %3158 = vdwg.mxu0
    %v3160 = vrot.slane %v3157, 6
    %v3161 = vrot.slane %v3157, 7
    %v3162 = vrot.slane %v3157, 1
    %v3167 = vadd.f32 %v3006, %v3160
    %v3168 = vadd.f32 %v3009, %v3161
    %v3169 = vadd.f32 %v3012, %v3157
    %v3170 = vadd.f32 %v3015, %v3162
    %v3171 = vtanh.pop %v3167
    %v3172 = vtanh.pop %v3168
    %v3173 = vtanh.pop %v3169
    %v3174 = vtanh.pop %v3170
    %3175 = vst.msk [vmem:[#allocation2] sm:$0x4] %vm279, %v3171
    %3176 = vst.msk [vmem:[#allocation2 + $0x8] sm:$0x4] %vm279, %v3172
    %3177 = vst.msk [vmem:[#allocation2 + $0x10] sm:$0x4] %vm279, %v3173
    %3178 = vst.msk [vmem:[#allocation2 + $0x18] sm:$0x4] %vm279, %v3174
    %v3183 = vrot.slane %v3171, 2
    %v3184 = vrot.slane %v3172, 1
    %v3185 = vsel %vm180, %v3184, %v3183
    %v3186 = vsel %vm183, %v3173, %v3185
    %v3187 = vrot.slane %v3174, 7
    %v3188 = vsel %vm186, %v3187, %v3186
    %v3189 = vsel %vm130, %v3188, 0
    %3191 = vmatpush.msra.mxu0 0.0
    %3192 = vmatpush.msra.mxu0 0.0
    %3193 = vmatpush.msra.mxu0 0.0
    %3194 = vmatpush.msra.mxu0 0.0
    %3195 = vmatpush.msra.mxu0 0.0
    %3196 = vmatpush.msra.mxu0 0.0
    %3197 = vmatpush.msra.mxu0 0.0
    %3198 = vmatpush.msra.mxu0 0.0
    %3199 = vmatpush.msra.mxu0 0.0
    %3200 = vmatpush.msra.mxu0 0.0
    %3201 = vmatpush.msra.mxu0 0.0
    %3202 = vmatpush.msra.mxu0 0.0
    %3203 = vmatpush.msra.mxu0 %v3021
    %3204 = vmatpush.msra.mxu0 %v3020
    %3205 = vmatpush.msra.mxu0 %v3019
    %3206 = vmatpush.msra.mxu0 %v3018
    %3207 = vmatmul.f32.gmra.mxu0 %v3189
    %v3208 = vpop.f32.mrf.mxu0
    %v3209 = vadd.f32 0.0, %v3208
    %3210 = vdwg.mxu0
    %v3212 = vrot.slane %v3209, 5
    %v3213 = vrot.slane %v3209, 6
    %v3214 = vrot.slane %v3209, 7
    %v3219 = vadd.f32 %v3006, %v3212
    %v3220 = vadd.f32 %v3009, %v3213
    %v3221 = vadd.f32 %v3012, %v3214
    %v3222 = vadd.f32 %v3015, %v3209
    %v3223 = vtanh.pop %v3219
    %v3224 = vtanh.pop %v3220
    %v3225 = vtanh.pop %v3221
    %v3226 = vtanh.pop %v3222
    %3227 = vst.msk [vmem:[#allocation2] sm:$0x8] %vm332, %v3223
    %3228 = vst.msk [vmem:[#allocation2 + $0x8] sm:$0x8] %vm332, %v3224
    %3229 = vst.msk [vmem:[#allocation2 + $0x10] sm:$0x8] %vm332, %v3225
    %3230 = vst.msk [vmem:[#allocation2 + $0x18] sm:$0x8] %vm332, %v3226
    %v3235 = vrot.slane %v3223, 3
    %v3236 = vrot.slane %v3224, 2
    %v3237 = vsel %vm180, %v3236, %v3235
    %v3238 = vrot.slane %v3225, 1
    %v3239 = vsel %vm183, %v3238, %v3237
    %v3240 = vsel %vm186, %v3226, %v3239
    %v3241 = vsel %vm130, %v3240, 0
    %3243 = vmatpush.msra.mxu0 0.0
    %3244 = vmatpush.msra.mxu0 0.0
    %3245 = vmatpush.msra.mxu0 0.0
    %3246 = vmatpush.msra.mxu0 0.0
    %3247 = vmatpush.msra.mxu0 0.0
    %3248 = vmatpush.msra.mxu0 0.0
    %3249 = vmatpush.msra.mxu0 0.0
    %3250 = vmatpush.msra.mxu0 0.0
    %3251 = vmatpush.msra.mxu0 0.0
    %3252 = vmatpush.msra.mxu0 0.0
    %3253 = vmatpush.msra.mxu0 0.0
    %3254 = vmatpush.msra.mxu0 0.0
    %3255 = vmatpush.msra.mxu0 %v3021
    %3256 = vmatpush.msra.mxu0 %v3020
    %3257 = vmatpush.msra.mxu0 %v3019
    %3258 = vmatpush.msra.mxu0 %v3018
    %3259 = vmatmul.f32.gmra.mxu0 %v3241
    %v3260 = vpop.f32.mrf.mxu0
    %v3261 = vadd.f32 0.0, %v3260
    %3262 = vdwg.mxu0
    %v3264 = vrot.slane %v3261, 4
    %v3265 = vrot.slane %v3261, 5
    %v3266 = vrot.slane %v3261, 6
    %v3267 = vrot.slane %v3261, 7
    %v3272 = vadd.f32 %v3006, %v3264
    %v3273 = vadd.f32 %v3009, %v3265
    %v3274 = vadd.f32 %v3012, %v3266
    %v3275 = vadd.f32 %v3015, %v3267
    %v3276 = vtanh.pop %v3272
    %v3277 = vtanh.pop %v3273
    %v3278 = vtanh.pop %v3274
    %v3279 = vtanh.pop %v3275
    %3280 = vst.msk [vmem:[#allocation2] sm:$0x10] %vm386, %v3276
    %3281 = vst.msk [vmem:[#allocation2 + $0x8] sm:$0x10] %vm386, %v3277
    %3282 = vst.msk [vmem:[#allocation2 + $0x10] sm:$0x10] %vm386, %v3278
    %3283 = vst.msk [vmem:[#allocation2 + $0x18] sm:$0x10] %vm386, %v3279
    %v3288 = vrot.slane %v3276, 4
    %v3289 = vrot.slane %v3277, 3
    %v3290 = vsel %vm180, %v3289, %v3288
    %v3291 = vrot.slane %v3278, 2
    %v3292 = vsel %vm183, %v3291, %v3290
    %v3293 = vrot.slane %v3279, 1
    %v3294 = vsel %vm186, %v3293, %v3292
    %v3295 = vsel %vm130, %v3294, 0
    %3297 = vmatpush.msra.mxu0 0.0
    %3298 = vmatpush.msra.mxu0 0.0
    %3299 = vmatpush.msra.mxu0 0.0
    %3300 = vmatpush.msra.mxu0 0.0
    %3301 = vmatpush.msra.mxu0 0.0
    %3302 = vmatpush.msra.mxu0 0.0
    %3303 = vmatpush.msra.mxu0 0.0
    %3304 = vmatpush.msra.mxu0 0.0
    %3305 = vmatpush.msra.mxu0 0.0
    %3306 = vmatpush.msra.mxu0 0.0
    %3307 = vmatpush.msra.mxu0 0.0
    %3308 = vmatpush.msra.mxu0 0.0
    %3309 = vmatpush.msra.mxu0 %v3021
    %3310 = vmatpush.msra.mxu0 %v3020
    %3311 = vmatpush.msra.mxu0 %v3019
    %3312 = vmatpush.msra.mxu0 %v3018
    %3313 = vmatmul.f32.gmra.mxu0 %v3295
    %v3314 = vpop.f32.mrf.mxu0
    %v3315 = vadd.f32 0.0, %v3314
    %3316 = vdwg.mxu0
    %v3318 = vrot.slane %v3315, 3
    %v3319 = vrot.slane %v3315, 4
    %v3320 = vrot.slane %v3315, 5
    %v3321 = vrot.slane %v3315, 6
    %v3326 = vadd.f32 %v3006, %v3318
    %v3327 = vadd.f32 %v3009, %v3319
    %v3328 = vadd.f32 %v3012, %v3320
    %v3329 = vadd.f32 %v3015, %v3321
    %v3330 = vtanh.pop %v3326
    %v3331 = vtanh.pop %v3327
    %v3332 = vtanh.pop %v3328
    %v3333 = vtanh.pop %v3329
    %3334 = vst.msk [vmem:[#allocation2] sm:$0x20] %vm441, %v3330
    %3335 = vst.msk [vmem:[#allocation2 + $0x8] sm:$0x20] %vm441, %v3331
    %3336 = vst.msk [vmem:[#allocation2 + $0x10] sm:$0x20] %vm441, %v3332
    %3337 = vst.msk [vmem:[#allocation2 + $0x18] sm:$0x20] %vm441, %v3333
    %v3342 = vrot.slane %v3330, 5
    %v3343 = vrot.slane %v3331, 4
    %v3344 = vsel %vm180, %v3343, %v3342
    %v3345 = vrot.slane %v3332, 3
    %v3346 = vsel %vm183, %v3345, %v3344
    %v3347 = vrot.slane %v3333, 2
    %v3348 = vsel %vm186, %v3347, %v3346
    %v3349 = vsel %vm130, %v3348, 0
    %3351 = vmatpush.msra.mxu0 0.0
    %3352 = vmatpush.msra.mxu0 0.0
    %3353 = vmatpush.msra.mxu0 0.0
    %3354 = vmatpush.msra.mxu0 0.0
    %3355 = vmatpush.msra.mxu0 0.0
    %3356 = vmatpush.msra.mxu0 0.0
    %3357 = vmatpush.msra.mxu0 0.0
    %3358 = vmatpush.msra.mxu0 0.0
    %3359 = vmatpush.msra.mxu0 0.0
    %3360 = vmatpush.msra.mxu0 0.0
    %3361 = vmatpush.msra.mxu0 0.0
    %3362 = vmatpush.msra.mxu0 0.0
    %3363 = vmatpush.msra.mxu0 %v3021
    %3364 = vmatpush.msra.mxu0 %v3020
    %3365 = vmatpush.msra.mxu0 %v3019
    %3366 = vmatpush.msra.mxu0 %v3018
    %3367 = vmatmul.f32.gmra.mxu0 %v3349
    %v3368 = vpop.f32.mrf.mxu0
    %v3369 = vadd.f32 0.0, %v3368
    %3370 = vdwg.mxu0
    %v3372 = vrot.slane %v3369, 2
    %v3373 = vrot.slane %v3369, 3
    %v3374 = vrot.slane %v3369, 4
    %v3375 = vrot.slane %v3369, 5
    %v3380 = vadd.f32 %v3006, %v3372
    %v3381 = vadd.f32 %v3009, %v3373
    %v3382 = vadd.f32 %v3012, %v3374
    %v3383 = vadd.f32 %v3015, %v3375
    %v3384 = vtanh.pop %v3380
    %v3385 = vtanh.pop %v3381
    %v3386 = vtanh.pop %v3382
    %v3387 = vtanh.pop %v3383
    %3388 = vst.msk [vmem:[#allocation2] sm:$0x40] %vm496, %v3384
    %3389 = vst.msk [vmem:[#allocation2 + $0x8] sm:$0x40] %vm496, %v3385
    %3390 = vst.msk [vmem:[#allocation2 + $0x10] sm:$0x40] %vm496, %v3386
    %3391 = vst.msk [vmem:[#allocation2 + $0x18] sm:$0x40] %vm496, %v3387
    %v3396 = vrot.slane %v3384, 6
    %v3397 = vrot.slane %v3385, 5
    %v3398 = vsel %vm180, %v3397, %v3396
    %v3399 = vrot.slane %v3386, 4
    %v3400 = vsel %vm183, %v3399, %v3398
    %v3401 = vrot.slane %v3387, 3
    %v3402 = vsel %vm186, %v3401, %v3400
    %v3403 = vsel %vm130, %v3402, 0
    %3405 = vmatpush.msra.mxu0 0.0
    %3406 = vmatpush.msra.mxu0 0.0
    %3407 = vmatpush.msra.mxu0 0.0
    %3408 = vmatpush.msra.mxu0 0.0
    %3409 = vmatpush.msra.mxu0 0.0
    %3410 = vmatpush.msra.mxu0 0.0
    %3411 = vmatpush.msra.mxu0 0.0
    %3412 = vmatpush.msra.mxu0 0.0
    %3413 = vmatpush.msra.mxu0 0.0
    %3414 = vmatpush.msra.mxu0 0.0
    %3415 = vmatpush.msra.mxu0 0.0
    %3416 = vmatpush.msra.mxu0 0.0
    %3417 = vmatpush.msra.mxu0 %v3021
    %3418 = vmatpush.msra.mxu0 %v3020
    %3419 = vmatpush.msra.mxu0 %v3019
    %3420 = vmatpush.msra.mxu0 %v3018
    %3421 = vmatmul.f32.gmra.mxu0 %v3403
    %v3422 = vpop.f32.mrf.mxu0
    %v3423 = vadd.f32 0.0, %v3422
    %3424 = vdwg.mxu0
    %v3426 = vrot.slane %v3423, 1
    %v3427 = vrot.slane %v3423, 2
    %v3428 = vrot.slane %v3423, 3
    %v3429 = vrot.slane %v3423, 4
    %v3434 = vadd.f32 %v3006, %v3426
    %v3435 = vadd.f32 %v3009, %v3427
    %v3436 = vadd.f32 %v3012, %v3428
    %v3437 = vadd.f32 %v3015, %v3429
    %v3438 = vtanh.pop %v3434
    %v3439 = vtanh.pop %v3435
    %v3440 = vtanh.pop %v3436
    %v3441 = vtanh.pop %v3437
    %3442 = vst.msk [vmem:[#allocation2] sm:$0x80] %vm551, %v3438
    %3443 = vst.msk [vmem:[#allocation2 + $0x8] sm:$0x80] %vm551, %v3439
    %3444 = vst.msk [vmem:[#allocation2 + $0x10] sm:$0x80] %vm551, %v3440
    %3445 = vst.msk [vmem:[#allocation2 + $0x18] sm:$0x80] %vm551, %v3441
    %s3446 = scalar_lea.vmem [#allocation6], 192
    %v3447 = vld [vmem:[%s3446] sm:$0xff]
    %v3448 = vld [vmem:[%s3446 + $0x8] sm:$0xff]
    %v3449 = vld [vmem:[%s3446 + $0x10] sm:$0xff]
    %v3450 = vld [vmem:[%s3446 + $0x18] sm:$0xff]
    %v3451 = vld [vmem:[#allocation2] sm:$0xff]
    %v3452 = vld [vmem:[#allocation2 + $0x8] sm:$0xff]
    %v3453 = vld [vmem:[#allocation2 + $0x10] sm:$0xff]
    %v3454 = vld [vmem:[#allocation2 + $0x18] sm:$0xff]
    %s3455 = scalar_lea.vmem %s4, 7
    %v3456 = vld [vmem:[%s3455] sm:$0x1]
    %v3458 = vperm.slane %v3456, 0
    %v3461 = vsel %vm130, %v3451, 0
    %v3464 = vsel %vm130, %v3452, 0
    %v3467 = vsel %vm130, %v3453, 0
    %v3470 = vsel %vm130, %v3454, 0
    %3472 = vmatpush.msra.mxu0 0.0
    %3473 = vmatpush.msra.mxu0 0.0
    %3474 = vmatpush.msra.mxu0 0.0
    %3475 = vmatpush.msra.mxu0 0.0
    %3476 = vmatpush.msra.mxu0 0.0
    %3477 = vmatpush.msra.mxu0 0.0
    %3478 = vmatpush.msra.mxu0 0.0
    %3479 = vmatpush.msra.mxu0 0.0
    %3480 = vmatpush.msra.mxu0 0.0
    %3481 = vmatpush.msra.mxu0 0.0
    %3482 = vmatpush.msra.mxu0 0.0
    %3483 = vmatpush.msra.mxu0 0.0
    %3484 = vmatpush.msra.mxu0 %v3450
    %3485 = vmatpush.msra.mxu0 %v3449
    %3486 = vmatpush.msra.mxu0 %v3448
    %3487 = vmatpush.msra.mxu0 %v3447
    %3488 = vmatmul.f32.gmra.mxu0 %v3461
    %v3489 = vpop.f32.mrf.mxu0
    %v3490 = vadd.f32 %v3458, %v3489
    %3491 = vmatmul.f32.gmra.mxu0 %v3464
    %v3492 = vpop.f32.mrf.mxu0
    %v3493 = vadd.f32 %v3458, %v3492
    %3494 = vmatmul.f32.gmra.mxu0 %v3467
    %v3495 = vpop.f32.mrf.mxu0
    %v3496 = vadd.f32 %v3458, %v3495
    %3497 = vmatmul.f32.gmra.mxu0 %v3470
    %v3498 = vpop.f32.mrf.mxu0
    %v3499 = vadd.f32 %v3458, %v3498
    %3500 = vdwg.mxu0
    %s3501 = scalar_lea.vmem [#allocation8], 224
    %v3502 = vld [vmem:[%s3501] sm:$0xff]
    %v3503 = vld [vmem:[%s3501 + $0x8] sm:$0xff]
    %v3504 = vld [vmem:[%s3501 + $0x10] sm:$0xff]
    %v3505 = vld [vmem:[%s3501 + $0x18] sm:$0xff]
    %v3510 = vrot.slane %v2954, 7
    %v3511 = vrot.slane %v2955, 6
    %v3512 = vsel %vm180, %v3511, %v3510
    %v3513 = vrot.slane %v2956, 5
    %v3514 = vsel %vm183, %v3513, %v3512
    %v3515 = vrot.slane %v2957, 4
    %v3516 = vsel %vm186, %v3515, %v3514
    %v3517 = vsel %vm130, %v3516, 0
    %3519 = vmatpush.msra.mxu0 0.0
    %3520 = vmatpush.msra.mxu0 0.0
    %3521 = vmatpush.msra.mxu0 0.0
    %3522 = vmatpush.msra.mxu0 0.0
    %3523 = vmatpush.msra.mxu0 0.0
    %3524 = vmatpush.msra.mxu0 0.0
    %3525 = vmatpush.msra.mxu0 0.0
    %3526 = vmatpush.msra.mxu0 0.0
    %3527 = vmatpush.msra.mxu0 0.0
    %3528 = vmatpush.msra.mxu0 0.0
    %3529 = vmatpush.msra.mxu0 0.0
    %3530 = vmatpush.msra.mxu0 0.0
    %3531 = vmatpush.msra.mxu0 %v3505
    %3532 = vmatpush.msra.mxu0 %v3504
    %3533 = vmatpush.msra.mxu0 %v3503
    %3534 = vmatpush.msra.mxu0 %v3502
    %3535 = vmatmul.f32.gmra.mxu0 %v3517
    %v3536 = vpop.f32.mrf.mxu0
    %v3537 = vadd.f32 0.0, %v3536
    %3538 = vdwg.mxu0
    %v3540 = vrot.slane %v3537, 1
    %v3541 = vrot.slane %v3537, 2
    %v3542 = vrot.slane %v3537, 3
    %v3547 = vadd.f32 %v3490, %v3537
    %v3548 = vadd.f32 %v3493, %v3540
    %v3549 = vadd.f32 %v3496, %v3541
    %v3550 = vadd.f32 %v3499, %v3542
    %v3551 = vtanh.pop %v3547
    %v3552 = vtanh.pop %v3548
    %v3553 = vtanh.pop %v3549
    %v3554 = vtanh.pop %v3550
    %3555 = vst.msk [vmem:[#allocation2] sm:$0x1] %vm170, %v3551
    %3556 = vst.msk [vmem:[#allocation2 + $0x8] sm:$0x1] %vm170, %v3552
    %3557 = vst.msk [vmem:[#allocation2 + $0x10] sm:$0x1] %vm170, %v3553
    %3558 = vst.msk [vmem:[#allocation2 + $0x18] sm:$0x1] %vm170, %v3554
    %v3563 = vrot.slane %v3552, 7
    %v3564 = vsel %vm180, %v3563, %v3551
    %v3565 = vrot.slane %v3553, 6
    %v3566 = vsel %vm183, %v3565, %v3564
    %v3567 = vrot.slane %v3554, 5
    %v3568 = vsel %vm186, %v3567, %v3566
    %v3569 = vsel %vm130, %v3568, 0
    %3571 = vmatpush.msra.mxu0 0.0
    %3572 = vmatpush.msra.mxu0 0.0
    %3573 = vmatpush.msra.mxu0 0.0
    %3574 = vmatpush.msra.mxu0 0.0
    %3575 = vmatpush.msra.mxu0 0.0
    %3576 = vmatpush.msra.mxu0 0.0
    %3577 = vmatpush.msra.mxu0 0.0
    %3578 = vmatpush.msra.mxu0 0.0
    %3579 = vmatpush.msra.mxu0 0.0
    %3580 = vmatpush.msra.mxu0 0.0
    %3581 = vmatpush.msra.mxu0 0.0
    %3582 = vmatpush.msra.mxu0 0.0
    %3583 = vmatpush.msra.mxu0 %v3505
    %3584 = vmatpush.msra.mxu0 %v3504
    %3585 = vmatpush.msra.mxu0 %v3503
    %3586 = vmatpush.msra.mxu0 %v3502
    %3587 = vmatmul.f32.gmra.mxu0 %v3569
    %v3588 = vpop.f32.mrf.mxu0
    %v3589 = vadd.f32 0.0, %v3588
    %3590 = vdwg.mxu0
    %v3592 = vrot.slane %v3589, 7
    %v3593 = vrot.slane %v3589, 1
    %v3594 = vrot.slane %v3589, 2
    %v3599 = vadd.f32 %v3490, %v3592
    %v3600 = vadd.f32 %v3493, %v3589
    %v3601 = vadd.f32 %v3496, %v3593
    %v3602 = vadd.f32 %v3499, %v3594
    %v3603 = vtanh.pop %v3599
    %v3604 = vtanh.pop %v3600
    %v3605 = vtanh.pop %v3601
    %v3606 = vtanh.pop %v3602
    %3607 = vst.msk [vmem:[#allocation2] sm:$0x2] %vm226, %v3603
    %3608 = vst.msk [vmem:[#allocation2 + $0x8] sm:$0x2] %vm226, %v3604
    %3609 = vst.msk [vmem:[#allocation2 + $0x10] sm:$0x2] %vm226, %v3605
    %3610 = vst.msk [vmem:[#allocation2 + $0x18] sm:$0x2] %vm226, %v3606
    %v3615 = vrot.slane %v3603, 1
    %v3616 = vsel %vm180, %v3604, %v3615
    %v3617 = vrot.slane %v3605, 7
    %v3618 = vsel %vm183, %v3617, %v3616
    %v3619 = vrot.slane %v3606, 6
    %v3620 = vsel %vm186, %v3619, %v3618
    %v3621 = vsel %vm130, %v3620, 0
    %3623 = vmatpush.msra.mxu0 0.0
    %3624 = vmatpush.msra.mxu0 0.0
    %3625 = vmatpush.msra.mxu0 0.0
    %3626 = vmatpush.msra.mxu0 0.0
    %3627 = vmatpush.msra.mxu0 0.0
    %3628 = vmatpush.msra.mxu0 0.0
    %3629 = vmatpush.msra.mxu0 0.0
    %3630 = vmatpush.msra.mxu0 0.0
    %3631 = vmatpush.msra.mxu0 0.0
    %3632 = vmatpush.msra.mxu0 0.0
    %3633 = vmatpush.msra.mxu0 0.0
    %3634 = vmatpush.msra.mxu0 0.0
    %3635 = vmatpush.msra.mxu0 %v3505
    %3636 = vmatpush.msra.mxu0 %v3504
    %3637 = vmatpush.msra.mxu0 %v3503
    %3638 = vmatpush.msra.mxu0 %v3502
    %3639 = vmatmul.f32.gmra.mxu0 %v3621
    %v3640 = vpop.f32.mrf.mxu0
    %v3641 = vadd.f32 0.0, %v3640
    %3642 = vdwg.mxu0
    %v3644 = vrot.slane %v3641, 6
    %v3645 = vrot.slane %v3641, 7
    %v3646 = vrot.slane %v3641, 1
    %v3651 = vadd.f32 %v3490, %v3644
    %v3652 = vadd.f32 %v3493, %v3645
    %v3653 = vadd.f32 %v3496, %v3641
    %v3654 = vadd.f32 %v3499, %v3646
    %v3655 = vtanh.pop %v3651
    %v3656 = vtanh.pop %v3652
    %v3657 = vtanh.pop %v3653
    %v3658 = vtanh.pop %v3654
    %3659 = vst.msk [vmem:[#allocation2] sm:$0x4] %vm279, %v3655
    %3660 = vst.msk [vmem:[#allocation2 + $0x8] sm:$0x4] %vm279, %v3656
    %3661 = vst.msk [vmem:[#allocation2 + $0x10] sm:$0x4] %vm279, %v3657
    %3662 = vst.msk [vmem:[#allocation2 + $0x18] sm:$0x4] %vm279, %v3658
    %v3667 = vrot.slane %v3655, 2
    %v3668 = vrot.slane %v3656, 1
    %v3669 = vsel %vm180, %v3668, %v3667
    %v3670 = vsel %vm183, %v3657, %v3669
    %v3671 = vrot.slane %v3658, 7
    %v3672 = vsel %vm186, %v3671, %v3670
    %v3673 = vsel %vm130, %v3672, 0
    %3675 = vmatpush.msra.mxu0 0.0
    %3676 = vmatpush.msra.mxu0 0.0
    %3677 = vmatpush.msra.mxu0 0.0
    %3678 = vmatpush.msra.mxu0 0.0
    %3679 = vmatpush.msra.mxu0 0.0
    %3680 = vmatpush.msra.mxu0 0.0
    %3681 = vmatpush.msra.mxu0 0.0
    %3682 = vmatpush.msra.mxu0 0.0
    %3683 = vmatpush.msra.mxu0 0.0
    %3684 = vmatpush.msra.mxu0 0.0
    %3685 = vmatpush.msra.mxu0 0.0
    %3686 = vmatpush.msra.mxu0 0.0
    %3687 = vmatpush.msra.mxu0 %v3505
    %3688 = vmatpush.msra.mxu0 %v3504
    %3689 = vmatpush.msra.mxu0 %v3503
    %3690 = vmatpush.msra.mxu0 %v3502
    %3691 = vmatmul.f32.gmra.mxu0 %v3673
    %v3692 = vpop.f32.mrf.mxu0
    %v3693 = vadd.f32 0.0, %v3692
    %3694 = vdwg.mxu0
    %v3696 = vrot.slane %v3693, 5
    %v3697 = vrot.slane %v3693, 6
    %v3698 = vrot.slane %v3693, 7
    %v3703 = vadd.f32 %v3490, %v3696
    %v3704 = vadd.f32 %v3493, %v3697
    %v3705 = vadd.f32 %v3496, %v3698
    %v3706 = vadd.f32 %v3499, %v3693
    %v3707 = vtanh.pop %v3703
    %v3708 = vtanh.pop %v3704
    %v3709 = vtanh.pop %v3705
    %v3710 = vtanh.pop %v3706
    %3711 = vst.msk [vmem:[#allocation2] sm:$0x8] %vm332, %v3707
    %3712 = vst.msk [vmem:[#allocation2 + $0x8] sm:$0x8] %vm332, %v3708
    %3713 = vst.msk [vmem:[#allocation2 + $0x10] sm:$0x8] %vm332, %v3709
    %3714 = vst.msk [vmem:[#allocation2 + $0x18] sm:$0x8] %vm332, %v3710
    %v3719 = vrot.slane %v3707, 3
    %v3720 = vrot.slane %v3708, 2
    %v3721 = vsel %vm180, %v3720, %v3719
    %v3722 = vrot.slane %v3709, 1
    %v3723 = vsel %vm183, %v3722, %v3721
    %v3724 = vsel %vm186, %v3710, %v3723
    %v3725 = vsel %vm130, %v3724, 0
    %3727 = vmatpush.msra.mxu0 0.0
    %3728 = vmatpush.msra.mxu0 0.0
    %3729 = vmatpush.msra.mxu0 0.0
    %3730 = vmatpush.msra.mxu0 0.0
    %3731 = vmatpush.msra.mxu0 0.0
    %3732 = vmatpush.msra.mxu0 0.0
    %3733 = vmatpush.msra.mxu0 0.0
    %3734 = vmatpush.msra.mxu0 0.0
    %3735 = vmatpush.msra.mxu0 0.0
    %3736 = vmatpush.msra.mxu0 0.0
    %3737 = vmatpush.msra.mxu0 0.0
    %3738 = vmatpush.msra.mxu0 0.0
    %3739 = vmatpush.msra.mxu0 %v3505
    %3740 = vmatpush.msra.mxu0 %v3504
    %3741 = vmatpush.msra.mxu0 %v3503
    %3742 = vmatpush.msra.mxu0 %v3502
    %3743 = vmatmul.f32.gmra.mxu0 %v3725
    %v3744 = vpop.f32.mrf.mxu0
    %v3745 = vadd.f32 0.0, %v3744
    %3746 = vdwg.mxu0
    %v3748 = vrot.slane %v3745, 4
    %v3749 = vrot.slane %v3745, 5
    %v3750 = vrot.slane %v3745, 6
    %v3751 = vrot.slane %v3745, 7
    %v3756 = vadd.f32 %v3490, %v3748
    %v3757 = vadd.f32 %v3493, %v3749
    %v3758 = vadd.f32 %v3496, %v3750
    %v3759 = vadd.f32 %v3499, %v3751
    %v3760 = vtanh.pop %v3756
    %v3761 = vtanh.pop %v3757
    %v3762 = vtanh.pop %v3758
    %v3763 = vtanh.pop %v3759
    %3764 = vst.msk [vmem:[#allocation2] sm:$0x10] %vm386, %v3760
    %3765 = vst.msk [vmem:[#allocation2 + $0x8] sm:$0x10] %vm386, %v3761
    %3766 = vst.msk [vmem:[#allocation2 + $0x10] sm:$0x10] %vm386, %v3762
    %3767 = vst.msk [vmem:[#allocation2 + $0x18] sm:$0x10] %vm386, %v3763
    %v3772 = vrot.slane %v3760, 4
    %v3773 = vrot.slane %v3761, 3
    %v3774 = vsel %vm180, %v3773, %v3772
    %v3775 = vrot.slane %v3762, 2
    %v3776 = vsel %vm183, %v3775, %v3774
    %v3777 = vrot.slane %v3763, 1
    %v3778 = vsel %vm186, %v3777, %v3776
    %v3779 = vsel %vm130, %v3778, 0
    %3781 = vmatpush.msra.mxu0 0.0
    %3782 = vmatpush.msra.mxu0 0.0
    %3783 = vmatpush.msra.mxu0 0.0
    %3784 = vmatpush.msra.mxu0 0.0
    %3785 = vmatpush.msra.mxu0 0.0
    %3786 = vmatpush.msra.mxu0 0.0
    %3787 = vmatpush.msra.mxu0 0.0
    %3788 = vmatpush.msra.mxu0 0.0
    %3789 = vmatpush.msra.mxu0 0.0
    %3790 = vmatpush.msra.mxu0 0.0
    %3791 = vmatpush.msra.mxu0 0.0
    %3792 = vmatpush.msra.mxu0 0.0
    %3793 = vmatpush.msra.mxu0 %v3505
    %3794 = vmatpush.msra.mxu0 %v3504
    %3795 = vmatpush.msra.mxu0 %v3503
    %3796 = vmatpush.msra.mxu0 %v3502
    %3797 = vmatmul.f32.gmra.mxu0 %v3779
    %v3798 = vpop.f32.mrf.mxu0
    %v3799 = vadd.f32 0.0, %v3798
    %3800 = vdwg.mxu0
    %v3802 = vrot.slane %v3799, 3
    %v3803 = vrot.slane %v3799, 4
    %v3804 = vrot.slane %v3799, 5
    %v3805 = vrot.slane %v3799, 6
    %v3810 = vadd.f32 %v3490, %v3802
    %v3811 = vadd.f32 %v3493, %v3803
    %v3812 = vadd.f32 %v3496, %v3804
    %v3813 = vadd.f32 %v3499, %v3805
    %v3814 = vtanh.pop %v3810
    %v3815 = vtanh.pop %v3811
    %v3816 = vtanh.pop %v3812
    %v3817 = vtanh.pop %v3813
    %3818 = vst.msk [vmem:[#allocation2] sm:$0x20] %vm441, %v3814
    %3819 = vst.msk [vmem:[#allocation2 + $0x8] sm:$0x20] %vm441, %v3815
    %3820 = vst.msk [vmem:[#allocation2 + $0x10] sm:$0x20] %vm441, %v3816
    %3821 = vst.msk [vmem:[#allocation2 + $0x18] sm:$0x20] %vm441, %v3817
    %v3826 = vrot.slane %v3814, 5
    %v3827 = vrot.slane %v3815, 4
    %v3828 = vsel %vm180, %v3827, %v3826
    %v3829 = vrot.slane %v3816, 3
    %v3830 = vsel %vm183, %v3829, %v3828
    %v3831 = vrot.slane %v3817, 2
    %v3832 = vsel %vm186, %v3831, %v3830
    %v3833 = vsel %vm130, %v3832, 0
    %3835 = vmatpush.msra.mxu0 0.0
    %3836 = vmatpush.msra.mxu0 0.0
    %3837 = vmatpush.msra.mxu0 0.0
    %3838 = vmatpush.msra.mxu0 0.0
    %3839 = vmatpush.msra.mxu0 0.0
    %3840 = vmatpush.msra.mxu0 0.0
    %3841 = vmatpush.msra.mxu0 0.0
    %3842 = vmatpush.msra.mxu0 0.0
    %3843 = vmatpush.msra.mxu0 0.0
    %3844 = vmatpush.msra.mxu0 0.0
    %3845 = vmatpush.msra.mxu0 0.0
    %3846 = vmatpush.msra.mxu0 0.0
    %3847 = vmatpush.msra.mxu0 %v3505
    %3848 = vmatpush.msra.mxu0 %v3504
    %3849 = vmatpush.msra.mxu0 %v3503
    %3850 = vmatpush.msra.mxu0 %v3502
    %3851 = vmatmul.f32.gmra.mxu0 %v3833
    %v3852 = vpop.f32.mrf.mxu0
    %v3853 = vadd.f32 0.0, %v3852
    %3854 = vdwg.mxu0
    %v3856 = vrot.slane %v3853, 2
    %v3857 = vrot.slane %v3853, 3
    %v3858 = vrot.slane %v3853, 4
    %v3859 = vrot.slane %v3853, 5
    %v3864 = vadd.f32 %v3490, %v3856
    %v3865 = vadd.f32 %v3493, %v3857
    %v3866 = vadd.f32 %v3496, %v3858
    %v3867 = vadd.f32 %v3499, %v3859
    %v3868 = vtanh.pop %v3864
    %v3869 = vtanh.pop %v3865
    %v3870 = vtanh.pop %v3866
    %v3871 = vtanh.pop %v3867
    %3872 = vst.msk [vmem:[#allocation2] sm:$0x40] %vm496, %v3868
    %3873 = vst.msk [vmem:[#allocation2 + $0x8] sm:$0x40] %vm496, %v3869
    %3874 = vst.msk [vmem:[#allocation2 + $0x10] sm:$0x40] %vm496, %v3870
    %3875 = vst.msk [vmem:[#allocation2 + $0x18] sm:$0x40] %vm496, %v3871
    %v3880 = vrot.slane %v3868, 6
    %v3881 = vrot.slane %v3869, 5
    %v3882 = vsel %vm180, %v3881, %v3880
    %v3883 = vrot.slane %v3870, 4
    %v3884 = vsel %vm183, %v3883, %v3882
    %v3885 = vrot.slane %v3871, 3
    %v3886 = vsel %vm186, %v3885, %v3884
    %v3887 = vsel %vm130, %v3886, 0
    %3889 = vmatpush.msra.mxu0 0.0
    %3890 = vmatpush.msra.mxu0 0.0
    %3891 = vmatpush.msra.mxu0 0.0
    %3892 = vmatpush.msra.mxu0 0.0
    %3893 = vmatpush.msra.mxu0 0.0
    %3894 = vmatpush.msra.mxu0 0.0
    %3895 = vmatpush.msra.mxu0 0.0
    %3896 = vmatpush.msra.mxu0 0.0
    %3897 = vmatpush.msra.mxu0 0.0
    %3898 = vmatpush.msra.mxu0 0.0
    %3899 = vmatpush.msra.mxu0 0.0
    %3900 = vmatpush.msra.mxu0 0.0
    %3901 = vmatpush.msra.mxu0 %v3505
    %3902 = vmatpush.msra.mxu0 %v3504
    %3903 = vmatpush.msra.mxu0 %v3503
    %3904 = vmatpush.msra.mxu0 %v3502
    %3905 = vmatmul.f32.gmra.mxu0 %v3887
    %v3906 = vpop.f32.mrf.mxu0
    %v3907 = vadd.f32 0.0, %v3906
    %3908 = vdwg.mxu0
    %v3910 = vrot.slane %v3907, 1
    %v3911 = vrot.slane %v3907, 2
    %v3912 = vrot.slane %v3907, 3
    %v3913 = vrot.slane %v3907, 4
    %v3918 = vadd.f32 %v3490, %v3910
    %v3919 = vadd.f32 %v3493, %v3911
    %v3920 = vadd.f32 %v3496, %v3912
    %v3921 = vadd.f32 %v3499, %v3913
    %v3922 = vtanh.pop %v3918
    %v3923 = vtanh.pop %v3919
    %v3924 = vtanh.pop %v3920
    %v3925 = vtanh.pop %v3921
    %3926 = vst.msk [vmem:[#allocation2] sm:$0x80] %vm551, %v3922
    %3927 = vst.msk [vmem:[#allocation2 + $0x8] sm:$0x80] %vm551, %v3923
    %3928 = vst.msk [vmem:[#allocation2 + $0x10] sm:$0x80] %vm551, %v3924
    %3929 = vst.msk [vmem:[#allocation2 + $0x18] sm:$0x80] %vm551, %v3925
    %s3930 = scalar_lea.vmem [#allocation6], 224
    %v3931 = vld [vmem:[%s3930] sm:$0xff]
    %v3932 = vld [vmem:[%s3930 + $0x8] sm:$0xff]
    %v3933 = vld [vmem:[%s3930 + $0x10] sm:$0xff]
    %v3934 = vld [vmem:[%s3930 + $0x18] sm:$0xff]
    %v3935 = vld [vmem:[#allocation2] sm:$0xff]
    %v3936 = vld [vmem:[#allocation2 + $0x8] sm:$0xff]
    %v3937 = vld [vmem:[#allocation2 + $0x10] sm:$0xff]
    %v3938 = vld [vmem:[#allocation2 + $0x18] sm:$0xff]
    %s3939 = scalar_lea.vmem %s4, 8
    %v3940 = vld [vmem:[%s3939] sm:$0x1]
    %v3942 = vperm.slane %v3940, 0
    %v3945 = vsel %vm130, %v3935, 0
    %v3948 = vsel %vm130, %v3936, 0
    %v3951 = vsel %vm130, %v3937, 0
    %v3954 = vsel %vm130, %v3938, 0
    %3956 = vmatpush.msra.mxu0 0.0
    %3957 = vmatpush.msra.mxu0 0.0
    %3958 = vmatpush.msra.mxu0 0.0
    %3959 = vmatpush.msra.mxu0 0.0
    %3960 = vmatpush.msra.mxu0 0.0
    %3961 = vmatpush.msra.mxu0 0.0
    %3962 = vmatpush.msra.mxu0 0.0
    %3963 = vmatpush.msra.mxu0 0.0
    %3964 = vmatpush.msra.mxu0 0.0
    %3965 = vmatpush.msra.mxu0 0.0
    %3966 = vmatpush.msra.mxu0 0.0
    %3967 = vmatpush.msra.mxu0 0.0
    %3968 = vmatpush.msra.mxu0 %v3934
    %3969 = vmatpush.msra.mxu0 %v3933
    %3970 = vmatpush.msra.mxu0 %v3932
    %3971 = vmatpush.msra.mxu0 %v3931
    %3972 = vmatmul.f32.gmra.mxu0 %v3945
    %v3973 = vpop.f32.mrf.mxu0
    %v3974 = vadd.f32 %v3942, %v3973
    %3975 = vmatmul.f32.gmra.mxu0 %v3948
    %v3976 = vpop.f32.mrf.mxu0
    %v3977 = vadd.f32 %v3942, %v3976
    %3978 = vmatmul.f32.gmra.mxu0 %v3951
    %v3979 = vpop.f32.mrf.mxu0
    %v3980 = vadd.f32 %v3942, %v3979
    %3981 = vmatmul.f32.gmra.mxu0 %v3954
    %v3982 = vpop.f32.mrf.mxu0
    %v3983 = vadd.f32 %v3942, %v3982
    %3984 = vdwg.mxu0
    %s3985 = scalar_lea.vmem [#allocation8], 256
    %v3986 = vld [vmem:[%s3985] sm:$0xff]
    %v3987 = vld [vmem:[%s3985 + $0x8] sm:$0xff]
    %v3988 = vld [vmem:[%s3985 + $0x10] sm:$0xff]
    %v3989 = vld [vmem:[%s3985 + $0x18] sm:$0xff]
    %v3994 = vrot.slane %v3438, 7
    %v3995 = vrot.slane %v3439, 6
    %v3996 = vsel %vm180, %v3995, %v3994
    %v3997 = vrot.slane %v3440, 5
    %v3998 = vsel %vm183, %v3997, %v3996
    %v3999 = vrot.slane %v3441, 4
    %v4000 = vsel %vm186, %v3999, %v3998
    %v4001 = vsel %vm130, %v4000, 0
    %4003 = vmatpush.msra.mxu0 0.0
    %4004 = vmatpush.msra.mxu0 0.0
    %4005 = vmatpush.msra.mxu0 0.0
    %4006 = vmatpush.msra.mxu0 0.0
    %4007 = vmatpush.msra.mxu0 0.0
    %4008 = vmatpush.msra.mxu0 0.0
    %4009 = vmatpush.msra.mxu0 0.0
    %4010 = vmatpush.msra.mxu0 0.0
    %4011 = vmatpush.msra.mxu0 0.0
    %4012 = vmatpush.msra.mxu0 0.0
    %4013 = vmatpush.msra.mxu0 0.0
    %4014 = vmatpush.msra.mxu0 0.0
    %4015 = vmatpush.msra.mxu0 %v3989
    %4016 = vmatpush.msra.mxu0 %v3988
    %4017 = vmatpush.msra.mxu0 %v3987
    %4018 = vmatpush.msra.mxu0 %v3986
    %4019 = vmatmul.f32.gmra.mxu0 %v4001
    %v4020 = vpop.f32.mrf.mxu0
    %v4021 = vadd.f32 0.0, %v4020
    %4022 = vdwg.mxu0
    %v4024 = vrot.slane %v4021, 1
    %v4025 = vrot.slane %v4021, 2
    %v4026 = vrot.slane %v4021, 3
    %v4031 = vadd.f32 %v3974, %v4021
    %v4032 = vadd.f32 %v3977, %v4024
    %v4033 = vadd.f32 %v3980, %v4025
    %v4034 = vadd.f32 %v3983, %v4026
    %v4035 = vtanh.pop %v4031
    %v4036 = vtanh.pop %v4032
    %v4037 = vtanh.pop %v4033
    %v4038 = vtanh.pop %v4034
    %4039 = vst.msk [vmem:[#allocation2] sm:$0x1] %vm170, %v4035
    %4040 = vst.msk [vmem:[#allocation2 + $0x8] sm:$0x1] %vm170, %v4036
    %4041 = vst.msk [vmem:[#allocation2 + $0x10] sm:$0x1] %vm170, %v4037
    %4042 = vst.msk [vmem:[#allocation2 + $0x18] sm:$0x1] %vm170, %v4038
    %v4047 = vrot.slane %v4036, 7
    %v4048 = vsel %vm180, %v4047, %v4035
    %v4049 = vrot.slane %v4037, 6
    %v4050 = vsel %vm183, %v4049, %v4048
    %v4051 = vrot.slane %v4038, 5
    %v4052 = vsel %vm186, %v4051, %v4050
    %v4053 = vsel %vm130, %v4052, 0
    %4055 = vmatpush.msra.mxu0 0.0
    %4056 = vmatpush.msra.mxu0 0.0
    %4057 = vmatpush.msra.mxu0 0.0
    %4058 = vmatpush.msra.mxu0 0.0
    %4059 = vmatpush.msra.mxu0 0.0
    %4060 = vmatpush.msra.mxu0 0.0
    %4061 = vmatpush.msra.mxu0 0.0
    %4062 = vmatpush.msra.mxu0 0.0
    %4063 = vmatpush.msra.mxu0 0.0
    %4064 = vmatpush.msra.mxu0 0.0
    %4065 = vmatpush.msra.mxu0 0.0
    %4066 = vmatpush.msra.mxu0 0.0
    %4067 = vmatpush.msra.mxu0 %v3989
    %4068 = vmatpush.msra.mxu0 %v3988
    %4069 = vmatpush.msra.mxu0 %v3987
    %4070 = vmatpush.msra.mxu0 %v3986
    %4071 = vmatmul.f32.gmra.mxu0 %v4053
    %v4072 = vpop.f32.mrf.mxu0
    %v4073 = vadd.f32 0.0, %v4072
    %4074 = vdwg.mxu0
    %v4076 = vrot.slane %v4073, 7
    %v4077 = vrot.slane %v4073, 1
    %v4078 = vrot.slane %v4073, 2
    %v4083 = vadd.f32 %v3974, %v4076
    %v4084 = vadd.f32 %v3977, %v4073
    %v4085 = vadd.f32 %v3980, %v4077
    %v4086 = vadd.f32 %v3983, %v4078
    %v4087 = vtanh.pop %v4083
    %v4088 = vtanh.pop %v4084
    %v4089 = vtanh.pop %v4085
    %v4090 = vtanh.pop %v4086
    %4091 = vst.msk [vmem:[#allocation2] sm:$0x2] %vm226, %v4087
    %4092 = vst.msk [vmem:[#allocation2 + $0x8] sm:$0x2] %vm226, %v4088
    %4093 = vst.msk [vmem:[#allocation2 + $0x10] sm:$0x2] %vm226, %v4089
    %4094 = vst.msk [vmem:[#allocation2 + $0x18] sm:$0x2] %vm226, %v4090
    %v4099 = vrot.slane %v4087, 1
    %v4100 = vsel %vm180, %v4088, %v4099
    %v4101 = vrot.slane %v4089, 7
    %v4102 = vsel %vm183, %v4101, %v4100
    %v4103 = vrot.slane %v4090, 6
    %v4104 = vsel %vm186, %v4103, %v4102
    %v4105 = vsel %vm130, %v4104, 0
    %4107 = vmatpush.msra.mxu0 0.0
    %4108 = vmatpush.msra.mxu0 0.0
    %4109 = vmatpush.msra.mxu0 0.0
    %4110 = vmatpush.msra.mxu0 0.0
    %4111 = vmatpush.msra.mxu0 0.0
    %4112 = vmatpush.msra.mxu0 0.0
    %4113 = vmatpush.msra.mxu0 0.0
    %4114 = vmatpush.msra.mxu0 0.0
    %4115 = vmatpush.msra.mxu0 0.0
    %4116 = vmatpush.msra.mxu0 0.0
    %4117 = vmatpush.msra.mxu0 0.0
    %4118 = vmatpush.msra.mxu0 0.0
    %4119 = vmatpush.msra.mxu0 %v3989
    %4120 = vmatpush.msra.mxu0 %v3988
    %4121 = vmatpush.msra.mxu0 %v3987
    %4122 = vmatpush.msra.mxu0 %v3986
    %4123 = vmatmul.f32.gmra.mxu0 %v4105
    %v4124 = vpop.f32.mrf.mxu0
    %v4125 = vadd.f32 0.0, %v4124
    %4126 = vdwg.mxu0
    %v4128 = vrot.slane %v4125, 6
    %v4129 = vrot.slane %v4125, 7
    %v4130 = vrot.slane %v4125, 1
    %v4135 = vadd.f32 %v3974, %v4128
    %v4136 = vadd.f32 %v3977, %v4129
    %v4137 = vadd.f32 %v3980, %v4125
    %v4138 = vadd.f32 %v3983, %v4130
    %v4139 = vtanh.pop %v4135
    %v4140 = vtanh.pop %v4136
    %v4141 = vtanh.pop %v4137
    %v4142 = vtanh.pop %v4138
    %4143 = vst.msk [vmem:[#allocation2] sm:$0x4] %vm279, %v4139
    %4144 = vst.msk [vmem:[#allocation2 + $0x8] sm:$0x4] %vm279, %v4140
    %4145 = vst.msk [vmem:[#allocation2 + $0x10] sm:$0x4] %vm279, %v4141
    %4146 = vst.msk [vmem:[#allocation2 + $0x18] sm:$0x4] %vm279, %v4142
    %v4151 = vrot.slane %v4139, 2
    %v4152 = vrot.slane %v4140, 1
    %v4153 = vsel %vm180, %v4152, %v4151
    %v4154 = vsel %vm183, %v4141, %v4153
    %v4155 = vrot.slane %v4142, 7
    %v4156 = vsel %vm186, %v4155, %v4154
    %v4157 = vsel %vm130, %v4156, 0
    %4159 = vmatpush.msra.mxu0 0.0
    %4160 = vmatpush.msra.mxu0 0.0
    %4161 = vmatpush.msra.mxu0 0.0
    %4162 = vmatpush.msra.mxu0 0.0
    %4163 = vmatpush.msra.mxu0 0.0
    %4164 = vmatpush.msra.mxu0 0.0
    %4165 = vmatpush.msra.mxu0 0.0
    %4166 = vmatpush.msra.mxu0 0.0
    %4167 = vmatpush.msra.mxu0 0.0
    %4168 = vmatpush.msra.mxu0 0.0
    %4169 = vmatpush.msra.mxu0 0.0
    %4170 = vmatpush.msra.mxu0 0.0
    %4171 = vmatpush.msra.mxu0 %v3989
    %4172 = vmatpush.msra.mxu0 %v3988
    %4173 = vmatpush.msra.mxu0 %v3987
    %4174 = vmatpush.msra.mxu0 %v3986
    %4175 = vmatmul.f32.gmra.mxu0 %v4157
    %v4176 = vpop.f32.mrf.mxu0
    %v4177 = vadd.f32 0.0, %v4176
    %4178 = vdwg.mxu0
    %v4180 = vrot.slane %v4177, 5
    %v4181 = vrot.slane %v4177, 6
    %v4182 = vrot.slane %v4177, 7
    %v4187 = vadd.f32 %v3974, %v4180
    %v4188 = vadd.f32 %v3977, %v4181
    %v4189 = vadd.f32 %v3980, %v4182
    %v4190 = vadd.f32 %v3983, %v4177
    %v4191 = vtanh.pop %v4187
    %v4192 = vtanh.pop %v4188
    %v4193 = vtanh.pop %v4189
    %v4194 = vtanh.pop %v4190
    %4195 = vst.msk [vmem:[#allocation2] sm:$0x8] %vm332, %v4191
    %4196 = vst.msk [vmem:[#allocation2 + $0x8] sm:$0x8] %vm332, %v4192
    %4197 = vst.msk [vmem:[#allocation2 + $0x10] sm:$0x8] %vm332, %v4193
    %4198 = vst.msk [vmem:[#allocation2 + $0x18] sm:$0x8] %vm332, %v4194
    %v4203 = vrot.slane %v4191, 3
    %v4204 = vrot.slane %v4192, 2
    %v4205 = vsel %vm180, %v4204, %v4203
    %v4206 = vrot.slane %v4193, 1
    %v4207 = vsel %vm183, %v4206, %v4205
    %v4208 = vsel %vm186, %v4194, %v4207
    %v4209 = vsel %vm130, %v4208, 0
    %4211 = vmatpush.msra.mxu0 0.0
    %4212 = vmatpush.msra.mxu0 0.0
    %4213 = vmatpush.msra.mxu0 0.0
    %4214 = vmatpush.msra.mxu0 0.0
    %4215 = vmatpush.msra.mxu0 0.0
    %4216 = vmatpush.msra.mxu0 0.0
    %4217 = vmatpush.msra.mxu0 0.0
    %4218 = vmatpush.msra.mxu0 0.0
    %4219 = vmatpush.msra.mxu0 0.0
    %4220 = vmatpush.msra.mxu0 0.0
    %4221 = vmatpush.msra.mxu0 0.0
    %4222 = vmatpush.msra.mxu0 0.0
    %4223 = vmatpush.msra.mxu0 %v3989
    %4224 = vmatpush.msra.mxu0 %v3988
    %4225 = vmatpush.msra.mxu0 %v3987
    %4226 = vmatpush.msra.mxu0 %v3986
    %4227 = vmatmul.f32.gmra.mxu0 %v4209
    %v4228 = vpop.f32.mrf.mxu0
    %v4229 = vadd.f32 0.0, %v4228
    %4230 = vdwg.mxu0
    %v4232 = vrot.slane %v4229, 4
    %v4233 = vrot.slane %v4229, 5
    %v4234 = vrot.slane %v4229, 6
    %v4235 = vrot.slane %v4229, 7
    %v4240 = vadd.f32 %v3974, %v4232
    %v4241 = vadd.f32 %v3977, %v4233
    %v4242 = vadd.f32 %v3980, %v4234
    %v4243 = vadd.f32 %v3983, %v4235
    %v4244 = vtanh.pop %v4240
    %v4245 = vtanh.pop %v4241
    %v4246 = vtanh.pop %v4242
    %v4247 = vtanh.pop %v4243
    %4248 = vst.msk [vmem:[#allocation2] sm:$0x10] %vm386, %v4244
    %4249 = vst.msk [vmem:[#allocation2 + $0x8] sm:$0x10] %vm386, %v4245
    %4250 = vst.msk [vmem:[#allocation2 + $0x10] sm:$0x10] %vm386, %v4246
    %4251 = vst.msk [vmem:[#allocation2 + $0x18] sm:$0x10] %vm386, %v4247
    %v4256 = vrot.slane %v4244, 4
    %v4257 = vrot.slane %v4245, 3
    %v4258 = vsel %vm180, %v4257, %v4256
    %v4259 = vrot.slane %v4246, 2
    %v4260 = vsel %vm183, %v4259, %v4258
    %v4261 = vrot.slane %v4247, 1
    %v4262 = vsel %vm186, %v4261, %v4260
    %v4263 = vsel %vm130, %v4262, 0
    %4265 = vmatpush.msra.mxu0 0.0
    %4266 = vmatpush.msra.mxu0 0.0
    %4267 = vmatpush.msra.mxu0 0.0
    %4268 = vmatpush.msra.mxu0 0.0
    %4269 = vmatpush.msra.mxu0 0.0
    %4270 = vmatpush.msra.mxu0 0.0
    %4271 = vmatpush.msra.mxu0 0.0
    %4272 = vmatpush.msra.mxu0 0.0
    %4273 = vmatpush.msra.mxu0 0.0
    %4274 = vmatpush.msra.mxu0 0.0
    %4275 = vmatpush.msra.mxu0 0.0
    %4276 = vmatpush.msra.mxu0 0.0
    %4277 = vmatpush.msra.mxu0 %v3989
    %4278 = vmatpush.msra.mxu0 %v3988
    %4279 = vmatpush.msra.mxu0 %v3987
    %4280 = vmatpush.msra.mxu0 %v3986
    %4281 = vmatmul.f32.gmra.mxu0 %v4263
    %v4282 = vpop.f32.mrf.mxu0
    %v4283 = vadd.f32 0.0, %v4282
    %4284 = vdwg.mxu0
    %v4286 = vrot.slane %v4283, 3
    %v4287 = vrot.slane %v4283, 4
    %v4288 = vrot.slane %v4283, 5
    %v4289 = vrot.slane %v4283, 6
    %v4294 = vadd.f32 %v3974, %v4286
    %v4295 = vadd.f32 %v3977, %v4287
    %v4296 = vadd.f32 %v3980, %v4288
    %v4297 = vadd.f32 %v3983, %v4289
    %v4298 = vtanh.pop %v4294
    %v4299 = vtanh.pop %v4295
    %v4300 = vtanh.pop %v4296
    %v4301 = vtanh.pop %v4297
    %4302 = vst.msk [vmem:[#allocation2] sm:$0x20] %vm441, %v4298
    %4303 = vst.msk [vmem:[#allocation2 + $0x8] sm:$0x20] %vm441, %v4299
    %4304 = vst.msk [vmem:[#allocation2 + $0x10] sm:$0x20] %vm441, %v4300
    %4305 = vst.msk [vmem:[#allocation2 + $0x18] sm:$0x20] %vm441, %v4301
    %v4310 = vrot.slane %v4298, 5
    %v4311 = vrot.slane %v4299, 4
    %v4312 = vsel %vm180, %v4311, %v4310
    %v4313 = vrot.slane %v4300, 3
    %v4314 = vsel %vm183, %v4313, %v4312
    %v4315 = vrot.slane %v4301, 2
    %v4316 = vsel %vm186, %v4315, %v4314
    %v4317 = vsel %vm130, %v4316, 0
    %4319 = vmatpush.msra.mxu0 0.0
    %4320 = vmatpush.msra.mxu0 0.0
    %4321 = vmatpush.msra.mxu0 0.0
    %4322 = vmatpush.msra.mxu0 0.0
    %4323 = vmatpush.msra.mxu0 0.0
    %4324 = vmatpush.msra.mxu0 0.0
    %4325 = vmatpush.msra.mxu0 0.0
    %4326 = vmatpush.msra.mxu0 0.0
    %4327 = vmatpush.msra.mxu0 0.0
    %4328 = vmatpush.msra.mxu0 0.0
    %4329 = vmatpush.msra.mxu0 0.0
    %4330 = vmatpush.msra.mxu0 0.0
    %4331 = vmatpush.msra.mxu0 %v3989
    %4332 = vmatpush.msra.mxu0 %v3988
    %4333 = vmatpush.msra.mxu0 %v3987
    %4334 = vmatpush.msra.mxu0 %v3986
    %4335 = vmatmul.f32.gmra.mxu0 %v4317
    %v4336 = vpop.f32.mrf.mxu0
    %v4337 = vadd.f32 0.0, %v4336
    %4338 = vdwg.mxu0
    %v4340 = vrot.slane %v4337, 2
    %v4341 = vrot.slane %v4337, 3
    %v4342 = vrot.slane %v4337, 4
    %v4343 = vrot.slane %v4337, 5
    %v4348 = vadd.f32 %v3974, %v4340
    %v4349 = vadd.f32 %v3977, %v4341
    %v4350 = vadd.f32 %v3980, %v4342
    %v4351 = vadd.f32 %v3983, %v4343
    %v4352 = vtanh.pop %v4348
    %v4353 = vtanh.pop %v4349
    %v4354 = vtanh.pop %v4350
    %v4355 = vtanh.pop %v4351
    %4356 = vst.msk [vmem:[#allocation2] sm:$0x40] %vm496, %v4352
    %4357 = vst.msk [vmem:[#allocation2 + $0x8] sm:$0x40] %vm496, %v4353
    %4358 = vst.msk [vmem:[#allocation2 + $0x10] sm:$0x40] %vm496, %v4354
    %4359 = vst.msk [vmem:[#allocation2 + $0x18] sm:$0x40] %vm496, %v4355
    %v4364 = vrot.slane %v4352, 6
    %v4365 = vrot.slane %v4353, 5
    %v4366 = vsel %vm180, %v4365, %v4364
    %v4367 = vrot.slane %v4354, 4
    %v4368 = vsel %vm183, %v4367, %v4366
    %v4369 = vrot.slane %v4355, 3
    %v4370 = vsel %vm186, %v4369, %v4368
    %v4371 = vsel %vm130, %v4370, 0
    %4373 = vmatpush.msra.mxu0 0.0
    %4374 = vmatpush.msra.mxu0 0.0
    %4375 = vmatpush.msra.mxu0 0.0
    %4376 = vmatpush.msra.mxu0 0.0
    %4377 = vmatpush.msra.mxu0 0.0
    %4378 = vmatpush.msra.mxu0 0.0
    %4379 = vmatpush.msra.mxu0 0.0
    %4380 = vmatpush.msra.mxu0 0.0
    %4381 = vmatpush.msra.mxu0 0.0
    %4382 = vmatpush.msra.mxu0 0.0
    %4383 = vmatpush.msra.mxu0 0.0
    %4384 = vmatpush.msra.mxu0 0.0
    %4385 = vmatpush.msra.mxu0 %v3989
    %4386 = vmatpush.msra.mxu0 %v3988
    %4387 = vmatpush.msra.mxu0 %v3987
    %4388 = vmatpush.msra.mxu0 %v3986
    %4389 = vmatmul.f32.gmra.mxu0 %v4371
    %v4390 = vpop.f32.mrf.mxu0
    %v4391 = vadd.f32 0.0, %v4390
    %4392 = vdwg.mxu0
    %v4394 = vrot.slane %v4391, 1
    %v4395 = vrot.slane %v4391, 2
    %v4396 = vrot.slane %v4391, 3
    %v4397 = vrot.slane %v4391, 4
    %v4402 = vadd.f32 %v3974, %v4394
    %v4403 = vadd.f32 %v3977, %v4395
    %v4404 = vadd.f32 %v3980, %v4396
    %v4405 = vadd.f32 %v3983, %v4397
    %v4406 = vtanh.pop %v4402
    %v4407 = vtanh.pop %v4403
    %v4408 = vtanh.pop %v4404
    %v4409 = vtanh.pop %v4405
    %4410 = vst.msk [vmem:[#allocation2] sm:$0x80] %vm551, %v4406
    %4411 = vst.msk [vmem:[#allocation2 + $0x8] sm:$0x80] %vm551, %v4407
    %4412 = vst.msk [vmem:[#allocation2 + $0x10] sm:$0x80] %vm551, %v4408
    %4413 = vst.msk [vmem:[#allocation2 + $0x18] sm:$0x80] %vm551, %v4409
    %s4414 = scalar_lea.vmem [#allocation6], 256
    %v4415 = vld [vmem:[%s4414] sm:$0xff]
    %v4416 = vld [vmem:[%s4414 + $0x8] sm:$0xff]
    %v4417 = vld [vmem:[%s4414 + $0x10] sm:$0xff]
    %v4418 = vld [vmem:[%s4414 + $0x18] sm:$0xff]
    %v4419 = vld [vmem:[#allocation2] sm:$0xff]
    %v4420 = vld [vmem:[#allocation2 + $0x8] sm:$0xff]
    %v4421 = vld [vmem:[#allocation2 + $0x10] sm:$0xff]
    %v4422 = vld [vmem:[#allocation2 + $0x18] sm:$0xff]
    %s4423 = scalar_lea.vmem %s4, 9
    %v4424 = vld [vmem:[%s4423] sm:$0x1]
    %v4426 = vperm.slane %v4424, 0
    %v4429 = vsel %vm130, %v4419, 0
    %v4432 = vsel %vm130, %v4420, 0
    %v4435 = vsel %vm130, %v4421, 0
    %v4438 = vsel %vm130, %v4422, 0
    %4440 = vmatpush.msra.mxu0 0.0
    %4441 = vmatpush.msra.mxu0 0.0
    %4442 = vmatpush.msra.mxu0 0.0
    %4443 = vmatpush.msra.mxu0 0.0
    %4444 = vmatpush.msra.mxu0 0.0
    %4445 = vmatpush.msra.mxu0 0.0
    %4446 = vmatpush.msra.mxu0 0.0
    %4447 = vmatpush.msra.mxu0 0.0
    %4448 = vmatpush.msra.mxu0 0.0
    %4449 = vmatpush.msra.mxu0 0.0
    %4450 = vmatpush.msra.mxu0 0.0
    %4451 = vmatpush.msra.mxu0 0.0
    %4452 = vmatpush.msra.mxu0 %v4418
    %4453 = vmatpush.msra.mxu0 %v4417
    %4454 = vmatpush.msra.mxu0 %v4416
    %4455 = vmatpush.msra.mxu0 %v4415
    %4456 = vmatmul.f32.gmra.mxu0 %v4429
    %v4457 = vpop.f32.mrf.mxu0
    %v4458 = vadd.f32 %v4426, %v4457
    %4459 = vmatmul.f32.gmra.mxu0 %v4432
    %v4460 = vpop.f32.mrf.mxu0
    %v4461 = vadd.f32 %v4426, %v4460
    %4462 = vmatmul.f32.gmra.mxu0 %v4435
    %v4463 = vpop.f32.mrf.mxu0
    %v4464 = vadd.f32 %v4426, %v4463
    %4465 = vmatmul.f32.gmra.mxu0 %v4438
    %v4466 = vpop.f32.mrf.mxu0
    %v4467 = vadd.f32 %v4426, %v4466
    %4468 = vdwg.mxu0
    %s4469 = scalar_lea.vmem [#allocation8], 288
    %v4470 = vld [vmem:[%s4469] sm:$0xff]
    %v4471 = vld [vmem:[%s4469 + $0x8] sm:$0xff]
    %v4472 = vld [vmem:[%s4469 + $0x10] sm:$0xff]
    %v4473 = vld [vmem:[%s4469 + $0x18] sm:$0xff]
    %v4478 = vrot.slane %v3922, 7
    %v4479 = vrot.slane %v3923, 6
    %v4480 = vsel %vm180, %v4479, %v4478
    %v4481 = vrot.slane %v3924, 5
    %v4482 = vsel %vm183, %v4481, %v4480
    %v4483 = vrot.slane %v3925, 4
    %v4484 = vsel %vm186, %v4483, %v4482
    %v4485 = vsel %vm130, %v4484, 0
    %4487 = vmatpush.msra.mxu0 0.0
    %4488 = vmatpush.msra.mxu0 0.0
    %4489 = vmatpush.msra.mxu0 0.0
    %4490 = vmatpush.msra.mxu0 0.0
    %4491 = vmatpush.msra.mxu0 0.0
    %4492 = vmatpush.msra.mxu0 0.0
    %4493 = vmatpush.msra.mxu0 0.0
    %4494 = vmatpush.msra.mxu0 0.0
    %4495 = vmatpush.msra.mxu0 0.0
    %4496 = vmatpush.msra.mxu0 0.0
    %4497 = vmatpush.msra.mxu0 0.0
    %4498 = vmatpush.msra.mxu0 0.0
    %4499 = vmatpush.msra.mxu0 %v4473
    %4500 = vmatpush.msra.mxu0 %v4472
    %4501 = vmatpush.msra.mxu0 %v4471
    %4502 = vmatpush.msra.mxu0 %v4470
    %4503 = vmatmul.f32.gmra.mxu0 %v4485
    %v4504 = vpop.f32.mrf.mxu0
    %v4505 = vadd.f32 0.0, %v4504
    %4506 = vdwg.mxu0
    %v4508 = vrot.slane %v4505, 1
    %v4509 = vrot.slane %v4505, 2
    %v4510 = vrot.slane %v4505, 3
    %v4515 = vadd.f32 %v4458, %v4505
    %v4516 = vadd.f32 %v4461, %v4508
    %v4517 = vadd.f32 %v4464, %v4509
    %v4518 = vadd.f32 %v4467, %v4510
    %v4519 = vtanh.pop %v4515
    %v4520 = vtanh.pop %v4516
    %v4521 = vtanh.pop %v4517
    %v4522 = vtanh.pop %v4518
    %4523 = vst.msk [vmem:[#allocation2] sm:$0x1] %vm170, %v4519
    %4524 = vst.msk [vmem:[#allocation2 + $0x8] sm:$0x1] %vm170, %v4520
    %4525 = vst.msk [vmem:[#allocation2 + $0x10] sm:$0x1] %vm170, %v4521
    %4526 = vst.msk [vmem:[#allocation2 + $0x18] sm:$0x1] %vm170, %v4522
    %v4531 = vrot.slane %v4520, 7
    %v4532 = vsel %vm180, %v4531, %v4519
    %v4533 = vrot.slane %v4521, 6
    %v4534 = vsel %vm183, %v4533, %v4532
    %v4535 = vrot.slane %v4522, 5
    %v4536 = vsel %vm186, %v4535, %v4534
    %v4537 = vsel %vm130, %v4536, 0
    %4539 = vmatpush.msra.mxu0 0.0
    %4540 = vmatpush.msra.mxu0 0.0
    %4541 = vmatpush.msra.mxu0 0.0
    %4542 = vmatpush.msra.mxu0 0.0
    %4543 = vmatpush.msra.mxu0 0.0
    %4544 = vmatpush.msra.mxu0 0.0
    %4545 = vmatpush.msra.mxu0 0.0
    %4546 = vmatpush.msra.mxu0 0.0
    %4547 = vmatpush.msra.mxu0 0.0
    %4548 = vmatpush.msra.mxu0 0.0
    %4549 = vmatpush.msra.mxu0 0.0
    %4550 = vmatpush.msra.mxu0 0.0
    %4551 = vmatpush.msra.mxu0 %v4473
    %4552 = vmatpush.msra.mxu0 %v4472
    %4553 = vmatpush.msra.mxu0 %v4471
    %4554 = vmatpush.msra.mxu0 %v4470
    %4555 = vmatmul.f32.gmra.mxu0 %v4537
    %v4556 = vpop.f32.mrf.mxu0
    %v4557 = vadd.f32 0.0, %v4556
    %4558 = vdwg.mxu0
    %v4560 = vrot.slane %v4557, 7
    %v4561 = vrot.slane %v4557, 1
    %v4562 = vrot.slane %v4557, 2
    %v4567 = vadd.f32 %v4458, %v4560
    %v4568 = vadd.f32 %v4461, %v4557
    %v4569 = vadd.f32 %v4464, %v4561
    %v4570 = vadd.f32 %v4467, %v4562
    %v4571 = vtanh.pop %v4567
    %v4572 = vtanh.pop %v4568
    %v4573 = vtanh.pop %v4569
    %v4574 = vtanh.pop %v4570
    %4575 = vst.msk [vmem:[#allocation2] sm:$0x2] %vm226, %v4571
    %4576 = vst.msk [vmem:[#allocation2 + $0x8] sm:$0x2] %vm226, %v4572
    %4577 = vst.msk [vmem:[#allocation2 + $0x10] sm:$0x2] %vm226, %v4573
    %4578 = vst.msk [vmem:[#allocation2 + $0x18] sm:$0x2] %vm226, %v4574
    %v4583 = vrot.slane %v4571, 1
    %v4584 = vsel %vm180, %v4572, %v4583
    %v4585 = vrot.slane %v4573, 7
    %v4586 = vsel %vm183, %v4585, %v4584
    %v4587 = vrot.slane %v4574, 6
    %v4588 = vsel %vm186, %v4587, %v4586
    %v4589 = vsel %vm130, %v4588, 0
    %4591 = vmatpush.msra.mxu0 0.0
    %4592 = vmatpush.msra.mxu0 0.0
    %4593 = vmatpush.msra.mxu0 0.0
    %4594 = vmatpush.msra.mxu0 0.0
    %4595 = vmatpush.msra.mxu0 0.0
    %4596 = vmatpush.msra.mxu0 0.0
    %4597 = vmatpush.msra.mxu0 0.0
    %4598 = vmatpush.msra.mxu0 0.0
    %4599 = vmatpush.msra.mxu0 0.0
    %4600 = vmatpush.msra.mxu0 0.0
    %4601 = vmatpush.msra.mxu0 0.0
    %4602 = vmatpush.msra.mxu0 0.0
    %4603 = vmatpush.msra.mxu0 %v4473
    %4604 = vmatpush.msra.mxu0 %v4472
    %4605 = vmatpush.msra.mxu0 %v4471
    %4606 = vmatpush.msra.mxu0 %v4470
    %4607 = vmatmul.f32.gmra.mxu0 %v4589
    %v4608 = vpop.f32.mrf.mxu0
    %v4609 = vadd.f32 0.0, %v4608
    %4610 = vdwg.mxu0
    %v4612 = vrot.slane %v4609, 6
    %v4613 = vrot.slane %v4609, 7
    %v4614 = vrot.slane %v4609, 1
    %v4619 = vadd.f32 %v4458, %v4612
    %v4620 = vadd.f32 %v4461, %v4613
    %v4621 = vadd.f32 %v4464, %v4609
    %v4622 = vadd.f32 %v4467, %v4614
    %v4623 = vtanh.pop %v4619
    %v4624 = vtanh.pop %v4620
    %v4625 = vtanh.pop %v4621
    %v4626 = vtanh.pop %v4622
    %4627 = vst.msk [vmem:[#allocation2] sm:$0x4] %vm279, %v4623
    %4628 = vst.msk [vmem:[#allocation2 + $0x8] sm:$0x4] %vm279, %v4624
    %4629 = vst.msk [vmem:[#allocation2 + $0x10] sm:$0x4] %vm279, %v4625
    %4630 = vst.msk [vmem:[#allocation2 + $0x18] sm:$0x4] %vm279, %v4626
    %v4635 = vrot.slane %v4623, 2
    %v4636 = vrot.slane %v4624, 1
    %v4637 = vsel %vm180, %v4636, %v4635
    %v4638 = vsel %vm183, %v4625, %v4637
    %v4639 = vrot.slane %v4626, 7
    %v4640 = vsel %vm186, %v4639, %v4638
    %v4641 = vsel %vm130, %v4640, 0
    %4643 = vmatpush.msra.mxu0 0.0
    %4644 = vmatpush.msra.mxu0 0.0
    %4645 = vmatpush.msra.mxu0 0.0
    %4646 = vmatpush.msra.mxu0 0.0
    %4647 = vmatpush.msra.mxu0 0.0
    %4648 = vmatpush.msra.mxu0 0.0
    %4649 = vmatpush.msra.mxu0 0.0
    %4650 = vmatpush.msra.mxu0 0.0
    %4651 = vmatpush.msra.mxu0 0.0
    %4652 = vmatpush.msra.mxu0 0.0
    %4653 = vmatpush.msra.mxu0 0.0
    %4654 = vmatpush.msra.mxu0 0.0
    %4655 = vmatpush.msra.mxu0 %v4473
    %4656 = vmatpush.msra.mxu0 %v4472
    %4657 = vmatpush.msra.mxu0 %v4471
    %4658 = vmatpush.msra.mxu0 %v4470
    %4659 = vmatmul.f32.gmra.mxu0 %v4641
    %v4660 = vpop.f32.mrf.mxu0
    %v4661 = vadd.f32 0.0, %v4660
    %4662 = vdwg.mxu0
    %v4664 = vrot.slane %v4661, 5
    %v4665 = vrot.slane %v4661, 6
    %v4666 = vrot.slane %v4661, 7
    %v4671 = vadd.f32 %v4458, %v4664
    %v4672 = vadd.f32 %v4461, %v4665
    %v4673 = vadd.f32 %v4464, %v4666
    %v4674 = vadd.f32 %v4467, %v4661
    %v4675 = vtanh.pop %v4671
    %v4676 = vtanh.pop %v4672
    %v4677 = vtanh.pop %v4673
    %v4678 = vtanh.pop %v4674
    %4679 = vst.msk [vmem:[#allocation2] sm:$0x8] %vm332, %v4675
    %4680 = vst.msk [vmem:[#allocation2 + $0x8] sm:$0x8] %vm332, %v4676
    %4681 = vst.msk [vmem:[#allocation2 + $0x10] sm:$0x8] %vm332, %v4677
    %4682 = vst.msk [vmem:[#allocation2 + $0x18] sm:$0x8] %vm332, %v4678
    %v4687 = vrot.slane %v4675, 3
    %v4688 = vrot.slane %v4676, 2
    %v4689 = vsel %vm180, %v4688, %v4687
    %v4690 = vrot.slane %v4677, 1
    %v4691 = vsel %vm183, %v4690, %v4689
    %v4692 = vsel %vm186, %v4678, %v4691
    %v4693 = vsel %vm130, %v4692, 0
    %4695 = vmatpush.msra.mxu0 0.0
    %4696 = vmatpush.msra.mxu0 0.0
    %4697 = vmatpush.msra.mxu0 0.0
    %4698 = vmatpush.msra.mxu0 0.0
    %4699 = vmatpush.msra.mxu0 0.0
    %4700 = vmatpush.msra.mxu0 0.0
    %4701 = vmatpush.msra.mxu0 0.0
    %4702 = vmatpush.msra.mxu0 0.0
    %4703 = vmatpush.msra.mxu0 0.0
    %4704 = vmatpush.msra.mxu0 0.0
    %4705 = vmatpush.msra.mxu0 0.0
    %4706 = vmatpush.msra.mxu0 0.0
    %4707 = vmatpush.msra.mxu0 %v4473
    %4708 = vmatpush.msra.mxu0 %v4472
    %4709 = vmatpush.msra.mxu0 %v4471
    %4710 = vmatpush.msra.mxu0 %v4470
    %4711 = vmatmul.f32.gmra.mxu0 %v4693
    %v4712 = vpop.f32.mrf.mxu0
    %v4713 = vadd.f32 0.0, %v4712
    %4714 = vdwg.mxu0
    %v4716 = vrot.slane %v4713, 4
    %v4717 = vrot.slane %v4713, 5
    %v4718 = vrot.slane %v4713, 6
    %v4719 = vrot.slane %v4713, 7
    %v4724 = vadd.f32 %v4458, %v4716
    %v4725 = vadd.f32 %v4461, %v4717
    %v4726 = vadd.f32 %v4464, %v4718
    %v4727 = vadd.f32 %v4467, %v4719
    %v4728 = vtanh.pop %v4724
    %v4729 = vtanh.pop %v4725
    %v4730 = vtanh.pop %v4726
    %v4731 = vtanh.pop %v4727
    %4732 = vst.msk [vmem:[#allocation2] sm:$0x10] %vm386, %v4728
    %4733 = vst.msk [vmem:[#allocation2 + $0x8] sm:$0x10] %vm386, %v4729
    %4734 = vst.msk [vmem:[#allocation2 + $0x10] sm:$0x10] %vm386, %v4730
    %4735 = vst.msk [vmem:[#allocation2 + $0x18] sm:$0x10] %vm386, %v4731
    %v4740 = vrot.slane %v4728, 4
    %v4741 = vrot.slane %v4729, 3
    %v4742 = vsel %vm180, %v4741, %v4740
    %v4743 = vrot.slane %v4730, 2
    %v4744 = vsel %vm183, %v4743, %v4742
    %v4745 = vrot.slane %v4731, 1
    %v4746 = vsel %vm186, %v4745, %v4744
    %v4747 = vsel %vm130, %v4746, 0
    %4749 = vmatpush.msra.mxu0 0.0
    %4750 = vmatpush.msra.mxu0 0.0
    %4751 = vmatpush.msra.mxu0 0.0
    %4752 = vmatpush.msra.mxu0 0.0
    %4753 = vmatpush.msra.mxu0 0.0
    %4754 = vmatpush.msra.mxu0 0.0
    %4755 = vmatpush.msra.mxu0 0.0
    %4756 = vmatpush.msra.mxu0 0.0
    %4757 = vmatpush.msra.mxu0 0.0
    %4758 = vmatpush.msra.mxu0 0.0
    %4759 = vmatpush.msra.mxu0 0.0
    %4760 = vmatpush.msra.mxu0 0.0
    %4761 = vmatpush.msra.mxu0 %v4473
    %4762 = vmatpush.msra.mxu0 %v4472
    %4763 = vmatpush.msra.mxu0 %v4471
    %4764 = vmatpush.msra.mxu0 %v4470
    %4765 = vmatmul.f32.gmra.mxu0 %v4747
    %v4766 = vpop.f32.mrf.mxu0
    %v4767 = vadd.f32 0.0, %v4766
    %4768 = vdwg.mxu0
    %v4770 = vrot.slane %v4767, 3
    %v4771 = vrot.slane %v4767, 4
    %v4772 = vrot.slane %v4767, 5
    %v4773 = vrot.slane %v4767, 6
    %v4778 = vadd.f32 %v4458, %v4770
    %v4779 = vadd.f32 %v4461, %v4771
    %v4780 = vadd.f32 %v4464, %v4772
    %v4781 = vadd.f32 %v4467, %v4773
    %v4782 = vtanh.pop %v4778
    %v4783 = vtanh.pop %v4779
    %v4784 = vtanh.pop %v4780
    %v4785 = vtanh.pop %v4781
    %4786 = vst.msk [vmem:[#allocation2] sm:$0x20] %vm441, %v4782
    %4787 = vst.msk [vmem:[#allocation2 + $0x8] sm:$0x20] %vm441, %v4783
    %4788 = vst.msk [vmem:[#allocation2 + $0x10] sm:$0x20] %vm441, %v4784
    %4789 = vst.msk [vmem:[#allocation2 + $0x18] sm:$0x20] %vm441, %v4785
    %v4794 = vrot.slane %v4782, 5
    %v4795 = vrot.slane %v4783, 4
    %v4796 = vsel %vm180, %v4795, %v4794
    %v4797 = vrot.slane %v4784, 3
    %v4798 = vsel %vm183, %v4797, %v4796
    %v4799 = vrot.slane %v4785, 2
    %v4800 = vsel %vm186, %v4799, %v4798
    %v4801 = vsel %vm130, %v4800, 0
    %4803 = vmatpush.msra.mxu0 0.0
    %4804 = vmatpush.msra.mxu0 0.0
    %4805 = vmatpush.msra.mxu0 0.0
    %4806 = vmatpush.msra.mxu0 0.0
    %4807 = vmatpush.msra.mxu0 0.0
    %4808 = vmatpush.msra.mxu0 0.0
    %4809 = vmatpush.msra.mxu0 0.0
    %4810 = vmatpush.msra.mxu0 0.0
    %4811 = vmatpush.msra.mxu0 0.0
    %4812 = vmatpush.msra.mxu0 0.0
    %4813 = vmatpush.msra.mxu0 0.0
    %4814 = vmatpush.msra.mxu0 0.0
    %4815 = vmatpush.msra.mxu0 %v4473
    %4816 = vmatpush.msra.mxu0 %v4472
    %4817 = vmatpush.msra.mxu0 %v4471
    %4818 = vmatpush.msra.mxu0 %v4470
    %4819 = vmatmul.f32.gmra.mxu0 %v4801
    %v4820 = vpop.f32.mrf.mxu0
    %v4821 = vadd.f32 0.0, %v4820
    %4822 = vdwg.mxu0
    %v4824 = vrot.slane %v4821, 2
    %v4825 = vrot.slane %v4821, 3
    %v4826 = vrot.slane %v4821, 4
    %v4827 = vrot.slane %v4821, 5
    %v4832 = vadd.f32 %v4458, %v4824
    %v4833 = vadd.f32 %v4461, %v4825
    %v4834 = vadd.f32 %v4464, %v4826
    %v4835 = vadd.f32 %v4467, %v4827
    %v4836 = vtanh.pop %v4832
    %v4837 = vtanh.pop %v4833
    %v4838 = vtanh.pop %v4834
    %v4839 = vtanh.pop %v4835
    %4840 = vst.msk [vmem:[#allocation2] sm:$0x40] %vm496, %v4836
    %4841 = vst.msk [vmem:[#allocation2 + $0x8] sm:$0x40] %vm496, %v4837
    %4842 = vst.msk [vmem:[#allocation2 + $0x10] sm:$0x40] %vm496, %v4838
    %4843 = vst.msk [vmem:[#allocation2 + $0x18] sm:$0x40] %vm496, %v4839
    %v4848 = vrot.slane %v4836, 6
    %v4849 = vrot.slane %v4837, 5
    %v4850 = vsel %vm180, %v4849, %v4848
    %v4851 = vrot.slane %v4838, 4
    %v4852 = vsel %vm183, %v4851, %v4850
    %v4853 = vrot.slane %v4839, 3
    %v4854 = vsel %vm186, %v4853, %v4852
    %v4855 = vsel %vm130, %v4854, 0
    %4857 = vmatpush.msra.mxu0 0.0
    %4858 = vmatpush.msra.mxu0 0.0
    %4859 = vmatpush.msra.mxu0 0.0
    %4860 = vmatpush.msra.mxu0 0.0
    %4861 = vmatpush.msra.mxu0 0.0
    %4862 = vmatpush.msra.mxu0 0.0
    %4863 = vmatpush.msra.mxu0 0.0
    %4864 = vmatpush.msra.mxu0 0.0
    %4865 = vmatpush.msra.mxu0 0.0
    %4866 = vmatpush.msra.mxu0 0.0
    %4867 = vmatpush.msra.mxu0 0.0
    %4868 = vmatpush.msra.mxu0 0.0
    %4869 = vmatpush.msra.mxu0 %v4473
    %4870 = vmatpush.msra.mxu0 %v4472
    %4871 = vmatpush.msra.mxu0 %v4471
    %4872 = vmatpush.msra.mxu0 %v4470
    %4873 = vmatmul.f32.gmra.mxu0 %v4855
    %v4874 = vpop.f32.mrf.mxu0
    %v4875 = vadd.f32 0.0, %v4874
    %4876 = vdwg.mxu0
    %v4878 = vrot.slane %v4875, 1
    %v4879 = vrot.slane %v4875, 2
    %v4880 = vrot.slane %v4875, 3
    %v4881 = vrot.slane %v4875, 4
    %v4886 = vadd.f32 %v4458, %v4878
    %v4887 = vadd.f32 %v4461, %v4879
    %v4888 = vadd.f32 %v4464, %v4880
    %v4889 = vadd.f32 %v4467, %v4881
    %v4890 = vtanh.pop %v4886
    %v4891 = vtanh.pop %v4887
    %v4892 = vtanh.pop %v4888
    %v4893 = vtanh.pop %v4889
    %4894 = vst.msk [vmem:[#allocation2] sm:$0x80] %vm551, %v4890
    %4895 = vst.msk [vmem:[#allocation2 + $0x8] sm:$0x80] %vm551, %v4891
    %4896 = vst.msk [vmem:[#allocation2 + $0x10] sm:$0x80] %vm551, %v4892
    %4897 = vst.msk [vmem:[#allocation2 + $0x18] sm:$0x80] %vm551, %v4893
    %v4898 = vld [vmem:[#allocation2] sm:$0xff]
    %v4899 = vld [vmem:[#allocation2 + $0x8] sm:$0xff]
    %v4900 = vld [vmem:[#allocation2 + $0x10] sm:$0xff]
    %v4901 = vld [vmem:[#allocation2 + $0x18] sm:$0xff]
    %v4902 = vld [vmem:[%s5] sm:$0xff]
    %v4903 = vld [vmem:[%s5 + $0x8] sm:$0xff]
    %v4904 = vld [vmem:[%s5 + $0x10] sm:$0xff]
    %v4905 = vld [vmem:[%s5 + $0x18] sm:$0xff]
    %v4906 = vld [vmem:[%s6] sm:$0x1]
    %v4908 = vperm.slane %v4906, 0
    %v4911 = vsel %vm130, %v4898, 0
    %v4914 = vsel %vm130, %v4899, 0
    %v4917 = vsel %vm130, %v4900, 0
    %v4920 = vsel %vm130, %v4901, 0
    %4922 = vmatpush.msra.mxu0 0.0
    %4923 = vmatpush.msra.mxu0 0.0
    %4924 = vmatpush.msra.mxu0 0.0
    %4925 = vmatpush.msra.mxu0 0.0
    %4926 = vmatpush.msra.mxu0 0.0
    %4927 = vmatpush.msra.mxu0 0.0
    %4928 = vmatpush.msra.mxu0 0.0
    %4929 = vmatpush.msra.mxu0 0.0
    %4930 = vmatpush.msra.mxu0 0.0
    %4931 = vmatpush.msra.mxu0 0.0
    %4932 = vmatpush.msra.mxu0 0.0
    %4933 = vmatpush.msra.mxu0 0.0
    %4934 = vmatpush.msra.mxu0 %v4905
    %4935 = vmatpush.msra.mxu0 %v4904
    %4936 = vmatpush.msra.mxu0 %v4903
    %4937 = vmatpush.msra.mxu0 %v4902
    %4938 = vmatmul.f32.gmra.mxu0 %v4911
    %v4939 = vpop.f32.mrf.mxu0
    %v4940 = vadd.f32 %v4908, %v4939
    %4941 = vmatmul.f32.gmra.mxu0 %v4914
    %v4942 = vpop.f32.mrf.mxu0
    %v4943 = vadd.f32 %v4908, %v4942
    %4944 = vmatmul.f32.gmra.mxu0 %v4917
    %v4945 = vpop.f32.mrf.mxu0
    %v4946 = vadd.f32 %v4908, %v4945
    %4947 = vmatmul.f32.gmra.mxu0 %v4920
    %v4948 = vpop.f32.mrf.mxu0
    %v4949 = vadd.f32 %v4908, %v4948
    %4950 = vdwg.mxu0
    %vm4951 = vcmask 64512
    %4952 = vst.msk [vmem:[#allocation9] sm:$0xff] %vm4951, %v4940
    %4953 = vst.msk [vmem:[#allocation9 + $0x8] sm:$0xff] %vm4951, %v4943
    %4954 = vst.msk [vmem:[#allocation9 + $0x10] sm:$0xff] %vm4951, %v4946
    %4955 = vst.msk [vmem:[#allocation9 + $0x18] sm:$0xff] %vm4951, %v4949
    // Predicated region
    $region42: #{model_forward.1} parent=1 // pred_check
      _
    $region43: #{model_forward.1} parent=1 // pred_check_branch
      %4957 = sbr.rel (0) target = $region45
    $region44: #{model_forward.1} parent=1 // pred_region
      %4959 = vsyncadd [#allocation5], 0
      %s4960 = sshll.u32 [#allocation9], 4
      %s4961 = int_to_ptr.vmem [resolvable:$true] %s4960
      %s4962 = sshll.u32 %s7, 4
      %s4963 = int_to_ptr.hbm [resolvable:$true] %s4962
      %4968 = dma.vmem_to_hbm [thread:$0]  %s4961, 512, %s4963, [#allocation5], 128, 128, 8
    $region45: #{model_forward.1} parent=1 // pred_fallthru
      _
    // Predicated region
    $region46: #{model_forward.1} parent=1 // pred_check
      _
    $region47: #{model_forward.1} parent=1 // pred_check_branch
      %4970 = sbr.rel (0) target = $region49
    $region48: #{model_forward.1} parent=1 // pred_region
      %4972 = dma.done [#allocation5], 512
    $region49: #{model_forward.1} parent=1 // pred_fallthru
      _
    %4973 = vsyncpa [#allocation4], 1
    %4974 = vsyncpa [#allocation7], 1
    %4975 = vsyncpa [#allocation5], 1

</llo_original>
